<compile_context>
chip_gen: v5e
topology: v5e:2x2
jax: 0.10.0
libtpu: 0.0.40
codegen_flags: <defaults>
</compile_context>

<pallas_src>
import numpy as np
import jax
import jax.numpy as jnp
from jax import lax
from jax.experimental import pallas as pl
from jax.experimental.pallas import tpu as pltpu

NEG_SLOPE = 0.01     # nn.LeakyReLU() default
BN_EPS = 1e-5


# ---------------------------------------------------------------------------
# Static geometry / constant gather matrices (built with numpy at trace time)
# ---------------------------------------------------------------------------
def layer_dims(input_channels, channels, H, W):
    dims = []
    cin, h, w = input_channels, H, W
    for cout in (channels, 2 * channels, 4 * channels, 8 * channels, 8 * channels):
        dims.append(dict(cin=cin, cout=cout, hp=h + 2, wp=w + 2, ho=h // 2, wo=w // 2))
        cin, h, w = cout, h // 2, w // 2
    return dims


def make_gh(B, Hp, Ho, last_layer):
    """0/1 row gather: (GH @ X)[row(di,b,ho), :] = X[b*Hp + 2*ho + di, :]."""
    gh = np.zeros((4 * B * Ho, B * Hp), np.float32)
    for di in range(4):
        for b in range(B):
            for ho in range(Ho):
                # last layer orders rows (di, ho, b) so the FC can slice per-ho
                row = ((di * Ho + ho) * B + b) if last_layer else ((di * B + b) * Ho + ho)
                gh[row, b * Hp + 2 * ho + di] = 1.0
    return gh


def make_selw(Wp, Wo, dj):
    """0/1 column selector: SelW[2*wo + dj, wo] = 1 (padded coordinates)."""
    s = np.zeros((Wp, Wo), np.float32)
    for wo in range(Wo):
        s[2 * wo + dj, wo] = 1.0
    return s


# ---------------------------------------------------------------------------
# Parameter folding (tiny one-time work on the params, in the wrapper)
# ---------------------------------------------------------------------------
def fold_conv_layer(p, d):
    """Fold BN scale + the 4x4 taps + the stride-2 column gather into M_di."""
    scale = p["gamma"] / jnp.sqrt(p["rvar"] + BN_EPS)                  # (Cout,)
    bias_eff = (p["b"] - p["rmean"]) * scale + p["beta"]               # (Cout,)
    m_stack = []
    for di in range(4):
        m = jnp.zeros((d["wp"] * d["cin"], d["wo"] * d["cout"]), jnp.float32)
        for dj in range(4):
            wmat = (p["w"][:, :, di, dj] * scale[:, None]).T           # (Cin, Cout)
            m = m + jnp.kron(jnp.asarray(make_selw(d["wp"], d["wo"], dj)), wmat)
        m_stack.append(m)
    m_stack = jnp.stack(m_stack).astype(jnp.bfloat16)                  # (4, Wp*Cin, Wo*Cout)
    bias_tile = jnp.tile(bias_eff, d["wo"]).reshape(1, -1).astype(jnp.float32)
    return m_stack, bias_tile


def fold_fc(fc1_w, fc1_b, fc2_w, fc2_b, C5, H5, W5):
    """Permute the concatenated FC weight to the kernel's (h, w, c) activation order."""
    wcat = jnp.concatenate([fc1_w, fc2_w], axis=1)                     # (F, 2L)
    bcat = jnp.concatenate([fc1_b, fc2_b]).reshape(1, -1).astype(jnp.float32)
    L2 = wcat.shape[1]
    v = wcat.reshape(C5, H5, W5, L2).transpose(1, 2, 0, 3).reshape(H5, W5 * C5, L2)
    return v.astype(jnp.bfloat16), bcat


# ---------------------------------------------------------------------------
# The fused Pallas kernel
# ---------------------------------------------------------------------------
def build_kernel(B, dims, H5, latent2):
    def kernel(x_ref,
               gh1, m1, b1, gh2, m2, b2, gh3, m3, b3, gh4, m4, b4, gh5, m5, b5,
               fcv_ref, fcb_ref,
               out_ref,
               pad2, pad3, pad4, pad5):
        ghs = (gh1, gh2, gh3, gh4, gh5)
        ms = (m1, m2, m3, m4, m5)
        bs = (b1, b2, b3, b4, b5)
        pads = (pad2, pad3, pad4, pad5)

        x = x_ref[...]                                   # (B*Hp1, Wp1*Cin1) bf16
        y5 = None
        for li, d in enumerate(dims):
            gh = ghs[li][...]
            # stride-2 row gather as a matmul (exact: 0/1 matrix)
            u = jnp.dot(gh, x, preferred_element_type=jnp.float32).astype(jnp.bfloat16)
            R = gh.shape[0] // 4                         # rows per di block
            N = d["wo"] * d["cout"]
            acc = jnp.zeros((R, N), jnp.float32)
            for di in range(4):
                acc = acc + jnp.dot(u[di * R:(di + 1) * R, :], ms[li][di],
                                    preferred_element_type=jnp.float32)
            y = acc + bs[li][...]                        # + folded BN bias, per (wo, cout)
            y = jnp.where(y >= 0.0, y, NEG_SLOPE * y).astype(jnp.bfloat16)

            if li < 4:
                nd = dims[li + 1]
                pref = pads[li]
                pref[...] = jnp.zeros(pref.shape, pref.dtype)   # zero border
                for b in range(B):
                    pref[b * nd["hp"] + 1: b * nd["hp"] + 1 + d["ho"],
                         nd["cin"]: nd["cin"] + d["wo"] * d["cout"]] = \
                        y[b * d["ho"]:(b + 1) * d["ho"], :]
                x = pref[...]                            # next layer's padded slab
            else:
                y5 = y                                   # rows (ho, b), cols (wo, c)

        # Fused FC heads: mu|logvar = sum_h y5[h-block] @ V_h  + bias
        acc = jnp.zeros((B, latent2), jnp.float32)
        for h in range(H5):
            acc = acc + jnp.dot(y5[h * B:(h + 1) * B, :], fcv_ref[h],
                                preferred_element_type=jnp.float32)
        out_ref[...] = acc + fcb_ref[...]
    return kernel


# ---------------------------------------------------------------------------
# Forward pass wrapper
# ---------------------------------------------------------------------------
def encoder_x_forward(x_nchw, params):
    B, Cin, H, W = x_nchw.shape
    assert H % 32 == 0 and W % 32 == 0, "five stride-2 convs need H, W % 32 == 0"
    channels = params["l1"]["w"].shape[0]
    latent = params["fc1_w"].shape[1]
    dims = layer_dims(Cin, channels, H, W)
    d5 = dims[-1]
    H5, W5, C5 = d5["ho"], d5["wo"], d5["cout"]

    # --- fold parameters into matmul-ready form (tiny, one-time) ---
    inputs = []
    for li, d in enumerate(dims):
        gh = jnp.asarray(make_gh(B, d["hp"], d["ho"], last_layer=(li == 4)),
                         dtype=jnp.bfloat16)
        m, bt = fold_conv_layer(params[f"l{li + 1}"], d)
        inputs += [gh, m, bt]
    fcv, fcb = fold_fc(params["fc1_w"], params["fc1_b"],
                       params["fc2_w"], params["fc2_b"], C5, H5, W5)
    inputs += [fcv, fcb]

    # --- input: NCHW -> zero-padded slab (B*Hp, Wp*Cin), bf16 ---
    xp = jnp.pad(jnp.transpose(x_nchw, (0, 2, 3, 1)),
                 ((0, 0), (1, 1), (1, 1), (0, 0)))
    x_slab = xp.reshape(B * dims[0]["hp"], dims[0]["wp"] * Cin).astype(jnp.bfloat16)
    inputs = [x_slab] + inputs

    def fspec(a):
        nd = a.ndim
        return pl.BlockSpec(a.shape, lambda i, nd=nd: (0,) * nd)

    scratch = [pltpu.VMEM((B * dims[li]["hp"], dims[li]["wp"] * dims[li]["cin"]),
                          jnp.bfloat16) for li in range(1, 5)]

    out = pl.pallas_call(
        build_kernel(B, dims, H5, 2 * latent),
        out_shape=jax.ShapeDtypeStruct((B, 2 * latent), jnp.float32),
        grid_spec=pltpu.PrefetchScalarGridSpec(
            num_scalar_prefetch=0,
            grid=(1,),
            in_specs=[fspec(a) for a in inputs],
            out_specs=pl.BlockSpec((B, 2 * latent), lambda i: (0, 0)),
            scratch_shapes=scratch,
        ),
        compiler_params=pltpu.CompilerParams(
            dimension_semantics=("arbitrary",)),
    )(*inputs)

    mu = out[:, :latent]
    logvar = out[:, latent:]
    scale = jnp.exp(logvar)          # Normal(mu, exp(logvar)) — matches torch source
    # TODO(synk): torch Independent(Normal(...)) has no Pallas equivalent; "dist"
    # is represented by the (mu, scale) pair.
    dist = (mu, scale)
    return dist, mu, logvar


# ---------------------------------------------------------------------------
# Deterministic synthetic parameters
# ---------------------------------------------------------------------------
def make_params(key, input_channels, channels, latent_size, fc_in):
    def nxt():
        nonlocal key
        key, sub = jax.random.split(key)
        return sub

    def conv_block(cin, cout):
        return dict(
            w=jax.random.normal(nxt(), (cout, cin, 4, 4), jnp.float32) * 0.05,
            b=jax.random.normal(nxt(), (cout,), jnp.float32) * 0.05,
            gamma=1.0 + 0.1 * jax.random.normal(nxt(), (cout,), jnp.float32),
            beta=0.1 * jax.random.normal(nxt(), (cout,), jnp.float32),
            rmean=0.1 * jax.random.normal(nxt(), (cout,), jnp.float32),
            rvar=1.0 + 0.1 * jnp.abs(jax.random.normal(nxt(), (cout,), jnp.float32)),
        )

    return dict(
        l1=conv_block(input_channels, channels),
        l2=conv_block(channels, 2 * channels),
        l3=conv_block(2 * channels, 4 * channels),
        l4=conv_block(4 * channels, 8 * channels),
        l5=conv_block(8 * channels, 8 * channels),
        fc1_w=jax.random.normal(nxt(), (fc_in, latent_size), jnp.float32) * 0.02,
        fc1_b=jax.random.normal(nxt(), (latent_size,), jnp.float32) * 0.02,
        fc2_w=jax.random.normal(nxt(), (fc_in, latent_size), jnp.float32) * 0.02,
        fc2_b=jax.random.normal(nxt(), (latent_size,), jnp.float32) * 0.02,
    )


# ---------------------------------------------------------------------------
# Pure-JAX (XLA) reference, only used to validate the kernel numerically
# ---------------------------------------------------------------------------
def encoder_x_reference(x, params):
    def block(h, p):
        y = lax.conv_general_dilated(
            h, p["w"], window_strides=(2, 2), padding=((1, 1), (1, 1)),
            dimension_numbers=("NCHW", "OIHW", "NCHW"))
        y = y + p["b"].reshape(1, -1, 1, 1)
        scale = (p["gamma"] / jnp.sqrt(p["rvar"] + BN_EPS)).reshape(1, -1, 1, 1)
        y = (y - p["rmean"].reshape(1, -1, 1, 1)) * scale + p["beta"].reshape(1, -1, 1, 1)
        return jnp.where(y >= 0.0, y, NEG_SLOPE * y)

    h = x
    for name in ("l1", "l2", "l3", "l4", "l5"):
        h = block(h, params[name])
    flat = h.reshape(x.shape[0], -1)                 # NCHW flatten, as in .view(-1, F)
    mu = flat @ params["fc1_w"] + params["fc1_b"]
    logvar = flat @ params["fc2_w"] + params["fc2_b"]
    return mu, logvar


# ---------------------------------------------------------------------------
# Main
# ---------------------------------------------------------------------------
if __name__ == "__main__":
    key = jax.random.PRNGKey(0)

    # Small shapes consistent with the module: 5 stride-2 convs need H,W % 32 == 0.
    # Original fc assumed an 11x38 final spatial; here a 64x64 input -> 2x2 final
    # spatial, and the fc is sized accordingly.
    B, input_channels, H, W = 2, 3, 64, 64
    channels, latent_size = 4, 8
    Hf, Wf = H // 32, W // 32
    fc_in = channels * 8 * Hf * Wf

    k_x, k_p = jax.random.split(key)
    x = jax.random.normal(k_x, (B, input_channels, H, W), jnp.float32)
    params = make_params(k_p, input_channels, channels, latent_size, fc_in)

    fwd = jax.jit(encoder_x_forward)
    dist, mu, logvar = fwd(x, params)
    jax.block_until_ready((mu, logvar, dist[1]))

    assert mu.shape == (B, latent_size)
    assert logvar.shape == (B, latent_size)
    assert dist[1].shape == (B, latent_size)

    # Numerical check against the pure-JAX reference (bf16 kernel vs f32 ref).
    mu_ref, logvar_ref = jax.jit(encoder_x_reference)(x, params)
    np.testing.assert_allclose(np.asarray(mu), np.asarray(mu_ref), rtol=0.1, atol=0.05)
    np.testing.assert_allclose(np.asarray(logvar), np.asarray(logvar_ref), rtol=0.1, atol=0.05)
    np.testing.assert_allclose(np.asarray(dist[1]), np.exp(np.asarray(logvar)),
                               rtol=1e-5, atol=1e-5)

    print("KERNEL_OK")
</pallas_src>

<mosaic_0001>
module attributes {stable_mosaic.version = 11 : i64} {
  func.func @kernel(%arg0: i32, %arg1: memref<132x198xbf16, #tpu.memory_space<vmem>>, %arg2: memref<256x132xbf16, #tpu.memory_space<vmem>>, %arg3: memref<4x198x128xbf16, #tpu.memory_space<vmem>>, %arg4: memref<1x128xf32, #tpu.memory_space<vmem>>, %arg5: memref<128x68xbf16, #tpu.memory_space<vmem>>, %arg6: memref<4x136x128xbf16, #tpu.memory_space<vmem>>, %arg7: memref<1x128xf32, #tpu.memory_space<vmem>>, %arg8: memref<64x36xbf16, #tpu.memory_space<vmem>>, %arg9: memref<4x144x128xbf16, #tpu.memory_space<vmem>>, %arg10: memref<1x128xf32, #tpu.memory_space<vmem>>, %arg11: memref<32x20xbf16, #tpu.memory_space<vmem>>, %arg12: memref<4x160x128xbf16, #tpu.memory_space<vmem>>, %arg13: memref<1x128xf32, #tpu.memory_space<vmem>>, %arg14: memref<16x12xbf16, #tpu.memory_space<vmem>>, %arg15: memref<4x192x64xbf16, #tpu.memory_space<vmem>>, %arg16: memref<1x64xf32, #tpu.memory_space<vmem>>, %arg17: memref<2x64x16xbf16, #tpu.memory_space<vmem>>, %arg18: memref<1x16xf32, #tpu.memory_space<vmem>>, %arg19: memref<2x16xf32, #tpu.memory_space<vmem>>, %arg20: memref<68x136xbf16, #tpu.memory_space<vmem>>, %arg21: memref<36x144xbf16, #tpu.memory_space<vmem>>, %arg22: memref<20x160xbf16, #tpu.memory_space<vmem>>, %arg23: memref<12x192xbf16, #tpu.memory_space<vmem>>) attributes {dimension_semantics = [#tpu.dimension_semantics<arbitrary>], iteration_bounds = array<i64: 1>, scalar_prefetch = 0 : i64, scratch_operands = 4 : i64, tpu.core_type = #tpu.core_type<tc>, window_params = [{pipeline_mode = #tpu.pipeline_mode<synchronous>, transform_indices = @transform_0, window_bounds = array<i64: 132, 198>}, {pipeline_mode = #tpu.pipeline_mode<synchronous>, transform_indices = @transform_1, window_bounds = array<i64: 256, 132>}, {pipeline_mode = #tpu.pipeline_mode<synchronous>, transform_indices = @transform_2, window_bounds = array<i64: 4, 198, 128>}, {pipeline_mode = #tpu.pipeline_mode<synchronous>, transform_indices = @transform_3, window_bounds = array<i64: 1, 128>}, {pipeline_mode = #tpu.pipeline_mode<synchronous>, transform_indices = @transform_4, window_bounds = array<i64: 128, 68>}, {pipeline_mode = #tpu.pipeline_mode<synchronous>, transform_indices = @transform_5, window_bounds = array<i64: 4, 136, 128>}, {pipeline_mode = #tpu.pipeline_mode<synchronous>, transform_indices = @transform_6, window_bounds = array<i64: 1, 128>}, {pipeline_mode = #tpu.pipeline_mode<synchronous>, transform_indices = @transform_7, window_bounds = array<i64: 64, 36>}, {pipeline_mode = #tpu.pipeline_mode<synchronous>, transform_indices = @transform_8, window_bounds = array<i64: 4, 144, 128>}, {pipeline_mode = #tpu.pipeline_mode<synchronous>, transform_indices = @transform_9, window_bounds = array<i64: 1, 128>}, {pipeline_mode = #tpu.pipeline_mode<synchronous>, transform_indices = @transform_10, window_bounds = array<i64: 32, 20>}, {pipeline_mode = #tpu.pipeline_mode<synchronous>, transform_indices = @transform_11, window_bounds = array<i64: 4, 160, 128>}, {pipeline_mode = #tpu.pipeline_mode<synchronous>, transform_indices = @transform_12, window_bounds = array<i64: 1, 128>}, {pipeline_mode = #tpu.pipeline_mode<synchronous>, transform_indices = @transform_13, window_bounds = array<i64: 16, 12>}, {pipeline_mode = #tpu.pipeline_mode<synchronous>, transform_indices = @transform_14, window_bounds = array<i64: 4, 192, 64>}, {pipeline_mode = #tpu.pipeline_mode<synchronous>, transform_indices = @transform_15, window_bounds = array<i64: 1, 64>}, {pipeline_mode = #tpu.pipeline_mode<synchronous>, transform_indices = @transform_16, window_bounds = array<i64: 2, 64, 16>}, {pipeline_mode = #tpu.pipeline_mode<synchronous>, transform_indices = @transform_17, window_bounds = array<i64: 1, 16>}, {pipeline_mode = #tpu.pipeline_mode<synchronous>, transform_indices = @transform_18, window_bounds = array<i64: 2, 16>}]} {
    %c0 = arith.constant 0 : index
    %c0_0 = arith.constant 0 : index
    %0 = vector.load %arg1[%c0, %c0_0] : memref<132x198xbf16, #tpu.memory_space<vmem>>, vector<132x198xbf16>
    %c0_1 = arith.constant 0 : index
    %c0_2 = arith.constant 0 : index
    %1 = vector.load %arg2[%c0_1, %c0_2] : memref<256x132xbf16, #tpu.memory_space<vmem>>, vector<256x132xbf16>
    %cst = arith.constant dense<0.000000e+00> : vector<256x198xf32>
    %2 = tpu.matmul %1, %0, %cst {dimension_numbers = #tpu.dot_dimension_numbers<[1], [0], [0], [1], [0, 0, 1, 1], [], []>} : vector<256x132xbf16>, vector<132x198xbf16>, vector<256x198xf32> -> vector<256x198xf32>
    %3 = arith.truncf %2 : vector<256x198xf32> to vector<256x198xbf16>
    %cst_3 = arith.constant 0.000000e+00 : f32
    %4 = vector.broadcast %cst_3 : f32 to vector<64x128xf32>
    %5 = vector.extract_strided_slice %3 {offsets = [0, 0], sizes = [64, 198], strides = [1, 1]} : vector<256x198xbf16> to vector<64x198xbf16>
    %c0_4 = arith.constant 0 : index
    %c0_5 = arith.constant 0 : index
    %c0_6 = arith.constant 0 : index
    %6 = vector.load %arg3[%c0_4, %c0_5, %c0_6] : memref<4x198x128xbf16, #tpu.memory_space<vmem>>, vector<1x198x128xbf16>
    %7 = vector.shape_cast %6 : vector<1x198x128xbf16> to vector<198x128xbf16>
    %cst_7 = arith.constant dense<0.000000e+00> : vector<64x128xf32>
    %8 = tpu.matmul %5, %7, %cst_7 {dimension_numbers = #tpu.dot_dimension_numbers<[1], [0], [0], [1], [0, 0, 1, 1], [], []>} : vector<64x198xbf16>, vector<198x128xbf16>, vector<64x128xf32> -> vector<64x128xf32>
    %9 = arith.addf %4, %8 : vector<64x128xf32>
    %10 = vector.extract_strided_slice %3 {offsets = [64, 0], sizes = [64, 198], strides = [1, 1]} : vector<256x198xbf16> to vector<64x198xbf16>
    %c1 = arith.constant 1 : index
    %c0_8 = arith.constant 0 : index
    %c0_9 = arith.constant 0 : index
    %11 = vector.load %arg3[%c1, %c0_8, %c0_9] : memref<4x198x128xbf16, #tpu.memory_space<vmem>>, vector<1x198x128xbf16>
    %12 = vector.shape_cast %11 : vector<1x198x128xbf16> to vector<198x128xbf16>
    %cst_10 = arith.constant dense<0.000000e+00> : vector<64x128xf32>
    %13 = tpu.matmul %10, %12, %cst_10 {dimension_numbers = #tpu.dot_dimension_numbers<[1], [0], [0], [1], [0, 0, 1, 1], [], []>} : vector<64x198xbf16>, vector<198x128xbf16>, vector<64x128xf32> -> vector<64x128xf32>
    %14 = arith.addf %9, %13 : vector<64x128xf32>
    %15 = vector.extract_strided_slice %3 {offsets = [128, 0], sizes = [64, 198], strides = [1, 1]} : vector<256x198xbf16> to vector<64x198xbf16>
    %c2 = arith.constant 2 : index
    %c0_11 = arith.constant 0 : index
    %c0_12 = arith.constant 0 : index
    %16 = vector.load %arg3[%c2, %c0_11, %c0_12] : memref<4x198x128xbf16, #tpu.memory_space<vmem>>, vector<1x198x128xbf16>
    %17 = vector.shape_cast %16 : vector<1x198x128xbf16> to vector<198x128xbf16>
    %cst_13 = arith.constant dense<0.000000e+00> : vector<64x128xf32>
    %18 = tpu.matmul %15, %17, %cst_13 {dimension_numbers = #tpu.dot_dimension_numbers<[1], [0], [0], [1], [0, 0, 1, 1], [], []>} : vector<64x198xbf16>, vector<198x128xbf16>, vector<64x128xf32> -> vector<64x128xf32>
    %19 = arith.addf %14, %18 : vector<64x128xf32>
    %20 = vector.extract_strided_slice %3 {offsets = [192, 0], sizes = [64, 198], strides = [1, 1]} : vector<256x198xbf16> to vector<64x198xbf16>
    %c3 = arith.constant 3 : index
    %c0_14 = arith.constant 0 : index
    %c0_15 = arith.constant 0 : index
    %21 = vector.load %arg3[%c3, %c0_14, %c0_15] : memref<4x198x128xbf16, #tpu.memory_space<vmem>>, vector<1x198x128xbf16>
    %22 = vector.shape_cast %21 : vector<1x198x128xbf16> to vector<198x128xbf16>
    %cst_16 = arith.constant dense<0.000000e+00> : vector<64x128xf32>
    %23 = tpu.matmul %20, %22, %cst_16 {dimension_numbers = #tpu.dot_dimension_numbers<[1], [0], [0], [1], [0, 0, 1, 1], [], []>} : vector<64x198xbf16>, vector<198x128xbf16>, vector<64x128xf32> -> vector<64x128xf32>
    %24 = arith.addf %19, %23 : vector<64x128xf32>
    %c0_17 = arith.constant 0 : index
    %c0_18 = arith.constant 0 : index
    %25 = vector.load %arg4[%c0_17, %c0_18] : memref<1x128xf32, #tpu.memory_space<vmem>>, vector<1x128xf32>
    %26 = vector.broadcast %25 : vector<1x128xf32> to vector<64x128xf32>
    %27 = arith.addf %24, %26 : vector<64x128xf32>
    %cst_19 = arith.constant 0.000000e+00 : f32
    %28 = vector.broadcast %cst_19 : f32 to vector<64x128xf32>
    %29 = arith.cmpf oge, %27, %28 : vector<64x128xf32>
    %cst_20 = arith.constant 0.00999999977 : f32
    %30 = vector.broadcast %cst_20 : f32 to vector<64x128xf32>
    %31 = arith.mulf %30, %27 : vector<64x128xf32>
    %32 = arith.select %29, %27, %31 : vector<64x128xi1>, vector<64x128xf32>
    %33 = arith.truncf %32 : vector<64x128xf32> to vector<64x128xbf16>
    %cst_21 = arith.constant 0.000000e+00 : bf16
    %34 = vector.broadcast %cst_21 : bf16 to vector<68x136xbf16>
    %c0_22 = arith.constant 0 : index
    %c0_23 = arith.constant 0 : index
    %35 = vector.load %arg20[%c0_22, %c0_23] : memref<68x136xbf16, #tpu.memory_space<vmem>>, vector<68x136xbf16>
    tpu.vector_store %arg20[%c0_22, %c0_23], %34 {strides = array<i32>} : memref<68x136xbf16, #tpu.memory_space<vmem>>, vector<68x136xbf16>,
    %36 = vector.extract_strided_slice %33 {offsets = [0, 0], sizes = [32, 128], strides = [1, 1]} : vector<64x128xbf16> to vector<32x128xbf16>
    %c1_24 = arith.constant 1 : index
    %c4 = arith.constant 4 : index
    %37 = vector.load %arg20[%c1_24, %c4] : memref<68x136xbf16, #tpu.memory_space<vmem>>, vector<32x128xbf16>
    tpu.vector_store %arg20[%c1_24, %c4], %36 {strides = array<i32>} : memref<68x136xbf16, #tpu.memory_space<vmem>>, vector<32x128xbf16>,
    %38 = vector.extract_strided_slice %33 {offsets = [32, 0], sizes = [32, 128], strides = [1, 1]} : vector<64x128xbf16> to vector<32x128xbf16>
    %c35 = arith.constant 35 : index
    %c4_25 = arith.constant 4 : index
    %39 = vector.load %arg20[%c35, %c4_25] : memref<68x136xbf16, #tpu.memory_space<vmem>>, vector<32x128xbf16>
    tpu.vector_store %arg20[%c35, %c4_25], %38 {strides = array<i32>} : memref<68x136xbf16, #tpu.memory_space<vmem>>, vector<32x128xbf16>,
    %c0_26 = arith.constant 0 : index
    %c0_27 = arith.constant 0 : index
    %40 = vector.load %arg20[%c0_26, %c0_27] : memref<68x136xbf16, #tpu.memory_space<vmem>>, vector<68x136xbf16>
    %c0_28 = arith.constant 0 : index
    %c0_29 = arith.constant 0 : index
    %41 = vector.load %arg5[%c0_28, %c0_29] : memref<128x68xbf16, #tpu.memory_space<vmem>>, vector<128x68xbf16>
    %cst_30 = arith.constant dense<0.000000e+00> : vector<128x136xf32>
    %42 = tpu.matmul %41, %40, %cst_30 {dimension_numbers = #tpu.dot_dimension_numbers<[1], [0], [0], [1], [0, 0, 1, 1], [], []>} : vector<128x68xbf16>, vector<68x136xbf16>, vector<128x136xf32> -> vector<128x136xf32>
    %43 = arith.truncf %42 : vector<128x136xf32> to vector<128x136xbf16>
    %cst_31 = arith.constant 0.000000e+00 : f32
    %44 = vector.broadcast %cst_31 : f32 to vector<32x128xf32>
    %45 = vector.extract_strided_slice %43 {offsets = [0, 0], sizes = [32, 136], strides = [1, 1]} : vector<128x136xbf16> to vector<32x136xbf16>
    %c0_32 = arith.constant 0 : index
    %c0_33 = arith.constant 0 : index
    %c0_34 = arith.constant 0 : index
    %46 = vector.load %arg6[%c0_32, %c0_33, %c0_34] : memref<4x136x128xbf16, #tpu.memory_space<vmem>>, vector<1x136x128xbf16>
    %47 = vector.shape_cast %46 : vector<1x136x128xbf16> to vector<136x128xbf16>
    %cst_35 = arith.constant dense<0.000000e+00> : vector<32x128xf32>
    %48 = tpu.matmul %45, %47, %cst_35 {dimension_numbers = #tpu.dot_dimension_numbers<[1], [0], [0], [1], [0, 0, 1, 1], [], []>} : vector<32x136xbf16>, vector<136x128xbf16>, vector<32x128xf32> -> vector<32x128xf32>
    %49 = arith.addf %44, %48 : vector<32x128xf32>
    %50 = vector.extract_strided_slice %43 {offsets = [32, 0], sizes = [32, 136], strides = [1, 1]} : vector<128x136xbf16> to vector<32x136xbf16>
    %c1_36 = arith.constant 1 : index
    %c0_37 = arith.constant 0 : index
    %c0_38 = arith.constant 0 : index
    %51 = vector.load %arg6[%c1_36, %c0_37, %c0_38] : memref<4x136x128xbf16, #tpu.memory_space<vmem>>, vector<1x136x128xbf16>
    %52 = vector.shape_cast %51 : vector<1x136x128xbf16> to vector<136x128xbf16>
    %cst_39 = arith.constant dense<0.000000e+00> : vector<32x128xf32>
    %53 = tpu.matmul %50, %52, %cst_39 {dimension_numbers = #tpu.dot_dimension_numbers<[1], [0], [0], [1], [0, 0, 1, 1], [], []>} : vector<32x136xbf16>, vector<136x128xbf16>, vector<32x128xf32> -> vector<32x128xf32>
    %54 = arith.addf %49, %53 : vector<32x128xf32>
    %55 = vector.extract_strided_slice %43 {offsets = [64, 0], sizes = [32, 136], strides = [1, 1]} : vector<128x136xbf16> to vector<32x136xbf16>
    %c2_40 = arith.constant 2 : index
    %c0_41 = arith.constant 0 : index
    %c0_42 = arith.constant 0 : index
    %56 = vector.load %arg6[%c2_40, %c0_41, %c0_42] : memref<4x136x128xbf16, #tpu.memory_space<vmem>>, vector<1x136x128xbf16>
    %57 = vector.shape_cast %56 : vector<1x136x128xbf16> to vector<136x128xbf16>
    %cst_43 = arith.constant dense<0.000000e+00> : vector<32x128xf32>
    %58 = tpu.matmul %55, %57, %cst_43 {dimension_numbers = #tpu.dot_dimension_numbers<[1], [0], [0], [1], [0, 0, 1, 1], [], []>} : vector<32x136xbf16>, vector<136x128xbf16>, vector<32x128xf32> -> vector<32x128xf32>
    %59 = arith.addf %54, %58 : vector<32x128xf32>
    %60 = vector.extract_strided_slice %43 {offsets = [96, 0], sizes = [32, 136], strides = [1, 1]} : vector<128x136xbf16> to vector<32x136xbf16>
    %c3_44 = arith.constant 3 : index
    %c0_45 = arith.constant 0 : index
    %c0_46 = arith.constant 0 : index
    %61 = vector.load %arg6[%c3_44, %c0_45, %c0_46] : memref<4x136x128xbf16, #tpu.memory_space<vmem>>, vector<1x136x128xbf16>
    %62 = vector.shape_cast %61 : vector<1x136x128xbf16> to vector<136x128xbf16>
    %cst_47 = arith.constant dense<0.000000e+00> : vector<32x128xf32>
    %63 = tpu.matmul %60, %62, %cst_47 {dimension_numbers = #tpu.dot_dimension_numbers<[1], [0], [0], [1], [0, 0, 1, 1], [], []>} : vector<32x136xbf16>, vector<136x128xbf16>, vector<32x128xf32> -> vector<32x128xf32>
    %64 = arith.addf %59, %63 : vector<32x128xf32>
    %c0_48 = arith.constant 0 : index
    %c0_49 = arith.constant 0 : index
    %65 = vector.load %arg7[%c0_48, %c0_49] : memref<1x128xf32, #tpu.memory_space<vmem>>, vector<1x128xf32>
    %66 = vector.broadcast %65 : vector<1x128xf32> to vector<32x128xf32>
    %67 = arith.addf %64, %66 : vector<32x128xf32>
    %cst_50 = arith.constant 0.000000e+00 : f32
    %68 = vector.broadcast %cst_50 : f32 to vector<32x128xf32>
    %69 = arith.cmpf oge, %67, %68 : vector<32x128xf32>
    %cst_51 = arith.constant 0.00999999977 : f32
    %70 = vector.broadcast %cst_51 : f32 to vector<32x128xf32>
    %71 = arith.mulf %70, %67 : vector<32x128xf32>
    %72 = arith.select %69, %67, %71 : vector<32x128xi1>, vector<32x128xf32>
    %73 = arith.truncf %72 : vector<32x128xf32> to vector<32x128xbf16>
    %cst_52 = arith.constant 0.000000e+00 : bf16
    %74 = vector.broadcast %cst_52 : bf16 to vector<36x144xbf16>
    %c0_53 = arith.constant 0 : index
    %c0_54 = arith.constant 0 : index
    %75 = vector.load %arg21[%c0_53, %c0_54] : memref<36x144xbf16, #tpu.memory_space<vmem>>, vector<36x144xbf16>
    tpu.vector_store %arg21[%c0_53, %c0_54], %74 {strides = array<i32>} : memref<36x144xbf16, #tpu.memory_space<vmem>>, vector<36x144xbf16>,
    %76 = vector.extract_strided_slice %73 {offsets = [0, 0], sizes = [16, 128], strides = [1, 1]} : vector<32x128xbf16> to vector<16x128xbf16>
    %c1_55 = arith.constant 1 : index
    %c8 = arith.constant 8 : index
    %77 = vector.load %arg21[%c1_55, %c8] : memref<36x144xbf16, #tpu.memory_space<vmem>>, vector<16x128xbf16>
    tpu.vector_store %arg21[%c1_55, %c8], %76 {strides = array<i32>} : memref<36x144xbf16, #tpu.memory_space<vmem>>, vector<16x128xbf16>,
    %78 = vector.extract_strided_slice %73 {offsets = [16, 0], sizes = [16, 128], strides = [1, 1]} : vector<32x128xbf16> to vector<16x128xbf16>
    %c19 = arith.constant 19 : index
    %c8_56 = arith.constant 8 : index
    %79 = vector.load %arg21[%c19, %c8_56] : memref<36x144xbf16, #tpu.memory_space<vmem>>, vector<16x128xbf16>
    tpu.vector_store %arg21[%c19, %c8_56], %78 {strides = array<i32>} : memref<36x144xbf16, #tpu.memory_space<vmem>>, vector<16x128xbf16>,
    %c0_57 = arith.constant 0 : index
    %c0_58 = arith.constant 0 : index
    %80 = vector.load %arg21[%c0_57, %c0_58] : memref<36x144xbf16, #tpu.memory_space<vmem>>, vector<36x144xbf16>
    %c0_59 = arith.constant 0 : index
    %c0_60 = arith.constant 0 : index
    %81 = vector.load %arg8[%c0_59, %c0_60] : memref<64x36xbf16, #tpu.memory_space<vmem>>, vector<64x36xbf16>
    %cst_61 = arith.constant dense<0.000000e+00> : vector<64x144xf32>
    %82 = tpu.matmul %81, %80, %cst_61 {dimension_numbers = #tpu.dot_dimension_numbers<[1], [0], [0], [1], [0, 0, 1, 1], [], []>} : vector<64x36xbf16>, vector<36x144xbf16>, vector<64x144xf32> -> vector<64x144xf32>
    %83 = arith.truncf %82 : vector<64x144xf32> to vector<64x144xbf16>
    %cst_62 = arith.constant 0.000000e+00 : f32
    %84 = vector.broadcast %cst_62 : f32 to vector<16x128xf32>
    %85 = vector.extract_strided_slice %83 {offsets = [0, 0], sizes = [16, 144], strides = [1, 1]} : vector<64x144xbf16> to vector<16x144xbf16>
    %c0_63 = arith.constant 0 : index
    %c0_64 = arith.constant 0 : index
    %c0_65 = arith.constant 0 : index
    %86 = vector.load %arg9[%c0_63, %c0_64, %c0_65] : memref<4x144x128xbf16, #tpu.memory_space<vmem>>, vector<1x144x128xbf16>
    %87 = vector.shape_cast %86 : vector<1x144x128xbf16> to vector<144x128xbf16>
    %cst_66 = arith.constant dense<0.000000e+00> : vector<16x128xf32>
    %88 = tpu.matmul %85, %87, %cst_66 {dimension_numbers = #tpu.dot_dimension_numbers<[1], [0], [0], [1], [0, 0, 1, 1], [], []>} : vector<16x144xbf16>, vector<144x128xbf16>, vector<16x128xf32> -> vector<16x128xf32>
    %89 = arith.addf %84, %88 : vector<16x128xf32>
    %90 = vector.extract_strided_slice %83 {offsets = [16, 0], sizes = [16, 144], strides = [1, 1]} : vector<64x144xbf16> to vector<16x144xbf16>
    %c1_67 = arith.constant 1 : index
    %c0_68 = arith.constant 0 : index
    %c0_69 = arith.constant 0 : index
    %91 = vector.load %arg9[%c1_67, %c0_68, %c0_69] : memref<4x144x128xbf16, #tpu.memory_space<vmem>>, vector<1x144x128xbf16>
    %92 = vector.shape_cast %91 : vector<1x144x128xbf16> to vector<144x128xbf16>
    %cst_70 = arith.constant dense<0.000000e+00> : vector<16x128xf32>
    %93 = tpu.matmul %90, %92, %cst_70 {dimension_numbers = #tpu.dot_dimension_numbers<[1], [0], [0], [1], [0, 0, 1, 1], [], []>} : vector<16x144xbf16>, vector<144x128xbf16>, vector<16x128xf32> -> vector<16x128xf32>
    %94 = arith.addf %89, %93 : vector<16x128xf32>
    %95 = vector.extract_strided_slice %83 {offsets = [32, 0], sizes = [16, 144], strides = [1, 1]} : vector<64x144xbf16> to vector<16x144xbf16>
    %c2_71 = arith.constant 2 : index
    %c0_72 = arith.constant 0 : index
    %c0_73 = arith.constant 0 : index
    %96 = vector.load %arg9[%c2_71, %c0_72, %c0_73] : memref<4x144x128xbf16, #tpu.memory_space<vmem>>, vector<1x144x128xbf16>
    %97 = vector.shape_cast %96 : vector<1x144x128xbf16> to vector<144x128xbf16>
    %cst_74 = arith.constant dense<0.000000e+00> : vector<16x128xf32>
    %98 = tpu.matmul %95, %97, %cst_74 {dimension_numbers = #tpu.dot_dimension_numbers<[1], [0], [0], [1], [0, 0, 1, 1], [], []>} : vector<16x144xbf16>, vector<144x128xbf16>, vector<16x128xf32> -> vector<16x128xf32>
    %99 = arith.addf %94, %98 : vector<16x128xf32>
    %100 = vector.extract_strided_slice %83 {offsets = [48, 0], sizes = [16, 144], strides = [1, 1]} : vector<64x144xbf16> to vector<16x144xbf16>
    %c3_75 = arith.constant 3 : index
    %c0_76 = arith.constant 0 : index
    %c0_77 = arith.constant 0 : index
    %101 = vector.load %arg9[%c3_75, %c0_76, %c0_77] : memref<4x144x128xbf16, #tpu.memory_space<vmem>>, vector<1x144x128xbf16>
    %102 = vector.shape_cast %101 : vector<1x144x128xbf16> to vector<144x128xbf16>
    %cst_78 = arith.constant dense<0.000000e+00> : vector<16x128xf32>
    %103 = tpu.matmul %100, %102, %cst_78 {dimension_numbers = #tpu.dot_dimension_numbers<[1], [0], [0], [1], [0, 0, 1, 1], [], []>} : vector<16x144xbf16>, vector<144x128xbf16>, vector<16x128xf32> -> vector<16x128xf32>
    %104 = arith.addf %99, %103 : vector<16x128xf32>
    %c0_79 = arith.constant 0 : index
    %c0_80 = arith.constant 0 : index
    %105 = vector.load %arg10[%c0_79, %c0_80] : memref<1x128xf32, #tpu.memory_space<vmem>>, vector<1x128xf32>
    %106 = vector.broadcast %105 : vector<1x128xf32> to vector<16x128xf32>
    %107 = arith.addf %104, %106 : vector<16x128xf32>
    %cst_81 = arith.constant 0.000000e+00 : f32
    %108 = vector.broadcast %cst_81 : f32 to vector<16x128xf32>
    %109 = arith.cmpf oge, %107, %108 : vector<16x128xf32>
    %cst_82 = arith.constant 0.00999999977 : f32
    %110 = vector.broadcast %cst_82 : f32 to vector<16x128xf32>
    %111 = arith.mulf %110, %107 : vector<16x128xf32>
    %112 = arith.select %109, %107, %111 : vector<16x128xi1>, vector<16x128xf32>
    %113 = arith.truncf %112 : vector<16x128xf32> to vector<16x128xbf16>
    %cst_83 = arith.constant 0.000000e+00 : bf16
    %114 = vector.broadcast %cst_83 : bf16 to vector<20x160xbf16>
    %c0_84 = arith.constant 0 : index
    %c0_85 = arith.constant 0 : index
    %115 = vector.load %arg22[%c0_84, %c0_85] : memref<20x160xbf16, #tpu.memory_space<vmem>>, vector<20x160xbf16>
    tpu.vector_store %arg22[%c0_84, %c0_85], %114 {strides = array<i32>} : memref<20x160xbf16, #tpu.memory_space<vmem>>, vector<20x160xbf16>,
    %116 = vector.extract_strided_slice %113 {offsets = [0, 0], sizes = [8, 128], strides = [1, 1]} : vector<16x128xbf16> to vector<8x128xbf16>
    %c1_86 = arith.constant 1 : index
    %c16 = arith.constant 16 : index
    %117 = vector.load %arg22[%c1_86, %c16] : memref<20x160xbf16, #tpu.memory_space<vmem>>, vector<8x128xbf16>
    tpu.vector_store %arg22[%c1_86, %c16], %116 {strides = array<i32>} : memref<20x160xbf16, #tpu.memory_space<vmem>>, vector<8x128xbf16>,
    %118 = vector.extract_strided_slice %113 {offsets = [8, 0], sizes = [8, 128], strides = [1, 1]} : vector<16x128xbf16> to vector<8x128xbf16>
    %c11 = arith.constant 11 : index
    %c16_87 = arith.constant 16 : index
    %119 = vector.load %arg22[%c11, %c16_87] : memref<20x160xbf16, #tpu.memory_space<vmem>>, vector<8x128xbf16>
    tpu.vector_store %arg22[%c11, %c16_87], %118 {strides = array<i32>} : memref<20x160xbf16, #tpu.memory_space<vmem>>, vector<8x128xbf16>,
    %c0_88 = arith.constant 0 : index
    %c0_89 = arith.constant 0 : index
    %120 = vector.load %arg22[%c0_88, %c0_89] : memref<20x160xbf16, #tpu.memory_space<vmem>>, vector<20x160xbf16>
    %c0_90 = arith.constant 0 : index
    %c0_91 = arith.constant 0 : index
    %121 = vector.load %arg11[%c0_90, %c0_91] : memref<32x20xbf16, #tpu.memory_space<vmem>>, vector<32x20xbf16>
    %cst_92 = arith.constant dense<0.000000e+00> : vector<32x160xf32>
    %122 = tpu.matmul %121, %120, %cst_92 {dimension_numbers = #tpu.dot_dimension_numbers<[1], [0], [0], [1], [0, 0, 1, 1], [], []>} : vector<32x20xbf16>, vector<20x160xbf16>, vector<32x160xf32> -> vector<32x160xf32>
    %123 = arith.truncf %122 : vector<32x160xf32> to vector<32x160xbf16>
    %cst_93 = arith.constant 0.000000e+00 : f32
    %124 = vector.broadcast %cst_93 : f32 to vector<8x128xf32>
    %125 = vector.extract_strided_slice %123 {offsets = [0, 0], sizes = [8, 160], strides = [1, 1]} : vector<32x160xbf16> to vector<8x160xbf16>
    %c0_94 = arith.constant 0 : index
    %c0_95 = arith.constant 0 : index
    %c0_96 = arith.constant 0 : index
    %126 = vector.load %arg12[%c0_94, %c0_95, %c0_96] : memref<4x160x128xbf16, #tpu.memory_space<vmem>>, vector<1x160x128xbf16>
    %127 = vector.shape_cast %126 : vector<1x160x128xbf16> to vector<160x128xbf16>
    %cst_97 = arith.constant dense<0.000000e+00> : vector<8x128xf32>
    %128 = tpu.matmul %125, %127, %cst_97 {dimension_numbers = #tpu.dot_dimension_numbers<[1], [0], [0], [1], [0, 0, 1, 1], [], []>} : vector<8x160xbf16>, vector<160x128xbf16>, vector<8x128xf32> -> vector<8x128xf32>
    %129 = arith.addf %124, %128 : vector<8x128xf32>
    %130 = vector.extract_strided_slice %123 {offsets = [8, 0], sizes = [8, 160], strides = [1, 1]} : vector<32x160xbf16> to vector<8x160xbf16>
    %c1_98 = arith.constant 1 : index
    %c0_99 = arith.constant 0 : index
    %c0_100 = arith.constant 0 : index
    %131 = vector.load %arg12[%c1_98, %c0_99, %c0_100] : memref<4x160x128xbf16, #tpu.memory_space<vmem>>, vector<1x160x128xbf16>
    %132 = vector.shape_cast %131 : vector<1x160x128xbf16> to vector<160x128xbf16>
    %cst_101 = arith.constant dense<0.000000e+00> : vector<8x128xf32>
    %133 = tpu.matmul %130, %132, %cst_101 {dimension_numbers = #tpu.dot_dimension_numbers<[1], [0], [0], [1], [0, 0, 1, 1], [], []>} : vector<8x160xbf16>, vector<160x128xbf16>, vector<8x128xf32> -> vector<8x128xf32>
    %134 = arith.addf %129, %133 : vector<8x128xf32>
    %135 = vector.extract_strided_slice %123 {offsets = [16, 0], sizes = [8, 160], strides = [1, 1]} : vector<32x160xbf16> to vector<8x160xbf16>
    %c2_102 = arith.constant 2 : index
    %c0_103 = arith.constant 0 : index
    %c0_104 = arith.constant 0 : index
    %136 = vector.load %arg12[%c2_102, %c0_103, %c0_104] : memref<4x160x128xbf16, #tpu.memory_space<vmem>>, vector<1x160x128xbf16>
    %137 = vector.shape_cast %136 : vector<1x160x128xbf16> to vector<160x128xbf16>
    %cst_105 = arith.constant dense<0.000000e+00> : vector<8x128xf32>
    %138 = tpu.matmul %135, %137, %cst_105 {dimension_numbers = #tpu.dot_dimension_numbers<[1], [0], [0], [1], [0, 0, 1, 1], [], []>} : vector<8x160xbf16>, vector<160x128xbf16>, vector<8x128xf32> -> vector<8x128xf32>
    %139 = arith.addf %134, %138 : vector<8x128xf32>
    %140 = vector.extract_strided_slice %123 {offsets = [24, 0], sizes = [8, 160], strides = [1, 1]} : vector<32x160xbf16> to vector<8x160xbf16>
    %c3_106 = arith.constant 3 : index
    %c0_107 = arith.constant 0 : index
    %c0_108 = arith.constant 0 : index
    %141 = vector.load %arg12[%c3_106, %c0_107, %c0_108] : memref<4x160x128xbf16, #tpu.memory_space<vmem>>, vector<1x160x128xbf16>
    %142 = vector.shape_cast %141 : vector<1x160x128xbf16> to vector<160x128xbf16>
    %cst_109 = arith.constant dense<0.000000e+00> : vector<8x128xf32>
    %143 = tpu.matmul %140, %142, %cst_109 {dimension_numbers = #tpu.dot_dimension_numbers<[1], [0], [0], [1], [0, 0, 1, 1], [], []>} : vector<8x160xbf16>, vector<160x128xbf16>, vector<8x128xf32> -> vector<8x128xf32>
    %144 = arith.addf %139, %143 : vector<8x128xf32>
    %c0_110 = arith.constant 0 : index
    %c0_111 = arith.constant 0 : index
    %145 = vector.load %arg13[%c0_110, %c0_111] : memref<1x128xf32, #tpu.memory_space<vmem>>, vector<1x128xf32>
    %146 = vector.broadcast %145 : vector<1x128xf32> to vector<8x128xf32>
    %147 = arith.addf %144, %146 : vector<8x128xf32>
    %cst_112 = arith.constant 0.000000e+00 : f32
    %148 = vector.broadcast %cst_112 : f32 to vector<8x128xf32>
    %149 = arith.cmpf oge, %147, %148 : vector<8x128xf32>
    %cst_113 = arith.constant 0.00999999977 : f32
    %150 = vector.broadcast %cst_113 : f32 to vector<8x128xf32>
    %151 = arith.mulf %150, %147 : vector<8x128xf32>
    %152 = arith.select %149, %147, %151 : vector<8x128xi1>, vector<8x128xf32>
    %153 = arith.truncf %152 : vector<8x128xf32> to vector<8x128xbf16>
    %cst_114 = arith.constant 0.000000e+00 : bf16
    %154 = vector.broadcast %cst_114 : bf16 to vector<12x192xbf16>
    %c0_115 = arith.constant 0 : index
    %c0_116 = arith.constant 0 : index
    %155 = vector.load %arg23[%c0_115, %c0_116] : memref<12x192xbf16, #tpu.memory_space<vmem>>, vector<12x192xbf16>
    tpu.vector_store %arg23[%c0_115, %c0_116], %154 {strides = array<i32>} : memref<12x192xbf16, #tpu.memory_space<vmem>>, vector<12x192xbf16>,
    %156 = vector.extract_strided_slice %153 {offsets = [0, 0], sizes = [4, 128], strides = [1, 1]} : vector<8x128xbf16> to vector<4x128xbf16>
    %c1_117 = arith.constant 1 : index
    %c32 = arith.constant 32 : index
    %157 = vector.load %arg23[%c1_117, %c32] : memref<12x192xbf16, #tpu.memory_space<vmem>>, vector<4x128xbf16>
    tpu.vector_store %arg23[%c1_117, %c32], %156 {strides = array<i32>} : memref<12x192xbf16, #tpu.memory_space<vmem>>, vector<4x128xbf16>,
    %158 = vector.extract_strided_slice %153 {offsets = [4, 0], sizes = [4, 128], strides = [1, 1]} : vector<8x128xbf16> to vector<4x128xbf16>
    %c7 = arith.constant 7 : index
    %c32_118 = arith.constant 32 : index
    %159 = vector.load %arg23[%c7, %c32_118] : memref<12x192xbf16, #tpu.memory_space<vmem>>, vector<4x128xbf16>
    tpu.vector_store %arg23[%c7, %c32_118], %158 {strides = array<i32>} : memref<12x192xbf16, #tpu.memory_space<vmem>>, vector<4x128xbf16>,
    %c0_119 = arith.constant 0 : index
    %c0_120 = arith.constant 0 : index
    %160 = vector.load %arg23[%c0_119, %c0_120] : memref<12x192xbf16, #tpu.memory_space<vmem>>, vector<12x192xbf16>
    %c0_121 = arith.constant 0 : index
    %c0_122 = arith.constant 0 : index
    %161 = vector.load %arg14[%c0_121, %c0_122] : memref<16x12xbf16, #tpu.memory_space<vmem>>, vector<16x12xbf16>
    %cst_123 = arith.constant dense<0.000000e+00> : vector<16x192xf32>
    %162 = tpu.matmul %161, %160, %cst_123 {dimension_numbers = #tpu.dot_dimension_numbers<[1], [0], [0], [1], [0, 0, 1, 1], [], []>} : vector<16x12xbf16>, vector<12x192xbf16>, vector<16x192xf32> -> vector<16x192xf32>
    %163 = arith.truncf %162 : vector<16x192xf32> to vector<16x192xbf16>
    %cst_124 = arith.constant 0.000000e+00 : f32
    %164 = vector.broadcast %cst_124 : f32 to vector<4x64xf32>
    %165 = vector.extract_strided_slice %163 {offsets = [0, 0], sizes = [4, 192], strides = [1, 1]} : vector<16x192xbf16> to vector<4x192xbf16>
    %c0_125 = arith.constant 0 : index
    %c0_126 = arith.constant 0 : index
    %c0_127 = arith.constant 0 : index
    %166 = vector.load %arg15[%c0_125, %c0_126, %c0_127] : memref<4x192x64xbf16, #tpu.memory_space<vmem>>, vector<1x192x64xbf16>
    %167 = vector.shape_cast %166 : vector<1x192x64xbf16> to vector<192x64xbf16>
    %cst_128 = arith.constant dense<0.000000e+00> : vector<4x64xf32>
    %168 = tpu.matmul %165, %167, %cst_128 {dimension_numbers = #tpu.dot_dimension_numbers<[1], [0], [0], [1], [0, 0, 1, 1], [], []>} : vector<4x192xbf16>, vector<192x64xbf16>, vector<4x64xf32> -> vector<4x64xf32>
    %169 = arith.addf %164, %168 : vector<4x64xf32>
    %170 = vector.extract_strided_slice %163 {offsets = [4, 0], sizes = [4, 192], strides = [1, 1]} : vector<16x192xbf16> to vector<4x192xbf16>
    %c1_129 = arith.constant 1 : index
    %c0_130 = arith.constant 0 : index
    %c0_131 = arith.constant 0 : index
    %171 = vector.load %arg15[%c1_129, %c0_130, %c0_131] : memref<4x192x64xbf16, #tpu.memory_space<vmem>>, vector<1x192x64xbf16>
    %172 = vector.shape_cast %171 : vector<1x192x64xbf16> to vector<192x64xbf16>
    %cst_132 = arith.constant dense<0.000000e+00> : vector<4x64xf32>
    %173 = tpu.matmul %170, %172, %cst_132 {dimension_numbers = #tpu.dot_dimension_numbers<[1], [0], [0], [1], [0, 0, 1, 1], [], []>} : vector<4x192xbf16>, vector<192x64xbf16>, vector<4x64xf32> -> vector<4x64xf32>
    %174 = arith.addf %169, %173 : vector<4x64xf32>
    %175 = vector.extract_strided_slice %163 {offsets = [8, 0], sizes = [4, 192], strides = [1, 1]} : vector<16x192xbf16> to vector<4x192xbf16>
    %c2_133 = arith.constant 2 : index
    %c0_134 = arith.constant 0 : index
    %c0_135 = arith.constant 0 : index
    %176 = vector.load %arg15[%c2_133, %c0_134, %c0_135] : memref<4x192x64xbf16, #tpu.memory_space<vmem>>, vector<1x192x64xbf16>
    %177 = vector.shape_cast %176 : vector<1x192x64xbf16> to vector<192x64xbf16>
    %cst_136 = arith.constant dense<0.000000e+00> : vector<4x64xf32>
    %178 = tpu.matmul %175, %177, %cst_136 {dimension_numbers = #tpu.dot_dimension_numbers<[1], [0], [0], [1], [0, 0, 1, 1], [], []>} : vector<4x192xbf16>, vector<192x64xbf16>, vector<4x64xf32> -> vector<4x64xf32>
    %179 = arith.addf %174, %178 : vector<4x64xf32>
    %180 = vector.extract_strided_slice %163 {offsets = [12, 0], sizes = [4, 192], strides = [1, 1]} : vector<16x192xbf16> to vector<4x192xbf16>
    %c3_137 = arith.constant 3 : index
    %c0_138 = arith.constant 0 : index
    %c0_139 = arith.constant 0 : index
    %181 = vector.load %arg15[%c3_137, %c0_138, %c0_139] : memref<4x192x64xbf16, #tpu.memory_space<vmem>>, vector<1x192x64xbf16>
    %182 = vector.shape_cast %181 : vector<1x192x64xbf16> to vector<192x64xbf16>
    %cst_140 = arith.constant dense<0.000000e+00> : vector<4x64xf32>
    %183 = tpu.matmul %180, %182, %cst_140 {dimension_numbers = #tpu.dot_dimension_numbers<[1], [0], [0], [1], [0, 0, 1, 1], [], []>} : vector<4x192xbf16>, vector<192x64xbf16>, vector<4x64xf32> -> vector<4x64xf32>
    %184 = arith.addf %179, %183 : vector<4x64xf32>
    %c0_141 = arith.constant 0 : index
    %c0_142 = arith.constant 0 : index
    %185 = vector.load %arg16[%c0_141, %c0_142] : memref<1x64xf32, #tpu.memory_space<vmem>>, vector<1x64xf32>
    %186 = vector.broadcast %185 : vector<1x64xf32> to vector<4x64xf32>
    %187 = arith.addf %184, %186 : vector<4x64xf32>
    %cst_143 = arith.constant 0.000000e+00 : f32
    %188 = vector.broadcast %cst_143 : f32 to vector<4x64xf32>
    %189 = arith.cmpf oge, %187, %188 : vector<4x64xf32>
    %cst_144 = arith.constant 0.00999999977 : f32
    %190 = vector.broadcast %cst_144 : f32 to vector<4x64xf32>
    %191 = arith.mulf %190, %187 : vector<4x64xf32>
    %192 = arith.select %189, %187, %191 : vector<4x64xi1>, vector<4x64xf32>
    %193 = arith.truncf %192 : vector<4x64xf32> to vector<4x64xbf16>
    %cst_145 = arith.constant 0.000000e+00 : f32
    %194 = vector.broadcast %cst_145 : f32 to vector<2x16xf32>
    %195 = vector.extract_strided_slice %193 {offsets = [0, 0], sizes = [2, 64], strides = [1, 1]} : vector<4x64xbf16> to vector<2x64xbf16>
    %c0_146 = arith.constant 0 : index
    %c0_147 = arith.constant 0 : index
    %c0_148 = arith.constant 0 : index
    %196 = vector.load %arg17[%c0_146, %c0_147, %c0_148] : memref<2x64x16xbf16, #tpu.memory_space<vmem>>, vector<1x64x16xbf16>
    %197 = vector.shape_cast %196 : vector<1x64x16xbf16> to vector<64x16xbf16>
    %cst_149 = arith.constant dense<0.000000e+00> : vector<2x16xf32>
    %198 = tpu.matmul %195, %197, %cst_149 {dimension_numbers = #tpu.dot_dimension_numbers<[1], [0], [0], [1], [0, 0, 1, 1], [], []>} : vector<2x64xbf16>, vector<64x16xbf16>, vector<2x16xf32> -> vector<2x16xf32>
    %199 = arith.addf %194, %198 : vector<2x16xf32>
    %200 = vector.extract_strided_slice %193 {offsets = [2, 0], sizes = [2, 64], strides = [1, 1]} : vector<4x64xbf16> to vector<2x64xbf16>
    %c1_150 = arith.constant 1 : index
    %c0_151 = arith.constant 0 : index
    %c0_152 = arith.constant 0 : index
    %201 = vector.load %arg17[%c1_150, %c0_151, %c0_152] : memref<2x64x16xbf16, #tpu.memory_space<vmem>>, vector<1x64x16xbf16>
    %202 = vector.shape_cast %201 : vector<1x64x16xbf16> to vector<64x16xbf16>
    %cst_153 = arith.constant dense<0.000000e+00> : vector<2x16xf32>
    %203 = tpu.matmul %200, %202, %cst_153 {dimension_numbers = #tpu.dot_dimension_numbers<[1], [0], [0], [1], [0, 0, 1, 1], [], []>} : vector<2x64xbf16>, vector<64x16xbf16>, vector<2x16xf32> -> vector<2x16xf32>
    %204 = arith.addf %199, %203 : vector<2x16xf32>
    %c0_154 = arith.constant 0 : index
    %c0_155 = arith.constant 0 : index
    %205 = vector.load %arg18[%c0_154, %c0_155] : memref<1x16xf32, #tpu.memory_space<vmem>>, vector<1x16xf32>
    %206 = vector.broadcast %205 : vector<1x16xf32> to vector<2x16xf32>
    %207 = arith.addf %204, %206 : vector<2x16xf32>
    %c0_156 = arith.constant 0 : index
    %c0_157 = arith.constant 0 : index
    %208 = vector.load %arg19[%c0_156, %c0_157] : memref<2x16xf32, #tpu.memory_space<vmem>>, vector<2x16xf32>
    tpu.vector_store %arg19[%c0_156, %c0_157], %207 {strides = array<i32>} : memref<2x16xf32, #tpu.memory_space<vmem>>, vector<2x16xf32>,
    return
  }
  func.func @transform_0(%arg0: i32) -> (i32, i32) {
    %c0_i32 = arith.constant 0 : i32
    %c0_i32_0 = arith.constant 0 : i32
    %c0_i32_1 = arith.constant 0 : i32
    return %c0_i32, %c0_i32_0 : i32, i32
  }
  func.func @transform_1(%arg0: i32) -> (i32, i32) {
    %c0_i32 = arith.constant 0 : i32
    %c0_i32_0 = arith.constant 0 : i32
    %c0_i32_1 = arith.constant 0 : i32
    return %c0_i32, %c0_i32_0 : i32, i32
  }
  func.func @transform_2(%arg0: i32) -> (i32, i32, i32) {
    %c0_i32 = arith.constant 0 : i32
    %c0_i32_0 = arith.constant 0 : i32
    %c0_i32_1 = arith.constant 0 : i32
    %c0_i32_2 = arith.constant 0 : i32
    return %c0_i32, %c0_i32_0, %c0_i32_1 : i32, i32, i32
  }
  func.func @transform_3(%arg0: i32) -> (i32, i32) {
    %c0_i32 = arith.constant 0 : i32
    %c0_i32_0 = arith.constant 0 : i32
    %c0_i32_1 = arith.constant 0 : i32
    return %c0_i32, %c0_i32_0 : i32, i32
  }
  func.func @transform_4(%arg0: i32) -> (i32, i32) {
    %c0_i32 = arith.constant 0 : i32
    %c0_i32_0 = arith.constant 0 : i32
    %c0_i32_1 = arith.constant 0 : i32
    return %c0_i32, %c0_i32_0 : i32, i32
  }
  func.func @transform_5(%arg0: i32) -> (i32, i32, i32) {
    %c0_i32 = arith.constant 0 : i32
    %c0_i32_0 = arith.constant 0 : i32
    %c0_i32_1 = arith.constant 0 : i32
    %c0_i32_2 = arith.constant 0 : i32
    return %c0_i32, %c0_i32_0, %c0_i32_1 : i32, i32, i32
  }
  func.func @transform_6(%arg0: i32) -> (i32, i32) {
    %c0_i32 = arith.constant 0 : i32
    %c0_i32_0 = arith.constant 0 : i32
    %c0_i32_1 = arith.constant 0 : i32
    return %c0_i32, %c0_i32_0 : i32, i32
  }
  func.func @transform_7(%arg0: i32) -> (i32, i32) {
    %c0_i32 = arith.constant 0 : i32
    %c0_i32_0 = arith.constant 0 : i32
    %c0_i32_1 = arith.constant 0 : i32
    return %c0_i32, %c0_i32_0 : i32, i32
  }
  func.func @transform_8(%arg0: i32) -> (i32, i32, i32) {
    %c0_i32 = arith.constant 0 : i32
    %c0_i32_0 = arith.constant 0 : i32
    %c0_i32_1 = arith.constant 0 : i32
    %c0_i32_2 = arith.constant 0 : i32
    return %c0_i32, %c0_i32_0, %c0_i32_1 : i32, i32, i32
  }
  func.func @transform_9(%arg0: i32) -> (i32, i32) {
    %c0_i32 = arith.constant 0 : i32
    %c0_i32_0 = arith.constant 0 : i32
    %c0_i32_1 = arith.constant 0 : i32
    return %c0_i32, %c0_i32_0 : i32, i32
  }
  func.func @transform_10(%arg0: i32) -> (i32, i32) {
    %c0_i32 = arith.constant 0 : i32
    %c0_i32_0 = arith.constant 0 : i32
    %c0_i32_1 = arith.constant 0 : i32
    return %c0_i32, %c0_i32_0 : i32, i32
  }
  func.func @transform_11(%arg0: i32) -> (i32, i32, i32) {
    %c0_i32 = arith.constant 0 : i32
    %c0_i32_0 = arith.constant 0 : i32
    %c0_i32_1 = arith.constant 0 : i32
    %c0_i32_2 = arith.constant 0 : i32
    return %c0_i32, %c0_i32_0, %c0_i32_1 : i32, i32, i32
  }
  func.func @transform_12(%arg0: i32) -> (i32, i32) {
    %c0_i32 = arith.constant 0 : i32
    %c0_i32_0 = arith.constant 0 : i32
    %c0_i32_1 = arith.constant 0 : i32
    return %c0_i32, %c0_i32_0 : i32, i32
  }
  func.func @transform_13(%arg0: i32) -> (i32, i32) {
    %c0_i32 = arith.constant 0 : i32
    %c0_i32_0 = arith.constant 0 : i32
    %c0_i32_1 = arith.constant 0 : i32
    return %c0_i32, %c0_i32_0 : i32, i32
  }
  func.func @transform_14(%arg0: i32) -> (i32, i32, i32) {
    %c0_i32 = arith.constant 0 : i32
    %c0_i32_0 = arith.constant 0 : i32
    %c0_i32_1 = arith.constant 0 : i32
    %c0_i32_2 = arith.constant 0 : i32
    return %c0_i32, %c0_i32_0, %c0_i32_1 : i32, i32, i32
  }
  func.func @transform_15(%arg0: i32) -> (i32, i32) {
    %c0_i32 = arith.constant 0 : i32
    %c0_i32_0 = arith.constant 0 : i32
    %c0_i32_1 = arith.constant 0 : i32
    return %c0_i32, %c0_i32_0 : i32, i32
  }
  func.func @transform_16(%arg0: i32) -> (i32, i32, i32) {
    %c0_i32 = arith.constant 0 : i32
    %c0_i32_0 = arith.constant 0 : i32
    %c0_i32_1 = arith.constant 0 : i32
    %c0_i32_2 = arith.constant 0 : i32
    return %c0_i32, %c0_i32_0, %c0_i32_1 : i32, i32, i32
  }
  func.func @transform_17(%arg0: i32) -> (i32, i32) {
    %c0_i32 = arith.constant 0 : i32
    %c0_i32_0 = arith.constant 0 : i32
    %c0_i32_1 = arith.constant 0 : i32
    return %c0_i32, %c0_i32_0 : i32, i32
  }
  func.func @transform_18(%arg0: i32) -> (i32, i32) {
    %c0_i32 = arith.constant 0 : i32
    %c0_i32_0 = arith.constant 0 : i32
    %c0_i32_1 = arith.constant 0 : i32
    return %c0_i32, %c0_i32_0 : i32, i32
  }
}

</mosaic_0001>

<llo_original>
// kernel: tile.28
$region0: #{tile.28}
  #allocation0 [shape = 's32[1]{0}', space=sflag, size = 0x4, scoped, tag = 'scoped memory for tile.28']
  %s0 = inlined_call_operand.vmem [shape: f32[4], index: 0, kind: input, shape index: {}]
  %s1 = inlined_call_operand.vmem [shape: f32[32,4], index: 1, kind: output, shape index: {}]
  // Predicated region
  $region2: #{tile.28} parent=0 // pred_check
    _
  $region3: #{tile.28} parent=0 // pred_check_branch
    %3 = sbr.rel (0) target = $region5
  $region4: #{tile.28} parent=0 // pred_region
    _
  $region5: #{tile.28} parent=0 // pred_fallthru
    _
  %v4 = vld [vmem:[%s0] ss:$0 sm:$0xff]
  %5 = vst [vmem:[%s1] sm:$0xff] %v4
  %s6 = scalar_lea.vmem %s1, 8
  %7 = vst [vmem:[%s6] sm:$0xff] %v4
  %s8 = scalar_lea.vmem %s1, 16
  %9 = vst [vmem:[%s8] sm:$0xff] %v4
  %s10 = scalar_lea.vmem %s1, 24
  %11 = vst [vmem:[%s10] sm:$0xff] %v4

// kernel: tile.29
$region0: #{tile.29}
  %s0 = inlined_call_operand.vmem [shape: f32[32,4], index: 0, kind: input, shape index: {}]
  %s1 = inlined_call_operand.vmem [shape: f32[1,128], index: 1, kind: output, shape index: {}]
  $region1: #{tile.29} parent=0
    #allocation0 [shape = 'u8[4096]{0}', space=vmem, size = 0x1000, scoped, tag = 'scoped mem for output reshape']
    %v2 = vld [vmem:[%s0] sm:$0x1]
    %vm3 = vcmask 31744
    %4 = vst.msk [vmem:[#allocation0] sm:$0x1] %vm3, %v2
    %s5 = scalar_lea.vmem %s0, 31
    %v6 = vld [vmem:[%s5] sm:$0x1]
    %7 = vrot.lane.b32.xlu0 %v6, 124
    %v8 = vpop.permute.xlu0 %7
    %vm9 = vcmask 1048544
    %10 = vst.msk [vmem:[#allocation0] sm:$0x1] %vm9, %v8
    %s11 = scalar_lea.vmem %s0, 30
    %v12 = vld [vmem:[%s11] sm:$0x1]
    %13 = vrot.lane.b32.xlu0 %v12, 120
    %v14 = vpop.permute.xlu0 %13
    %vm15 = vcmask 1015744
    %16 = vst.msk [vmem:[#allocation0] sm:$0x1] %vm15, %v14
    %s17 = scalar_lea.vmem %s0, 29
    %v18 = vld [vmem:[%s17] sm:$0x1]
    %19 = vrot.lane.b32.xlu0 %v18, 116
    %v20 = vpop.permute.xlu0 %19
    %vm21 = vcmask 982944
    %22 = vst.msk [vmem:[#allocation0] sm:$0x1] %vm21, %v20
    %s23 = scalar_lea.vmem %s0, 28
    %v24 = vld [vmem:[%s23] sm:$0x1]
    %25 = vrot.lane.b32.xlu0 %v24, 112
    %v26 = vpop.permute.xlu0 %25
    %vm27 = vcmask 950144
    %28 = vst.msk [vmem:[#allocation0] sm:$0x1] %vm27, %v26
    %s29 = scalar_lea.vmem %s0, 27
    %v30 = vld [vmem:[%s29] sm:$0x1]
    %31 = vrot.lane.b32.xlu0 %v30, 108
    %v32 = vpop.permute.xlu0 %31
    %vm33 = vcmask 917344
    %34 = vst.msk [vmem:[#allocation0] sm:$0x1] %vm33, %v32
    %s35 = scalar_lea.vmem %s0, 26
    %v36 = vld [vmem:[%s35] sm:$0x1]
    %37 = vrot.lane.b32.xlu0 %v36, 104
    %v38 = vpop.permute.xlu0 %37
    %vm39 = vcmask 884544
    %40 = vst.msk [vmem:[#allocation0] sm:$0x1] %vm39, %v38
    %s41 = scalar_lea.vmem %s0, 25
    %v42 = vld [vmem:[%s41] sm:$0x1]
    %43 = vrot.lane.b32.xlu0 %v42, 100
    %v44 = vpop.permute.xlu0 %43
    %vm45 = vcmask 851744
    %46 = vst.msk [vmem:[#allocation0] sm:$0x1] %vm45, %v44
    %s47 = scalar_lea.vmem %s0, 24
    %v48 = vld [vmem:[%s47] sm:$0x1]
    %49 = vrot.lane.b32.xlu0 %v48, 96
    %v50 = vpop.permute.xlu0 %49
    %vm51 = vcmask 818944
    %52 = vst.msk [vmem:[#allocation0] sm:$0x1] %vm51, %v50
    %s53 = scalar_lea.vmem %s0, 23
    %v54 = vld [vmem:[%s53] sm:$0x1]
    %55 = vrot.lane.b32.xlu0 %v54, 92
    %v56 = vpop.permute.xlu0 %55
    %vm57 = vcmask 786144
    %58 = vst.msk [vmem:[#allocation0] sm:$0x1] %vm57, %v56
    %s59 = scalar_lea.vmem %s0, 22
    %v60 = vld [vmem:[%s59] sm:$0x1]
    %61 = vrot.lane.b32.xlu0 %v60, 88
    %v62 = vpop.permute.xlu0 %61
    %vm63 = vcmask 753344
    %64 = vst.msk [vmem:[#allocation0] sm:$0x1] %vm63, %v62
    %s65 = scalar_lea.vmem %s0, 21
    %v66 = vld [vmem:[%s65] sm:$0x1]
    %67 = vrot.lane.b32.xlu0 %v66, 84
    %v68 = vpop.permute.xlu0 %67
    %vm69 = vcmask 720544
    %70 = vst.msk [vmem:[#allocation0] sm:$0x1] %vm69, %v68
    %s71 = scalar_lea.vmem %s0, 20
    %v72 = vld [vmem:[%s71] sm:$0x1]
    %73 = vrot.lane.b32.xlu0 %v72, 80
    %v74 = vpop.permute.xlu0 %73
    %vm75 = vcmask 687744
    %76 = vst.msk [vmem:[#allocation0] sm:$0x1] %vm75, %v74
    %s77 = scalar_lea.vmem %s0, 19
    %v78 = vld [vmem:[%s77] sm:$0x1]
    %79 = vrot.lane.b32.xlu0 %v78, 76
    %v80 = vpop.permute.xlu0 %79
    %vm81 = vcmask 654944
    %82 = vst.msk [vmem:[#allocation0] sm:$0x1] %vm81, %v80
    %s83 = scalar_lea.vmem %s0, 18
    %v84 = vld [vmem:[%s83] sm:$0x1]
    %85 = vrot.lane.b32.xlu0 %v84, 72
    %v86 = vpop.permute.xlu0 %85
    %vm87 = vcmask 622144
    %88 = vst.msk [vmem:[#allocation0] sm:$0x1] %vm87, %v86
    %s89 = scalar_lea.vmem %s0, 17
    %v90 = vld [vmem:[%s89] sm:$0x1]
    %91 = vrot.lane.b32.xlu0 %v90, 68
    %v92 = vpop.permute.xlu0 %91
    %vm93 = vcmask 589344
    %94 = vst.msk [vmem:[#allocation0] sm:$0x1] %vm93, %v92
    %s95 = scalar_lea.vmem %s0, 16
    %v96 = vld [vmem:[%s95] sm:$0x1]
    %97 = vrot.lane.b32.xlu0 %v96, 64
    %v98 = vpop.permute.xlu0 %97
    %vm99 = vcmask 556544
    %100 = vst.msk [vmem:[#allocation0] sm:$0x1] %vm99, %v98
    %s101 = scalar_lea.vmem %s0, 15
    %v102 = vld [vmem:[%s101] sm:$0x1]
    %103 = vrot.lane.b32.xlu0 %v102, 60
    %v104 = vpop.permute.xlu0 %103
    %vm105 = vcmask 523744
    %106 = vst.msk [vmem:[#allocation0] sm:$0x1] %vm105, %v104
    %s107 = scalar_lea.vmem %s0, 14
    %v108 = vld [vmem:[%s107] sm:$0x1]
    %109 = vrot.lane.b32.xlu0 %v108, 56
    %v110 = vpop.permute.xlu0 %109
    %vm111 = vcmask 490944
    %112 = vst.msk [vmem:[#allocation0] sm:$0x1] %vm111, %v110
    %s113 = scalar_lea.vmem %s0, 13
    %v114 = vld [vmem:[%s113] sm:$0x1]
    %115 = vrot.lane.b32.xlu0 %v114, 52
    %v116 = vpop.permute.xlu0 %115
    %vm117 = vcmask 458144
    %118 = vst.msk [vmem:[#allocation0] sm:$0x1] %vm117, %v116
    %s119 = scalar_lea.vmem %s0, 12
    %v120 = vld [vmem:[%s119] sm:$0x1]
    %121 = vrot.lane.b32.xlu0 %v120, 48
    %v122 = vpop.permute.xlu0 %121
    %vm123 = vcmask 425344
    %124 = vst.msk [vmem:[#allocation0] sm:$0x1] %vm123, %v122
    %s125 = scalar_lea.vmem %s0, 11
    %v126 = vld [vmem:[%s125] sm:$0x1]
    %127 = vrot.lane.b32.xlu0 %v126, 44
    %v128 = vpop.permute.xlu0 %127
    %vm129 = vcmask 392544
    %130 = vst.msk [vmem:[#allocation0] sm:$0x1] %vm129, %v128
    %s131 = scalar_lea.vmem %s0, 10
    %v132 = vld [vmem:[%s131] sm:$0x1]
    %133 = vrot.lane.b32.xlu0 %v132, 40
    %v134 = vpop.permute.xlu0 %133
    %vm135 = vcmask 359744
    %136 = vst.msk [vmem:[#allocation0] sm:$0x1] %vm135, %v134
    %s137 = scalar_lea.vmem %s0, 9
    %v138 = vld [vmem:[%s137] sm:$0x1]
    %139 = vrot.lane.b32.xlu0 %v138, 36
    %v140 = vpop.permute.xlu0 %139
    %vm141 = vcmask 326944
    %142 = vst.msk [vmem:[#allocation0] sm:$0x1] %vm141, %v140
    %s143 = scalar_lea.vmem %s0, 8
    %v144 = vld [vmem:[%s143] sm:$0x1]
    %145 = vrot.lane.b32.xlu0 %v144, 32
    %v146 = vpop.permute.xlu0 %145
    %vm147 = vcmask 294144
    %148 = vst.msk [vmem:[#allocation0] sm:$0x1] %vm147, %v146
    %s149 = scalar_lea.vmem %s0, 7
    %v150 = vld [vmem:[%s149] sm:$0x1]
    %151 = vrot.lane.b32.xlu0 %v150, 28
    %v152 = vpop.permute.xlu0 %151
    %vm153 = vcmask 261344
    %154 = vst.msk [vmem:[#allocation0] sm:$0x1] %vm153, %v152
    %s155 = scalar_lea.vmem %s0, 6
    %v156 = vld [vmem:[%s155] sm:$0x1]
    %157 = vrot.lane.b32.xlu0 %v156, 24
    %v158 = vpop.permute.xlu0 %157
    %vm159 = vcmask 228544
    %160 = vst.msk [vmem:[#allocation0] sm:$0x1] %vm159, %v158
    %s161 = scalar_lea.vmem %s0, 5
    %v162 = vld [vmem:[%s161] sm:$0x1]
    %163 = vrot.lane.b32.xlu0 %v162, 20
    %v164 = vpop.permute.xlu0 %163
    %vm165 = vcmask 195744
    %166 = vst.msk [vmem:[#allocation0] sm:$0x1] %vm165, %v164
    %s167 = scalar_lea.vmem %s0, 4
    %v168 = vld [vmem:[%s167] sm:$0x1]
    %169 = vrot.lane.b32.xlu0 %v168, 16
    %v170 = vpop.permute.xlu0 %169
    %vm171 = vcmask 162944
    %172 = vst.msk [vmem:[#allocation0] sm:$0x1] %vm171, %v170
    %s173 = scalar_lea.vmem %s0, 3
    %v174 = vld [vmem:[%s173] sm:$0x1]
    %175 = vrot.lane.b32.xlu0 %v174, 12
    %v176 = vpop.permute.xlu0 %175
    %vm177 = vcmask 130144
    %178 = vst.msk [vmem:[#allocation0] sm:$0x1] %vm177, %v176
    %s179 = scalar_lea.vmem %s0, 2
    %v180 = vld [vmem:[%s179] sm:$0x1]
    %181 = vrot.lane.b32.xlu0 %v180, 8
    %v182 = vpop.permute.xlu0 %181
    %vm183 = vcmask 97344
    %184 = vst.msk [vmem:[#allocation0] sm:$0x1] %vm183, %v182
    %s185 = scalar_lea.vmem %s0, 1
    %v186 = vld [vmem:[%s185] sm:$0x1]
    %187 = vrot.lane.b32.xlu0 %v186, 4
    %v188 = vpop.permute.xlu0 %187
    %vm189 = vcmask 64544
    %190 = vst.msk [vmem:[#allocation0] sm:$0x1] %vm189, %v188
    %s192 = ssub.s32 2, 1
    %v193 = vld [vmem:[#allocation0] sm:%s192]
    %s195 = ssub.s32 2, 1
    %196 = vst [vmem:[%s1] sm:%s195] %v193

// kernel: tile.33
$region0: #{tile.33}
  #allocation0 [shape = 's32[1]{0}', space=sflag, size = 0x4, scoped, tag = 'scoped memory for tile.33']
  %s0 = inlined_call_operand.vmem [shape: f32[8], index: 0, kind: input, shape index: {}]
  %s1 = inlined_call_operand.vmem [shape: f32[16,8], index: 1, kind: output, shape index: {}]
  // Predicated region
  $region2: #{tile.33} parent=0 // pred_check
    _
  $region3: #{tile.33} parent=0 // pred_check_branch
    %3 = sbr.rel (0) target = $region5
  $region4: #{tile.33} parent=0 // pred_region
    _
  $region5: #{tile.33} parent=0 // pred_fallthru
    _
  %v4 = vld [vmem:[%s0] ss:$0 sm:$0xff]
  %5 = vst [vmem:[%s1] sm:$0xff] %v4
  %s6 = scalar_lea.vmem %s1, 8
  %7 = vst [vmem:[%s6] sm:$0xff] %v4

// kernel: tile.34
$region0: #{tile.34}
  %s0 = inlined_call_operand.vmem [shape: f32[16,8], index: 0, kind: input, shape index: {}]
  %s1 = inlined_call_operand.vmem [shape: f32[1,128], index: 1, kind: output, shape index: {}]
  $region1: #{tile.34} parent=0
    #allocation0 [shape = 'u8[4096]{0}', space=vmem, size = 0x1000, scoped, tag = 'scoped mem for output reshape']
    %v2 = vld [vmem:[%s0] sm:$0x1]
    %vm3 = vcmask 64512
    %4 = vst.msk [vmem:[#allocation0] sm:$0x1] %vm3, %v2
    %s5 = scalar_lea.vmem %s0, 15
    %v6 = vld [vmem:[%s5] sm:$0x1]
    %7 = vrot.lane.b32.xlu0 %v6, 120
    %v8 = vpop.permute.xlu0 %7
    %vm9 = vcmask 1048512
    %10 = vst.msk [vmem:[#allocation0] sm:$0x1] %vm9, %v8
    %s11 = scalar_lea.vmem %s0, 14
    %v12 = vld [vmem:[%s11] sm:$0x1]
    %13 = vrot.lane.b32.xlu0 %v12, 112
    %v14 = vpop.permute.xlu0 %13
    %vm15 = vcmask 982912
    %16 = vst.msk [vmem:[#allocation0] sm:$0x1] %vm15, %v14
    %s17 = scalar_lea.vmem %s0, 13
    %v18 = vld [vmem:[%s17] sm:$0x1]
    %19 = vrot.lane.b32.xlu0 %v18, 104
    %v20 = vpop.permute.xlu0 %19
    %vm21 = vcmask 917312
    %22 = vst.msk [vmem:[#allocation0] sm:$0x1] %vm21, %v20
    %s23 = scalar_lea.vmem %s0, 12
    %v24 = vld [vmem:[%s23] sm:$0x1]
    %25 = vrot.lane.b32.xlu0 %v24, 96
    %v26 = vpop.permute.xlu0 %25
    %vm27 = vcmask 851712
    %28 = vst.msk [vmem:[#allocation0] sm:$0x1] %vm27, %v26
    %s29 = scalar_lea.vmem %s0, 11
    %v30 = vld [vmem:[%s29] sm:$0x1]
    %31 = vrot.lane.b32.xlu0 %v30, 88
    %v32 = vpop.permute.xlu0 %31
    %vm33 = vcmask 786112
    %34 = vst.msk [vmem:[#allocation0] sm:$0x1] %vm33, %v32
    %s35 = scalar_lea.vmem %s0, 10
    %v36 = vld [vmem:[%s35] sm:$0x1]
    %37 = vrot.lane.b32.xlu0 %v36, 80
    %v38 = vpop.permute.xlu0 %37
    %vm39 = vcmask 720512
    %40 = vst.msk [vmem:[#allocation0] sm:$0x1] %vm39, %v38
    %s41 = scalar_lea.vmem %s0, 9
    %v42 = vld [vmem:[%s41] sm:$0x1]
    %43 = vrot.lane.b32.xlu0 %v42, 72
    %v44 = vpop.permute.xlu0 %43
    %vm45 = vcmask 654912
    %46 = vst.msk [vmem:[#allocation0] sm:$0x1] %vm45, %v44
    %s47 = scalar_lea.vmem %s0, 8
    %v48 = vld [vmem:[%s47] sm:$0x1]
    %49 = vrot.lane.b32.xlu0 %v48, 64
    %v50 = vpop.permute.xlu0 %49
    %vm51 = vcmask 589312
    %52 = vst.msk [vmem:[#allocation0] sm:$0x1] %vm51, %v50
    %s53 = scalar_lea.vmem %s0, 7
    %v54 = vld [vmem:[%s53] sm:$0x1]
    %55 = vrot.lane.b32.xlu0 %v54, 56
    %v56 = vpop.permute.xlu0 %55
    %vm57 = vcmask 523712
    %58 = vst.msk [vmem:[#allocation0] sm:$0x1] %vm57, %v56
    %s59 = scalar_lea.vmem %s0, 6
    %v60 = vld [vmem:[%s59] sm:$0x1]
    %61 = vrot.lane.b32.xlu0 %v60, 48
    %v62 = vpop.permute.xlu0 %61
    %vm63 = vcmask 458112
    %64 = vst.msk [vmem:[#allocation0] sm:$0x1] %vm63, %v62
    %s65 = scalar_lea.vmem %s0, 5
    %v66 = vld [vmem:[%s65] sm:$0x1]
    %67 = vrot.lane.b32.xlu0 %v66, 40
    %v68 = vpop.permute.xlu0 %67
    %vm69 = vcmask 392512
    %70 = vst.msk [vmem:[#allocation0] sm:$0x1] %vm69, %v68
    %s71 = scalar_lea.vmem %s0, 4
    %v72 = vld [vmem:[%s71] sm:$0x1]
    %73 = vrot.lane.b32.xlu0 %v72, 32
    %v74 = vpop.permute.xlu0 %73
    %vm75 = vcmask 326912
    %76 = vst.msk [vmem:[#allocation0] sm:$0x1] %vm75, %v74
    %s77 = scalar_lea.vmem %s0, 3
    %v78 = vld [vmem:[%s77] sm:$0x1]
    %79 = vrot.lane.b32.xlu0 %v78, 24
    %v80 = vpop.permute.xlu0 %79
    %vm81 = vcmask 261312
    %82 = vst.msk [vmem:[#allocation0] sm:$0x1] %vm81, %v80
    %s83 = scalar_lea.vmem %s0, 2
    %v84 = vld [vmem:[%s83] sm:$0x1]
    %85 = vrot.lane.b32.xlu0 %v84, 16
    %v86 = vpop.permute.xlu0 %85
    %vm87 = vcmask 195712
    %88 = vst.msk [vmem:[#allocation0] sm:$0x1] %vm87, %v86
    %s89 = scalar_lea.vmem %s0, 1
    %v90 = vld [vmem:[%s89] sm:$0x1]
    %91 = vrot.lane.b32.xlu0 %v90, 8
    %v92 = vpop.permute.xlu0 %91
    %vm93 = vcmask 130112
    %94 = vst.msk [vmem:[#allocation0] sm:$0x1] %vm93, %v92
    %s96 = ssub.s32 2, 1
    %v97 = vld [vmem:[#allocation0] sm:%s96]
    %s99 = ssub.s32 2, 1
    %100 = vst [vmem:[%s1] sm:%s99] %v97

// kernel: tile.38
$region0: #{tile.38}
  #allocation0 [shape = 's32[1]{0}', space=sflag, size = 0x4, scoped, tag = 'scoped memory for tile.38']
  %s0 = inlined_call_operand.vmem [shape: f32[16], index: 0, kind: input, shape index: {}]
  %s1 = inlined_call_operand.vmem [shape: f32[8,16], index: 1, kind: output, shape index: {}]
  // Predicated region
  $region2: #{tile.38} parent=0 // pred_check
    _
  $region3: #{tile.38} parent=0 // pred_check_branch
    %3 = sbr.rel (0) target = $region5
  $region4: #{tile.38} parent=0 // pred_region
    _
  $region5: #{tile.38} parent=0 // pred_fallthru
    _
  %v4 = vld [vmem:[%s0] ss:$0 sm:$0xff]
  %5 = vst [vmem:[%s1] sm:$0xff] %v4

// kernel: tile.39
$region0: #{tile.39}
  %s0 = inlined_call_operand.vmem [shape: f32[8,16], index: 0, kind: input, shape index: {}]
  %s1 = inlined_call_operand.vmem [shape: f32[1,128], index: 1, kind: output, shape index: {}]
  $region1: #{tile.39} parent=0
    #allocation0 [shape = 'u8[4096]{0}', space=vmem, size = 0x1000, scoped, tag = 'scoped mem for output reshape']
    %v2 = vld [vmem:[%s0] sm:$0x1]
    %vm3 = vcmask 130048
    %4 = vst.msk [vmem:[#allocation0] sm:$0x1] %vm3, %v2
    %s5 = scalar_lea.vmem %s0, 7
    %v6 = vld [vmem:[%s5] sm:$0x1]
    %7 = vrot.lane.b32.xlu0 %v6, 112
    %v8 = vpop.permute.xlu0 %7
    %vm9 = vcmask 1048448
    %10 = vst.msk [vmem:[#allocation0] sm:$0x1] %vm9, %v8
    %s11 = scalar_lea.vmem %s0, 6
    %v12 = vld [vmem:[%s11] sm:$0x1]
    %13 = vrot.lane.b32.xlu0 %v12, 96
    %v14 = vpop.permute.xlu0 %13
    %vm15 = vcmask 917248
    %16 = vst.msk [vmem:[#allocation0] sm:$0x1] %vm15, %v14
    %s17 = scalar_lea.vmem %s0, 5
    %v18 = vld [vmem:[%s17] sm:$0x1]
    %19 = vrot.lane.b32.xlu0 %v18, 80
    %v20 = vpop.permute.xlu0 %19
    %vm21 = vcmask 786048
    %22 = vst.msk [vmem:[#allocation0] sm:$0x1] %vm21, %v20
    %s23 = scalar_lea.vmem %s0, 4
    %v24 = vld [vmem:[%s23] sm:$0x1]
    %25 = vrot.lane.b32.xlu0 %v24, 64
    %v26 = vpop.permute.xlu0 %25
    %vm27 = vcmask 654848
    %28 = vst.msk [vmem:[#allocation0] sm:$0x1] %vm27, %v26
    %s29 = scalar_lea.vmem %s0, 3
    %v30 = vld [vmem:[%s29] sm:$0x1]
    %31 = vrot.lane.b32.xlu0 %v30, 48
    %v32 = vpop.permute.xlu0 %31
    %vm33 = vcmask 523648
    %34 = vst.msk [vmem:[#allocation0] sm:$0x1] %vm33, %v32
    %s35 = scalar_lea.vmem %s0, 2
    %v36 = vld [vmem:[%s35] sm:$0x1]
    %37 = vrot.lane.b32.xlu0 %v36, 32
    %v38 = vpop.permute.xlu0 %37
    %vm39 = vcmask 392448
    %40 = vst.msk [vmem:[#allocation0] sm:$0x1] %vm39, %v38
    %s41 = scalar_lea.vmem %s0, 1
    %v42 = vld [vmem:[%s41] sm:$0x1]
    %43 = vrot.lane.b32.xlu0 %v42, 16
    %v44 = vpop.permute.xlu0 %43
    %vm45 = vcmask 261248
    %46 = vst.msk [vmem:[#allocation0] sm:$0x1] %vm45, %v44
    %s48 = ssub.s32 2, 1
    %v49 = vld [vmem:[#allocation0] sm:%s48]
    %s51 = ssub.s32 2, 1
    %52 = vst [vmem:[%s1] sm:%s51] %v49

// kernel: tile.43
$region0: #{tile.43}
  #allocation0 [shape = 's32[1]{0}', space=sflag, size = 0x4, scoped, tag = 'scoped memory for tile.43']
  %s0 = inlined_call_operand.vmem [shape: f32[32], index: 0, kind: input, shape index: {}]
  %s1 = inlined_call_operand.vmem [shape: f32[4,32], index: 1, kind: output, shape index: {}]
  // Predicated region
  $region2: #{tile.43} parent=0 // pred_check
    _
  $region3: #{tile.43} parent=0 // pred_check_branch
    %3 = sbr.rel (0) target = $region5
  $region4: #{tile.43} parent=0 // pred_region
    _
  $region5: #{tile.43} parent=0 // pred_fallthru
    _
  %v4 = vld [vmem:[%s0] ss:$0 sm:$0xff]
  %5 = vst [vmem:[%s1] sm:$0xf] %v4

// kernel: tile.44
$region0: #{tile.44}
  %s0 = inlined_call_operand.vmem [shape: f32[4,32], index: 0, kind: input, shape index: {}]
  %s1 = inlined_call_operand.vmem [shape: f32[1,128], index: 1, kind: output, shape index: {}]
  $region1: #{tile.44} parent=0
    #allocation0 [shape = 'u8[4096]{0}', space=vmem, size = 0x1000, scoped, tag = 'scoped mem for output reshape']
    #allocation1 [shape = 'u8[4096]{0}', space=vmem, size = 0x1000, scoped, tag = 'scoped mem for input reshape']
    %s3 = ssub.s32 16, 1
    %v4 = vld [vmem:[%s0] sm:%s3]
    %5 = vst [vmem:[#allocation1] sm:%s3] %v4
    %v6 = vld [vmem:[#allocation1] sm:$0x1]
    %vm7 = vcmask 261120
    %8 = vst.msk [vmem:[#allocation0] sm:$0x1] %vm7, %v6
    %s9 = scalar_lea.vmem [#allocation1], 3
    %v10 = vld [vmem:[%s9] sm:$0x1]
    %11 = vrot.lane.b32.xlu0 %v10, 96
    %v12 = vpop.permute.xlu0 %11
    %vm13 = vcmask 1048320
    %14 = vst.msk [vmem:[#allocation0] sm:$0x1] %vm13, %v12
    %s15 = scalar_lea.vmem [#allocation1], 2
    %v16 = vld [vmem:[%s15] sm:$0x1]
    %17 = vrot.lane.b32.xlu0 %v16, 64
    %v18 = vpop.permute.xlu0 %17
    %vm19 = vcmask 785920
    %20 = vst.msk [vmem:[#allocation0] sm:$0x1] %vm19, %v18
    %s21 = scalar_lea.vmem [#allocation1], 1
    %v22 = vld [vmem:[%s21] sm:$0x1]
    %23 = vrot.lane.b32.xlu0 %v22, 32
    %v24 = vpop.permute.xlu0 %23
    %vm25 = vcmask 523520
    %26 = vst.msk [vmem:[#allocation0] sm:$0x1] %vm25, %v24
    %s28 = ssub.s32 2, 1
    %v29 = vld [vmem:[#allocation0] sm:%s28]
    %s31 = ssub.s32 2, 1
    %32 = vst [vmem:[%s1] sm:%s31] %v29

// kernel: tile.48
$region0: #{tile.48}
  #allocation0 [shape = 's32[1]{0}', space=sflag, size = 0x4, scoped, tag = 'scoped memory for tile.48']
  %s0 = inlined_call_operand.vmem [shape: f32[32], index: 0, kind: input, shape index: {}]
  %s1 = inlined_call_operand.vmem [shape: f32[2,32], index: 1, kind: output, shape index: {}]
  // Predicated region
  $region2: #{tile.48} parent=0 // pred_check
    _
  $region3: #{tile.48} parent=0 // pred_check_branch
    %3 = sbr.rel (0) target = $region5
  $region4: #{tile.48} parent=0 // pred_region
    _
  $region5: #{tile.48} parent=0 // pred_fallthru
    _
  %v4 = vld [vmem:[%s0] ss:$0 sm:$0xff]
  %5 = vst [vmem:[%s1] sm:$0x3] %v4

// kernel: tile.49
$region0: #{tile.49}
  %s0 = inlined_call_operand.vmem [shape: f32[2,32], index: 0, kind: input, shape index: {}]
  %s1 = inlined_call_operand.vmem [shape: f32[1,64], index: 1, kind: output, shape index: {}]
  $region1: #{tile.49} parent=0
    #allocation0 [shape = 'u8[4096]{0}', space=vmem, size = 0x1000, scoped, tag = 'scoped mem for output reshape']
    #allocation1 [shape = 'u8[4096]{0}', space=vmem, size = 0x1000, scoped, tag = 'scoped mem for input reshape']
    %s3 = ssub.s32 4, 1
    %v4 = vld [vmem:[%s0] sm:%s3]
    %5 = vst [vmem:[#allocation1] sm:%s3] %v4
    %v6 = vld [vmem:[#allocation1] sm:$0x1]
    %vm7 = vcmask 261120
    %8 = vst.msk [vmem:[#allocation0] sm:$0x1] %vm7, %v6
    %s9 = scalar_lea.vmem [#allocation1], 1
    %v10 = vld [vmem:[%s9] sm:$0x1]
    %11 = vrot.lane.b32.xlu0 %v10, 32
    %v12 = vpop.permute.xlu0 %11
    %vm13 = vcmask 523520
    %14 = vst.msk [vmem:[#allocation0] sm:$0x1] %vm13, %v12
    %s16 = ssub.s32 2, 1
    %v17 = vld [vmem:[#allocation0] sm:%s16]
    %s19 = ssub.s32 2, 1
    %20 = vst [vmem:[%s1] sm:%s19] %v17

// kernel: encoder_x_forward.1
$region0: #{encoder_x_forward.1}
  #allocation0 [shape = 'u32[]', space=smem, size = 0x4, offset = 0x4, fixed_abs, tag = 'smem constant byte address 0x4 - core index']
  #allocation1 [shape = 'u32[72,128]{1,0:T(1,128)}', space=vmem, size = 0x9000, scoped, tag = 'internal scratch']
  #allocation2 [shape = 'bf16[68,136]{1,0:T(8,128)(2,1)}', space=vmem, size = 0x9000, scoped, tag = 'scratch operand']
  #allocation3 [shape = 'bf16[36,144]{1,0:T(8,128)(2,1)}', space=vmem, size = 0x5000, scoped, tag = 'scratch operand']
  #allocation4 [shape = 'bf16[20,160]{1,0:T(8,128)(2,1)}', space=vmem, size = 0x3000, scoped, tag = 'scratch operand']
  #allocation5 [shape = 'bf16[12,192]{1,0:T(8,128)(2,1)}', space=vmem, size = 0x2000, scoped, tag = 'scratch operand']
  %s0 = inlined_call_operand.vmem [shape: bf16[132,198], index: 0, kind: input, shape index: {}]
  %s1 = inlined_call_operand.vmem [shape: bf16[256,132], index: 1, kind: input, shape index: {}]
  %s2 = inlined_call_operand.vmem [shape: bf16[4,198,128], index: 2, kind: input, shape index: {}]
  %s3 = inlined_call_operand.vmem [shape: f32[1,128], index: 3, kind: input, shape index: {}]
  %s4 = inlined_call_operand.vmem [shape: bf16[128,68], index: 4, kind: input, shape index: {}]
  %s5 = inlined_call_operand.vmem [shape: bf16[4,136,128], index: 5, kind: input, shape index: {}]
  %s6 = inlined_call_operand.vmem [shape: f32[1,128], index: 6, kind: input, shape index: {}]
  %s7 = inlined_call_operand.vmem [shape: bf16[64,36], index: 7, kind: input, shape index: {}]
  %s8 = inlined_call_operand.vmem [shape: bf16[4,144,128], index: 8, kind: input, shape index: {}]
  %s9 = inlined_call_operand.vmem [shape: f32[1,128], index: 9, kind: input, shape index: {}]
  %s10 = inlined_call_operand.vmem [shape: bf16[32,20], index: 10, kind: input, shape index: {}]
  %s11 = inlined_call_operand.vmem [shape: bf16[4,160,128], index: 11, kind: input, shape index: {}]
  %s12 = inlined_call_operand.vmem [shape: f32[1,128], index: 12, kind: input, shape index: {}]
  %s13 = inlined_call_operand.vmem [shape: bf16[16,12], index: 13, kind: input, shape index: {}]
  %s14 = inlined_call_operand.vmem [shape: bf16[4,192,64], index: 14, kind: input, shape index: {}]
  %s15 = inlined_call_operand.vmem [shape: f32[1,64], index: 15, kind: input, shape index: {}]
  %s16 = inlined_call_operand.vmem [shape: bf16[2,64,16], index: 16, kind: input, shape index: {}]
  %s17 = inlined_call_operand.vmem [shape: f32[1,16], index: 17, kind: input, shape index: {}]
  %s18 = inlined_call_operand.vmem [shape: f32[2,16], index: 18, kind: output, shape index: {}]
  %s19 = sld [smem:[#allocation0]]
  $region82: #{encoder_x_forward.1} parent=0
    _
  %s21 = ssub.s32 1, %s19
  %s22 = scalar_select 0, %s21, %s19
  // Predicated region
  $region2: #{encoder_x_forward.1} parent=0 // pred_check
    _
  $region3: #{encoder_x_forward.1} parent=0 // pred_check_branch
    %24 = sbr.rel (0) target = $region5
  $region4: #{encoder_x_forward.1} parent=0 // pred_region
    _
  $region5: #{encoder_x_forward.1} parent=0 // pred_fallthru
    _
  // Predicated region
  $region6: #{encoder_x_forward.1} parent=0 // pred_check
    _
  $region7: #{encoder_x_forward.1} parent=0 // pred_check_branch
    %26 = sbr.rel (0) target = $region9
  $region8: #{encoder_x_forward.1} parent=0 // pred_region
    _
  $region9: #{encoder_x_forward.1} parent=0 // pred_fallthru
    _
  // Predicated region
  $region10: #{encoder_x_forward.1} parent=0 // pred_check
    _
  $region11: #{encoder_x_forward.1} parent=0 // pred_check_branch
    %28 = sbr.rel (0) target = $region13
  $region12: #{encoder_x_forward.1} parent=0 // pred_region
    _
  $region13: #{encoder_x_forward.1} parent=0 // pred_fallthru
    _
  // Predicated region
  $region14: #{encoder_x_forward.1} parent=0 // pred_check
    _
  $region15: #{encoder_x_forward.1} parent=0 // pred_check_branch
    %30 = sbr.rel (0) target = $region17
  $region16: #{encoder_x_forward.1} parent=0 // pred_region
    _
  $region17: #{encoder_x_forward.1} parent=0 // pred_fallthru
    _
  // Predicated region
  $region18: #{encoder_x_forward.1} parent=0 // pred_check
    _
  $region19: #{encoder_x_forward.1} parent=0 // pred_check_branch
    %32 = sbr.rel (0) target = $region21
  $region20: #{encoder_x_forward.1} parent=0 // pred_region
    _
  $region21: #{encoder_x_forward.1} parent=0 // pred_fallthru
    _
  // Predicated region
  $region22: #{encoder_x_forward.1} parent=0 // pred_check
    _
  $region23: #{encoder_x_forward.1} parent=0 // pred_check_branch
    %34 = sbr.rel (0) target = $region25
  $region24: #{encoder_x_forward.1} parent=0 // pred_region
    _
  $region25: #{encoder_x_forward.1} parent=0 // pred_fallthru
    _
  // Predicated region
  $region26: #{encoder_x_forward.1} parent=0 // pred_check
    _
  $region27: #{encoder_x_forward.1} parent=0 // pred_check_branch
    %36 = sbr.rel (0) target = $region29
  $region28: #{encoder_x_forward.1} parent=0 // pred_region
    _
  $region29: #{encoder_x_forward.1} parent=0 // pred_fallthru
    _
  // Predicated region
  $region30: #{encoder_x_forward.1} parent=0 // pred_check
    _
  $region31: #{encoder_x_forward.1} parent=0 // pred_check_branch
    %38 = sbr.rel (0) target = $region33
  $region32: #{encoder_x_forward.1} parent=0 // pred_region
    _
  $region33: #{encoder_x_forward.1} parent=0 // pred_fallthru
    _
  // Predicated region
  $region34: #{encoder_x_forward.1} parent=0 // pred_check
    _
  $region35: #{encoder_x_forward.1} parent=0 // pred_check_branch
    %40 = sbr.rel (0) target = $region37
  $region36: #{encoder_x_forward.1} parent=0 // pred_region
    _
  $region37: #{encoder_x_forward.1} parent=0 // pred_fallthru
    _
  // Predicated region
  $region38: #{encoder_x_forward.1} parent=0 // pred_check
    _
  $region39: #{encoder_x_forward.1} parent=0 // pred_check_branch
    %42 = sbr.rel (0) target = $region41
  $region40: #{encoder_x_forward.1} parent=0 // pred_region
    _
  $region41: #{encoder_x_forward.1} parent=0 // pred_fallthru
    _
  // Predicated region
  $region42: #{encoder_x_forward.1} parent=0 // pred_check
    _
  $region43: #{encoder_x_forward.1} parent=0 // pred_check_branch
    %44 = sbr.rel (0) target = $region45
  $region44: #{encoder_x_forward.1} parent=0 // pred_region
    _
  $region45: #{encoder_x_forward.1} parent=0 // pred_fallthru
    _
  // Predicated region
  $region46: #{encoder_x_forward.1} parent=0 // pred_check
    _
  $region47: #{encoder_x_forward.1} parent=0 // pred_check_branch
    %46 = sbr.rel (0) target = $region49
  $region48: #{encoder_x_forward.1} parent=0 // pred_region
    _
  $region49: #{encoder_x_forward.1} parent=0 // pred_fallthru
    _
  // Predicated region
  $region50: #{encoder_x_forward.1} parent=0 // pred_check
    _
  $region51: #{encoder_x_forward.1} parent=0 // pred_check_branch
    %48 = sbr.rel (0) target = $region53
  $region52: #{encoder_x_forward.1} parent=0 // pred_region
    _
  $region53: #{encoder_x_forward.1} parent=0 // pred_fallthru
    _
  // Predicated region
  $region54: #{encoder_x_forward.1} parent=0 // pred_check
    _
  $region55: #{encoder_x_forward.1} parent=0 // pred_check_branch
    %50 = sbr.rel (0) target = $region57
  $region56: #{encoder_x_forward.1} parent=0 // pred_region
    _
  $region57: #{encoder_x_forward.1} parent=0 // pred_fallthru
    _
  // Predicated region
  $region58: #{encoder_x_forward.1} parent=0 // pred_check
    _
  $region59: #{encoder_x_forward.1} parent=0 // pred_check_branch
    %52 = sbr.rel (0) target = $region61
  $region60: #{encoder_x_forward.1} parent=0 // pred_region
    _
  $region61: #{encoder_x_forward.1} parent=0 // pred_fallthru
    _
  // Predicated region
  $region62: #{encoder_x_forward.1} parent=0 // pred_check
    _
  $region63: #{encoder_x_forward.1} parent=0 // pred_check_branch
    %54 = sbr.rel (0) target = $region65
  $region64: #{encoder_x_forward.1} parent=0 // pred_region
    _
  $region65: #{encoder_x_forward.1} parent=0 // pred_fallthru
    _
  // Predicated region
  $region66: #{encoder_x_forward.1} parent=0 // pred_check
    _
  $region67: #{encoder_x_forward.1} parent=0 // pred_check_branch
    %56 = sbr.rel (0) target = $region69
  $region68: #{encoder_x_forward.1} parent=0 // pred_region
    _
  $region69: #{encoder_x_forward.1} parent=0 // pred_fallthru
    _
  // Predicated region
  $region70: #{encoder_x_forward.1} parent=0 // pred_check
    _
  $region71: #{encoder_x_forward.1} parent=0 // pred_check_branch
    %58 = sbr.rel (0) target = $region73
  $region72: #{encoder_x_forward.1} parent=0 // pred_region
    _
  $region73: #{encoder_x_forward.1} parent=0 // pred_fallthru
    _
  %v60 = vld [vmem:[%s0] sm:$0xff]
  %v61 = vld [vmem:[%s0 + $0x8] sm:$0xff]
  %v62 = vld [vmem:[%s0 + $0x10] sm:$0xff]
  %v63 = vld [vmem:[%s0 + $0x18] sm:$0xff]
  %v64 = vld [vmem:[%s0 + $0x20] sm:$0xff]
  %v65 = vld [vmem:[%s0 + $0x28] sm:$0xff]
  %v66 = vld [vmem:[%s0 + $0x30] sm:$0xff]
  %v67 = vld [vmem:[%s0 + $0x38] sm:$0xff]
  %v68 = vld [vmem:[%s0 + $0x40] sm:$0xff]
  %v69 = vld [vmem:[%s0 + $0x48] sm:$0xff]
  %v70 = vld [vmem:[%s0 + $0x50] sm:$0xff]
  %v71 = vld [vmem:[%s0 + $0x58] sm:$0xff]
  %v72 = vld [vmem:[%s0 + $0x60] sm:$0xff]
  %v73 = vld [vmem:[%s0 + $0x68] sm:$0xff]
  %v74 = vld [vmem:[%s0 + $0x70] sm:$0xff]
  %v75 = vld [vmem:[%s0 + $0x78] sm:$0xff]
  %v76 = vld [vmem:[%s0 + $0x80] sm:$0x33]
  %v77 = vld [vmem:[%s1] sm:$0xff]
  %v78 = vld [vmem:[%s1 + $0x8] sm:$0xff]
  %v79 = vld [vmem:[%s1 + $0x10] sm:$0xff]
  %v80 = vld [vmem:[%s1 + $0x18] sm:$0xff]
  %v81 = vld [vmem:[%s1 + $0x20] sm:$0xff]
  %v82 = vld [vmem:[%s1 + $0x28] sm:$0xff]
  %v83 = vld [vmem:[%s1 + $0x30] sm:$0xff]
  %v84 = vld [vmem:[%s1 + $0x38] sm:$0xff]
  %v85 = vld [vmem:[%s1 + $0x40] sm:$0xff]
  %v86 = vld [vmem:[%s1 + $0x48] sm:$0xff]
  %v87 = vld [vmem:[%s1 + $0x50] sm:$0xff]
  %v88 = vld [vmem:[%s1 + $0x58] sm:$0xff]
  %v89 = vld [vmem:[%s1 + $0x60] sm:$0xff]
  %v90 = vld [vmem:[%s1 + $0x68] sm:$0xff]
  %v91 = vld [vmem:[%s1 + $0x70] sm:$0xff]
  %v92 = vld [vmem:[%s1 + $0x78] sm:$0xff]
  %v93 = vld [vmem:[%s1 + $0x80] sm:$0xff]
  %v94 = vld [vmem:[%s1 + $0x88] sm:$0xff]
  %v95 = vld [vmem:[%s1 + $0x90] sm:$0xff]
  %v96 = vld [vmem:[%s1 + $0x98] sm:$0xff]
  %v97 = vld [vmem:[%s1 + $0xa0] sm:$0xff]
  %v98 = vld [vmem:[%s1 + $0xa8] sm:$0xff]
  %v99 = vld [vmem:[%s1 + $0xb0] sm:$0xff]
  %v100 = vld [vmem:[%s1 + $0xb8] sm:$0xff]
  %v101 = vld [vmem:[%s1 + $0xc0] sm:$0xff]
  %v102 = vld [vmem:[%s1 + $0xc8] sm:$0xff]
  %v103 = vld [vmem:[%s1 + $0xd0] sm:$0xff]
  %v104 = vld [vmem:[%s1 + $0xd8] sm:$0xff]
  %v105 = vld [vmem:[%s1 + $0xe0] sm:$0xff]
  %v106 = vld [vmem:[%s1 + $0xe8] sm:$0xff]
  %v107 = vld [vmem:[%s1 + $0xf0] sm:$0xff]
  %v108 = vld [vmem:[%s1 + $0xf8] sm:$0xff]
  %v141 = vunpack.c.l.b16 %v77
  %v142 = vunpack.c.h.b16 %v77
  %v143 = vunpack.c.l.b16 %v78
  %v144 = vunpack.c.h.b16 %v78
  %v145 = vunpack.c.l.b16 %v79
  %v146 = vunpack.c.h.b16 %v79
  %v147 = vunpack.c.l.b16 %v80
  %v148 = vunpack.c.h.b16 %v80
  %v149 = vunpack.c.l.b16 %v81
  %v150 = vunpack.c.h.b16 %v81
  %v151 = vunpack.c.l.b16 %v82
  %v152 = vunpack.c.h.b16 %v82
  %v153 = vunpack.c.l.b16 %v83
  %v154 = vunpack.c.h.b16 %v83
  %v155 = vunpack.c.l.b16 %v84
  %v156 = vunpack.c.h.b16 %v84
  %v157 = vunpack.c.l.b16 %v85
  %v158 = vunpack.c.h.b16 %v85
  %v159 = vunpack.c.l.b16 %v86
  %v160 = vunpack.c.h.b16 %v86
  %v161 = vunpack.c.l.b16 %v87
  %v162 = vunpack.c.h.b16 %v87
  %v163 = vunpack.c.l.b16 %v88
  %v164 = vunpack.c.h.b16 %v88
  %v165 = vunpack.c.l.b16 %v89
  %v166 = vunpack.c.h.b16 %v89
  %v167 = vunpack.c.l.b16 %v90
  %v168 = vunpack.c.h.b16 %v90
  %v169 = vunpack.c.l.b16 %v91
  %v170 = vunpack.c.h.b16 %v91
  %v171 = vunpack.c.l.b16 %v92
  %v172 = vunpack.c.h.b16 %v92
  %v173 = vunpack.c.l.b16 %v93
  %v174 = vunpack.c.h.b16 %v93
  %v175 = vunpack.c.l.b16 %v94
  %v176 = vunpack.c.h.b16 %v94
  %v177 = vunpack.c.l.b16 %v95
  %v178 = vunpack.c.h.b16 %v95
  %v179 = vunpack.c.l.b16 %v96
  %v180 = vunpack.c.h.b16 %v96
  %v181 = vunpack.c.l.b16 %v97
  %v182 = vunpack.c.h.b16 %v97
  %v183 = vunpack.c.l.b16 %v98
  %v184 = vunpack.c.h.b16 %v98
  %v185 = vunpack.c.l.b16 %v99
  %v186 = vunpack.c.h.b16 %v99
  %v187 = vunpack.c.l.b16 %v100
  %v188 = vunpack.c.h.b16 %v100
  %v189 = vunpack.c.l.b16 %v101
  %v190 = vunpack.c.h.b16 %v101
  %v191 = vunpack.c.l.b16 %v102
  %v192 = vunpack.c.h.b16 %v102
  %v193 = vunpack.c.l.b16 %v103
  %v194 = vunpack.c.h.b16 %v103
  %v195 = vunpack.c.l.b16 %v104
  %v196 = vunpack.c.h.b16 %v104
  %v197 = vunpack.c.l.b16 %v105
  %v198 = vunpack.c.h.b16 %v105
  %v199 = vunpack.c.l.b16 %v106
  %v200 = vunpack.c.h.b16 %v106
  %v201 = vunpack.c.l.b16 %v107
  %v202 = vunpack.c.h.b16 %v107
  %v203 = vunpack.c.l.b16 %v108
  %v204 = vunpack.c.h.b16 %v108
  %v205 = vpack.c.b16 %v143, %v141
  %v206 = vpack.c.b16 %v144, %v142
  %v207 = vpack.c.b16 %v147, %v145
  %v208 = vpack.c.b16 %v148, %v146
  %v209 = vpack.c.b16 %v151, %v149
  %v210 = vpack.c.b16 %v152, %v150
  %v211 = vpack.c.b16 %v155, %v153
  %v212 = vpack.c.b16 %v156, %v154
  %v213 = vpack.c.b16 %v159, %v157
  %v214 = vpack.c.b16 %v160, %v158
  %v215 = vpack.c.b16 %v163, %v161
  %v216 = vpack.c.b16 %v164, %v162
  %v217 = vpack.c.b16 %v167, %v165
  %v218 = vpack.c.b16 %v168, %v166
  %v219 = vpack.c.b16 %v171, %v169
  %v220 = vpack.c.b16 %v172, %v170
  %v221 = vpack.c.b16 %v175, %v173
  %v222 = vpack.c.b16 %v176, %v174
  %v223 = vpack.c.b16 %v179, %v177
  %v224 = vpack.c.b16 %v180, %v178
  %v225 = vpack.c.b16 %v183, %v181
  %v226 = vpack.c.b16 %v184, %v182
  %v227 = vpack.c.b16 %v187, %v185
  %v228 = vpack.c.b16 %v188, %v186
  %v229 = vpack.c.b16 %v191, %v189
  %v230 = vpack.c.b16 %v192, %v190
  %v231 = vpack.c.b16 %v195, %v193
  %v232 = vpack.c.b16 %v196, %v194
  %v233 = vpack.c.b16 %v199, %v197
  %v234 = vpack.c.b16 %v200, %v198
  %v235 = vpack.c.b16 %v203, %v201
  %v236 = vpack.c.b16 %v204, %v202
  %v270 = vunpack.c.l.b16 %v60
  %v271 = vunpack.c.h.b16 %v60
  %v272 = vunpack.c.l.b16 %v61
  %v273 = vunpack.c.h.b16 %v61
  %v274 = vunpack.c.l.b16 %v62
  %v275 = vunpack.c.h.b16 %v62
  %v276 = vunpack.c.l.b16 %v63
  %v277 = vunpack.c.h.b16 %v63
  %v278 = vunpack.c.l.b16 %v64
  %v279 = vunpack.c.h.b16 %v64
  %v280 = vunpack.c.l.b16 %v65
  %v281 = vunpack.c.h.b16 %v65
  %v282 = vunpack.c.l.b16 %v66
  %v283 = vunpack.c.h.b16 %v66
  %v284 = vunpack.c.l.b16 %v67
  %v285 = vunpack.c.h.b16 %v67
  %v286 = vunpack.c.l.b16 %v68
  %v287 = vunpack.c.h.b16 %v68
  %v288 = vunpack.c.l.b16 %v69
  %v289 = vunpack.c.h.b16 %v69
  %v290 = vunpack.c.l.b16 %v70
  %v291 = vunpack.c.h.b16 %v70
  %v292 = vunpack.c.l.b16 %v71
  %v293 = vunpack.c.h.b16 %v71
  %v294 = vunpack.c.l.b16 %v72
  %v295 = vunpack.c.h.b16 %v72
  %v296 = vunpack.c.l.b16 %v73
  %v297 = vunpack.c.h.b16 %v73
  %v298 = vunpack.c.l.b16 %v74
  %v299 = vunpack.c.h.b16 %v74
  %v300 = vunpack.c.l.b16 %v75
  %v301 = vunpack.c.h.b16 %v75
  %v302 = vunpack.c.l.b16 %v76
  %v303 = vunpack.c.h.b16 %v76
  %v304 = vpack.c.b16 %v272, %v270
  %v305 = vpack.c.b16 %v273, %v271
  %v306 = vpack.c.b16 %v276, %v274
  %v307 = vpack.c.b16 %v277, %v275
  %v308 = vpack.c.b16 %v280, %v278
  %v309 = vpack.c.b16 %v281, %v279
  %v310 = vpack.c.b16 %v284, %v282
  %v311 = vpack.c.b16 %v285, %v283
  %v312 = vpack.c.b16 %v288, %v286
  %v313 = vpack.c.b16 %v289, %v287
  %v314 = vpack.c.b16 %v292, %v290
  %v315 = vpack.c.b16 %v293, %v291
  %v316 = vpack.c.b16 %v296, %v294
  %v317 = vpack.c.b16 %v297, %v295
  %v318 = vpack.c.b16 %v300, %v298
  %v319 = vpack.c.b16 %v301, %v299
  %v320 = vpack.c.b16 %v302, %v302
  %v321 = vpack.c.b16 %v303, %v303
  %vm338 = vcmask 31744
  %v340 = vsel %vm338, %v206, 0
  %v343 = vsel %vm338, %v208, 0
  %v346 = vsel %vm338, %v210, 0
  %v349 = vsel %vm338, %v212, 0
  %v352 = vsel %vm338, %v214, 0
  %v355 = vsel %vm338, %v216, 0
  %v358 = vsel %vm338, %v218, 0
  %v361 = vsel %vm338, %v220, 0
  %v364 = vsel %vm338, %v222, 0
  %v367 = vsel %vm338, %v224, 0
  %v370 = vsel %vm338, %v226, 0
  %v373 = vsel %vm338, %v228, 0
  %v376 = vsel %vm338, %v230, 0
  %v379 = vsel %vm338, %v232, 0
  %v382 = vsel %vm338, %v234, 0
  %v385 = vsel %vm338, %v236, 0
  %vm387 = vcmask 1041408
  %v389 = vsel %vm387, %v320, 0
  %v392 = vsel %vm387, %v321, 0
  %394 = vmatpush.bf16.msra.mxu0 %v318
  %395 = vmatpush.bf16.msra.mxu0 %v316
  %396 = vmatpush.bf16.msra.mxu0 %v314
  %397 = vmatpush.bf16.msra.mxu0 %v312
  %398 = vmatpush.bf16.msra.mxu0 %v310
  %399 = vmatpush.bf16.msra.mxu0 %v308
  %400 = vmatpush.bf16.msra.mxu0 %v306
  %401 = vmatpush.bf16.msra.mxu0 %v304
  %402 = vmatmul.bf16.gmra.mxu0 %v205
  %v403 = vpop.f32.mrf.mxu0
  %v404 = vadd.f32 0.0, %v403
  %v405 = vpop.f32.mrf.mxu0
  %v406 = vadd.f32 0.0, %v405
  %407 = vmatmul.bf16.gmra.mxu0 %v207
  %v408 = vpop.f32.mrf.mxu0
  %v409 = vadd.f32 0.0, %v408
  %v410 = vpop.f32.mrf.mxu0
  %v411 = vadd.f32 0.0, %v410
  %412 = vmatmul.bf16.gmra.mxu0 %v209
  %v413 = vpop.f32.mrf.mxu0
  %v414 = vadd.f32 0.0, %v413
  %v415 = vpop.f32.mrf.mxu0
  %v416 = vadd.f32 0.0, %v415
  %417 = vmatmul.bf16.gmra.mxu0 %v211
  %v418 = vpop.f32.mrf.mxu0
  %v419 = vadd.f32 0.0, %v418
  %v420 = vpop.f32.mrf.mxu0
  %v421 = vadd.f32 0.0, %v420
  %422 = vmatmul.bf16.gmra.mxu0 %v213
  %v423 = vpop.f32.mrf.mxu0
  %v424 = vadd.f32 0.0, %v423
  %v425 = vpop.f32.mrf.mxu0
  %v426 = vadd.f32 0.0, %v425
  %427 = vmatmul.bf16.gmra.mxu0 %v215
  %v428 = vpop.f32.mrf.mxu0
  %v429 = vadd.f32 0.0, %v428
  %v430 = vpop.f32.mrf.mxu0
  %v431 = vadd.f32 0.0, %v430
  %432 = vmatmul.bf16.gmra.mxu0 %v217
  %v433 = vpop.f32.mrf.mxu0
  %v434 = vadd.f32 0.0, %v433
  %v435 = vpop.f32.mrf.mxu0
  %v436 = vadd.f32 0.0, %v435
  %437 = vmatmul.bf16.gmra.mxu0 %v219
  %v438 = vpop.f32.mrf.mxu0
  %v439 = vadd.f32 0.0, %v438
  %v440 = vpop.f32.mrf.mxu0
  %v441 = vadd.f32 0.0, %v440
  %442 = vmatmul.bf16.gmra.mxu0 %v221
  %v443 = vpop.f32.mrf.mxu0
  %v444 = vadd.f32 0.0, %v443
  %v445 = vpop.f32.mrf.mxu0
  %v446 = vadd.f32 0.0, %v445
  %447 = vmatmul.bf16.gmra.mxu0 %v223
  %v448 = vpop.f32.mrf.mxu0
  %v449 = vadd.f32 0.0, %v448
  %v450 = vpop.f32.mrf.mxu0
  %v451 = vadd.f32 0.0, %v450
  %452 = vmatmul.bf16.gmra.mxu0 %v225
  %v453 = vpop.f32.mrf.mxu0
  %v454 = vadd.f32 0.0, %v453
  %v455 = vpop.f32.mrf.mxu0
  %v456 = vadd.f32 0.0, %v455
  %457 = vmatmul.bf16.gmra.mxu0 %v227
  %v458 = vpop.f32.mrf.mxu0
  %v459 = vadd.f32 0.0, %v458
  %v460 = vpop.f32.mrf.mxu0
  %v461 = vadd.f32 0.0, %v460
  %462 = vmatmul.bf16.gmra.mxu0 %v229
  %v463 = vpop.f32.mrf.mxu0
  %v464 = vadd.f32 0.0, %v463
  %v465 = vpop.f32.mrf.mxu0
  %v466 = vadd.f32 0.0, %v465
  %467 = vmatmul.bf16.gmra.mxu0 %v231
  %v468 = vpop.f32.mrf.mxu0
  %v469 = vadd.f32 0.0, %v468
  %v470 = vpop.f32.mrf.mxu0
  %v471 = vadd.f32 0.0, %v470
  %472 = vmatmul.bf16.gmra.mxu0 %v233
  %v473 = vpop.f32.mrf.mxu0
  %v474 = vadd.f32 0.0, %v473
  %v475 = vpop.f32.mrf.mxu0
  %v476 = vadd.f32 0.0, %v475
  %477 = vmatmul.bf16.gmra.mxu0 %v235
  %v478 = vpop.f32.mrf.mxu0
  %v479 = vadd.f32 0.0, %v478
  %v480 = vpop.f32.mrf.mxu0
  %v481 = vadd.f32 0.0, %v480
  %482 = vdwg.mxu0
  %483 = vmatpush.bf16.msra.mxu0 0
  %484 = vmatpush.bf16.msra.mxu0 0
  %485 = vmatpush.bf16.msra.mxu0 0
  %486 = vmatpush.bf16.msra.mxu0 0
  %487 = vmatpush.bf16.msra.mxu0 0
  %488 = vmatpush.bf16.msra.mxu0 0
  %489 = vmatpush.bf16.msra.mxu0 0
  %490 = vmatpush.bf16.msra.mxu0 %v389
  %491 = vmatmul.bf16.gmra.mxu0 %v340
  %v492 = vpop.f32.mrf.mxu0
  %v493 = vadd.f32 %v404, %v492
  %v494 = vpop.f32.mrf.mxu0
  %v495 = vadd.f32 %v406, %v494
  %496 = vmatmul.bf16.gmra.mxu0 %v343
  %v497 = vpop.f32.mrf.mxu0
  %v498 = vadd.f32 %v409, %v497
  %v499 = vpop.f32.mrf.mxu0
  %v500 = vadd.f32 %v411, %v499
  %501 = vmatmul.bf16.gmra.mxu0 %v346
  %v502 = vpop.f32.mrf.mxu0
  %v503 = vadd.f32 %v414, %v502
  %v504 = vpop.f32.mrf.mxu0
  %v505 = vadd.f32 %v416, %v504
  %506 = vmatmul.bf16.gmra.mxu0 %v349
  %v507 = vpop.f32.mrf.mxu0
  %v508 = vadd.f32 %v419, %v507
  %v509 = vpop.f32.mrf.mxu0
  %v510 = vadd.f32 %v421, %v509
  %511 = vmatmul.bf16.gmra.mxu0 %v352
  %v512 = vpop.f32.mrf.mxu0
  %v513 = vadd.f32 %v424, %v512
  %v514 = vpop.f32.mrf.mxu0
  %v515 = vadd.f32 %v426, %v514
  %516 = vmatmul.bf16.gmra.mxu0 %v355
  %v517 = vpop.f32.mrf.mxu0
  %v518 = vadd.f32 %v429, %v517
  %v519 = vpop.f32.mrf.mxu0
  %v520 = vadd.f32 %v431, %v519
  %521 = vmatmul.bf16.gmra.mxu0 %v358
  %v522 = vpop.f32.mrf.mxu0
  %v523 = vadd.f32 %v434, %v522
  %v524 = vpop.f32.mrf.mxu0
  %v525 = vadd.f32 %v436, %v524
  %526 = vmatmul.bf16.gmra.mxu0 %v361
  %v527 = vpop.f32.mrf.mxu0
  %v528 = vadd.f32 %v439, %v527
  %v529 = vpop.f32.mrf.mxu0
  %v530 = vadd.f32 %v441, %v529
  %531 = vmatmul.bf16.gmra.mxu0 %v364
  %v532 = vpop.f32.mrf.mxu0
  %v533 = vadd.f32 %v444, %v532
  %v534 = vpop.f32.mrf.mxu0
  %v535 = vadd.f32 %v446, %v534
  %536 = vmatmul.bf16.gmra.mxu0 %v367
  %v537 = vpop.f32.mrf.mxu0
  %v538 = vadd.f32 %v449, %v537
  %v539 = vpop.f32.mrf.mxu0
  %v540 = vadd.f32 %v451, %v539
  %541 = vmatmul.bf16.gmra.mxu0 %v370
  %v542 = vpop.f32.mrf.mxu0
  %v543 = vadd.f32 %v454, %v542
  %v544 = vpop.f32.mrf.mxu0
  %v545 = vadd.f32 %v456, %v544
  %546 = vmatmul.bf16.gmra.mxu0 %v373
  %v547 = vpop.f32.mrf.mxu0
  %v548 = vadd.f32 %v459, %v547
  %v549 = vpop.f32.mrf.mxu0
  %v550 = vadd.f32 %v461, %v549
  %551 = vmatmul.bf16.gmra.mxu0 %v376
  %v552 = vpop.f32.mrf.mxu0
  %v553 = vadd.f32 %v464, %v552
  %v554 = vpop.f32.mrf.mxu0
  %v555 = vadd.f32 %v466, %v554
  %556 = vmatmul.bf16.gmra.mxu0 %v379
  %v557 = vpop.f32.mrf.mxu0
  %v558 = vadd.f32 %v469, %v557
  %v559 = vpop.f32.mrf.mxu0
  %v560 = vadd.f32 %v471, %v559
  %561 = vmatmul.bf16.gmra.mxu0 %v382
  %v562 = vpop.f32.mrf.mxu0
  %v563 = vadd.f32 %v474, %v562
  %v564 = vpop.f32.mrf.mxu0
  %v565 = vadd.f32 %v476, %v564
  %566 = vmatmul.bf16.gmra.mxu0 %v385
  %v567 = vpop.f32.mrf.mxu0
  %v568 = vadd.f32 %v479, %v567
  %v569 = vpop.f32.mrf.mxu0
  %v570 = vadd.f32 %v481, %v569
  %571 = vdwg.mxu0
  %572 = vmatpush.bf16.msra.mxu0 %v319
  %573 = vmatpush.bf16.msra.mxu0 %v317
  %574 = vmatpush.bf16.msra.mxu0 %v315
  %575 = vmatpush.bf16.msra.mxu0 %v313
  %576 = vmatpush.bf16.msra.mxu0 %v311
  %577 = vmatpush.bf16.msra.mxu0 %v309
  %578 = vmatpush.bf16.msra.mxu0 %v307
  %579 = vmatpush.bf16.msra.mxu0 %v305
  %580 = vmatmul.bf16.gmra.mxu0 %v205
  %v581 = vpop.f32.mrf.mxu0
  %v582 = vadd.f32 0.0, %v581
  %v583 = vpop.f32.mrf.mxu0
  %v584 = vadd.f32 0.0, %v583
  %585 = vmatmul.bf16.gmra.mxu0 %v207
  %v586 = vpop.f32.mrf.mxu0
  %v587 = vadd.f32 0.0, %v586
  %v588 = vpop.f32.mrf.mxu0
  %v589 = vadd.f32 0.0, %v588
  %590 = vmatmul.bf16.gmra.mxu0 %v209
  %v591 = vpop.f32.mrf.mxu0
  %v592 = vadd.f32 0.0, %v591
  %v593 = vpop.f32.mrf.mxu0
  %v594 = vadd.f32 0.0, %v593
  %595 = vmatmul.bf16.gmra.mxu0 %v211
  %v596 = vpop.f32.mrf.mxu0
  %v597 = vadd.f32 0.0, %v596
  %v598 = vpop.f32.mrf.mxu0
  %v599 = vadd.f32 0.0, %v598
  %600 = vmatmul.bf16.gmra.mxu0 %v213
  %v601 = vpop.f32.mrf.mxu0
  %v602 = vadd.f32 0.0, %v601
  %v603 = vpop.f32.mrf.mxu0
  %v604 = vadd.f32 0.0, %v603
  %605 = vmatmul.bf16.gmra.mxu0 %v215
  %v606 = vpop.f32.mrf.mxu0
  %v607 = vadd.f32 0.0, %v606
  %v608 = vpop.f32.mrf.mxu0
  %v609 = vadd.f32 0.0, %v608
  %610 = vmatmul.bf16.gmra.mxu0 %v217
  %v611 = vpop.f32.mrf.mxu0
  %v612 = vadd.f32 0.0, %v611
  %v613 = vpop.f32.mrf.mxu0
  %v614 = vadd.f32 0.0, %v613
  %615 = vmatmul.bf16.gmra.mxu0 %v219
  %v616 = vpop.f32.mrf.mxu0
  %v617 = vadd.f32 0.0, %v616
  %v618 = vpop.f32.mrf.mxu0
  %v619 = vadd.f32 0.0, %v618
  %620 = vmatmul.bf16.gmra.mxu0 %v221
  %v621 = vpop.f32.mrf.mxu0
  %v622 = vadd.f32 0.0, %v621
  %v623 = vpop.f32.mrf.mxu0
  %v624 = vadd.f32 0.0, %v623
  %625 = vmatmul.bf16.gmra.mxu0 %v223
  %v626 = vpop.f32.mrf.mxu0
  %v627 = vadd.f32 0.0, %v626
  %v628 = vpop.f32.mrf.mxu0
  %v629 = vadd.f32 0.0, %v628
  %630 = vmatmul.bf16.gmra.mxu0 %v225
  %v631 = vpop.f32.mrf.mxu0
  %v632 = vadd.f32 0.0, %v631
  %v633 = vpop.f32.mrf.mxu0
  %v634 = vadd.f32 0.0, %v633
  %635 = vmatmul.bf16.gmra.mxu0 %v227
  %v636 = vpop.f32.mrf.mxu0
  %v637 = vadd.f32 0.0, %v636
  %v638 = vpop.f32.mrf.mxu0
  %v639 = vadd.f32 0.0, %v638
  %640 = vmatmul.bf16.gmra.mxu0 %v229
  %v641 = vpop.f32.mrf.mxu0
  %v642 = vadd.f32 0.0, %v641
  %v643 = vpop.f32.mrf.mxu0
  %v644 = vadd.f32 0.0, %v643
  %645 = vmatmul.bf16.gmra.mxu0 %v231
  %v646 = vpop.f32.mrf.mxu0
  %v647 = vadd.f32 0.0, %v646
  %v648 = vpop.f32.mrf.mxu0
  %v649 = vadd.f32 0.0, %v648
  %650 = vmatmul.bf16.gmra.mxu0 %v233
  %v651 = vpop.f32.mrf.mxu0
  %v652 = vadd.f32 0.0, %v651
  %v653 = vpop.f32.mrf.mxu0
  %v654 = vadd.f32 0.0, %v653
  %655 = vmatmul.bf16.gmra.mxu0 %v235
  %v656 = vpop.f32.mrf.mxu0
  %v657 = vadd.f32 0.0, %v656
  %v658 = vpop.f32.mrf.mxu0
  %v659 = vadd.f32 0.0, %v658
  %660 = vdwg.mxu0
  %661 = vmatpush.bf16.msra.mxu0 0
  %662 = vmatpush.bf16.msra.mxu0 0
  %663 = vmatpush.bf16.msra.mxu0 0
  %664 = vmatpush.bf16.msra.mxu0 0
  %665 = vmatpush.bf16.msra.mxu0 0
  %666 = vmatpush.bf16.msra.mxu0 0
  %667 = vmatpush.bf16.msra.mxu0 0
  %668 = vmatpush.bf16.msra.mxu0 %v392
  %669 = vmatmul.bf16.gmra.mxu0 %v340
  %v670 = vpop.f32.mrf.mxu0
  %v671 = vadd.f32 %v582, %v670
  %v672 = vpop.f32.mrf.mxu0
  %v673 = vadd.f32 %v584, %v672
  %674 = vmatmul.bf16.gmra.mxu0 %v343
  %v675 = vpop.f32.mrf.mxu0
  %v676 = vadd.f32 %v587, %v675
  %v677 = vpop.f32.mrf.mxu0
  %v678 = vadd.f32 %v589, %v677
  %679 = vmatmul.bf16.gmra.mxu0 %v346
  %v680 = vpop.f32.mrf.mxu0
  %v681 = vadd.f32 %v592, %v680
  %v682 = vpop.f32.mrf.mxu0
  %v683 = vadd.f32 %v594, %v682
  %684 = vmatmul.bf16.gmra.mxu0 %v349
  %v685 = vpop.f32.mrf.mxu0
  %v686 = vadd.f32 %v597, %v685
  %v687 = vpop.f32.mrf.mxu0
  %v688 = vadd.f32 %v599, %v687
  %689 = vmatmul.bf16.gmra.mxu0 %v352
  %v690 = vpop.f32.mrf.mxu0
  %v691 = vadd.f32 %v602, %v690
  %v692 = vpop.f32.mrf.mxu0
  %v693 = vadd.f32 %v604, %v692
  %694 = vmatmul.bf16.gmra.mxu0 %v355
  %v695 = vpop.f32.mrf.mxu0
  %v696 = vadd.f32 %v607, %v695
  %v697 = vpop.f32.mrf.mxu0
  %v698 = vadd.f32 %v609, %v697
  %699 = vmatmul.bf16.gmra.mxu0 %v358
  %v700 = vpop.f32.mrf.mxu0
  %v701 = vadd.f32 %v612, %v700
  %v702 = vpop.f32.mrf.mxu0
  %v703 = vadd.f32 %v614, %v702
  %704 = vmatmul.bf16.gmra.mxu0 %v361
  %v705 = vpop.f32.mrf.mxu0
  %v706 = vadd.f32 %v617, %v705
  %v707 = vpop.f32.mrf.mxu0
  %v708 = vadd.f32 %v619, %v707
  %709 = vmatmul.bf16.gmra.mxu0 %v364
  %v710 = vpop.f32.mrf.mxu0
  %v711 = vadd.f32 %v622, %v710
  %v712 = vpop.f32.mrf.mxu0
  %v713 = vadd.f32 %v624, %v712
  %714 = vmatmul.bf16.gmra.mxu0 %v367
  %v715 = vpop.f32.mrf.mxu0
  %v716 = vadd.f32 %v627, %v715
  %v717 = vpop.f32.mrf.mxu0
  %v718 = vadd.f32 %v629, %v717
  %719 = vmatmul.bf16.gmra.mxu0 %v370
  %v720 = vpop.f32.mrf.mxu0
  %v721 = vadd.f32 %v632, %v720
  %v722 = vpop.f32.mrf.mxu0
  %v723 = vadd.f32 %v634, %v722
  %724 = vmatmul.bf16.gmra.mxu0 %v373
  %v725 = vpop.f32.mrf.mxu0
  %v726 = vadd.f32 %v637, %v725
  %v727 = vpop.f32.mrf.mxu0
  %v728 = vadd.f32 %v639, %v727
  %729 = vmatmul.bf16.gmra.mxu0 %v376
  %v730 = vpop.f32.mrf.mxu0
  %v731 = vadd.f32 %v642, %v730
  %v732 = vpop.f32.mrf.mxu0
  %v733 = vadd.f32 %v644, %v732
  %734 = vmatmul.bf16.gmra.mxu0 %v379
  %v735 = vpop.f32.mrf.mxu0
  %v736 = vadd.f32 %v647, %v735
  %v737 = vpop.f32.mrf.mxu0
  %v738 = vadd.f32 %v649, %v737
  %739 = vmatmul.bf16.gmra.mxu0 %v382
  %v740 = vpop.f32.mrf.mxu0
  %v741 = vadd.f32 %v652, %v740
  %v742 = vpop.f32.mrf.mxu0
  %v743 = vadd.f32 %v654, %v742
  %744 = vmatmul.bf16.gmra.mxu0 %v385
  %v745 = vpop.f32.mrf.mxu0
  %v746 = vadd.f32 %v657, %v745
  %v747 = vpop.f32.mrf.mxu0
  %v748 = vadd.f32 %v659, %v747
  %749 = vdwg.mxu0
  %v750 = vpack.c.bf16 %v671, %v493
  %v751 = vpack.c.bf16 %v673, %v495
  %v752 = vpack.c.bf16 %v676, %v498
  %v753 = vpack.c.bf16 %v678, %v500
  %v754 = vpack.c.bf16 %v681, %v503
  %v755 = vpack.c.bf16 %v683, %v505
  %v756 = vpack.c.bf16 %v686, %v508
  %v757 = vpack.c.bf16 %v688, %v510
  %v758 = vpack.c.bf16 %v691, %v513
  %v759 = vpack.c.bf16 %v693, %v515
  %v760 = vpack.c.bf16 %v696, %v518
  %v761 = vpack.c.bf16 %v698, %v520
  %v762 = vpack.c.bf16 %v701, %v523
  %v763 = vpack.c.bf16 %v703, %v525
  %v764 = vpack.c.bf16 %v706, %v528
  %v765 = vpack.c.bf16 %v708, %v530
  %v766 = vpack.c.bf16 %v711, %v533
  %v767 = vpack.c.bf16 %v713, %v535
  %v768 = vpack.c.bf16 %v716, %v538
  %v769 = vpack.c.bf16 %v718, %v540
  %v770 = vpack.c.bf16 %v721, %v543
  %v771 = vpack.c.bf16 %v723, %v545
  %v772 = vpack.c.bf16 %v726, %v548
  %v773 = vpack.c.bf16 %v728, %v550
  %v774 = vpack.c.bf16 %v731, %v553
  %v775 = vpack.c.bf16 %v733, %v555
  %v776 = vpack.c.bf16 %v736, %v558
  %v777 = vpack.c.bf16 %v738, %v560
  %v778 = vpack.c.bf16 %v741, %v563
  %v779 = vpack.c.bf16 %v743, %v565
  %v780 = vpack.c.bf16 %v746, %v568
  %v781 = vpack.c.bf16 %v748, %v570
  %v782 = vld [vmem:[%s2] sm:$0xf]
  %v783 = vld [vmem:[%s2 + $0x4] sm:$0xf]
  %v784 = vld [vmem:[%s2 + $0x8] sm:$0xf]
  %v785 = vld [vmem:[%s2 + $0xc] sm:$0xf]
  %v786 = vld [vmem:[%s2 + $0x10] sm:$0xf]
  %v787 = vld [vmem:[%s2 + $0x14] sm:$0xf]
  %v788 = vld [vmem:[%s2 + $0x18] sm:$0xf]
  %v789 = vld [vmem:[%s2 + $0x1c] sm:$0xf]
  %v790 = vld [vmem:[%s2 + $0x20] sm:$0xf]
  %v791 = vld [vmem:[%s2 + $0x24] sm:$0xf]
  %v792 = vld [vmem:[%s2 + $0x28] sm:$0xf]
  %v793 = vld [vmem:[%s2 + $0x2c] sm:$0xf]
  %v794 = vld [vmem:[%s2 + $0x30] sm:$0xf]
  %v795 = vld [vmem:[%s2 + $0x34] sm:$0xf]
  %v796 = vld [vmem:[%s2 + $0x38] sm:$0xf]
  %v797 = vld [vmem:[%s2 + $0x3c] sm:$0xf]
  %v798 = vld [vmem:[%s2 + $0x40] sm:$0xf]
  %v799 = vld [vmem:[%s2 + $0x44] sm:$0xf]
  %v800 = vld [vmem:[%s2 + $0x48] sm:$0xf]
  %v801 = vld [vmem:[%s2 + $0x4c] sm:$0xf]
  %v802 = vld [vmem:[%s2 + $0x50] sm:$0xf]
  %v803 = vld [vmem:[%s2 + $0x54] sm:$0xf]
  %v804 = vld [vmem:[%s2 + $0x58] sm:$0xf]
  %v805 = vld [vmem:[%s2 + $0x5c] sm:$0xf]
  %v806 = vld [vmem:[%s2 + $0x60] sm:$0x7]
  %s807 = scalar_lea.vmem %s2, 100
  %v808 = vld [vmem:[%s807] sm:$0xf]
  %v809 = vld [vmem:[%s807 + $0x4] sm:$0xf]
  %v810 = vld [vmem:[%s807 + $0x8] sm:$0xf]
  %v811 = vld [vmem:[%s807 + $0xc] sm:$0xf]
  %v812 = vld [vmem:[%s807 + $0x10] sm:$0xf]
  %v813 = vld [vmem:[%s807 + $0x14] sm:$0xf]
  %v814 = vld [vmem:[%s807 + $0x18] sm:$0xf]
  %v815 = vld [vmem:[%s807 + $0x1c] sm:$0xf]
  %v816 = vld [vmem:[%s807 + $0x20] sm:$0xf]
  %v817 = vld [vmem:[%s807 + $0x24] sm:$0xf]
  %v818 = vld [vmem:[%s807 + $0x28] sm:$0xf]
  %v819 = vld [vmem:[%s807 + $0x2c] sm:$0xf]
  %v820 = vld [vmem:[%s807 + $0x30] sm:$0xf]
  %v821 = vld [vmem:[%s807 + $0x34] sm:$0xf]
  %v822 = vld [vmem:[%s807 + $0x38] sm:$0xf]
  %v823 = vld [vmem:[%s807 + $0x3c] sm:$0xf]
  %v824 = vld [vmem:[%s807 + $0x40] sm:$0xf]
  %v825 = vld [vmem:[%s807 + $0x44] sm:$0xf]
  %v826 = vld [vmem:[%s807 + $0x48] sm:$0xf]
  %v827 = vld [vmem:[%s807 + $0x4c] sm:$0xf]
  %v828 = vld [vmem:[%s807 + $0x50] sm:$0xf]
  %v829 = vld [vmem:[%s807 + $0x54] sm:$0xf]
  %v830 = vld [vmem:[%s807 + $0x58] sm:$0xf]
  %v831 = vld [vmem:[%s807 + $0x5c] sm:$0xf]
  %v832 = vld [vmem:[%s807 + $0x60] sm:$0x7]
  %v841 = vunpack.c.l.b16 %v758
  %v842 = vunpack.c.h.b16 %v758
  %v843 = vunpack.c.l.b16 %v759
  %v844 = vunpack.c.h.b16 %v759
  %v845 = vunpack.c.l.b16 %v760
  %v846 = vunpack.c.h.b16 %v760
  %v847 = vunpack.c.l.b16 %v761
  %v848 = vunpack.c.h.b16 %v761
  %v849 = vunpack.c.l.b16 %v762
  %v850 = vunpack.c.h.b16 %v762
  %v851 = vunpack.c.l.b16 %v763
  %v852 = vunpack.c.h.b16 %v763
  %v853 = vunpack.c.l.b16 %v764
  %v854 = vunpack.c.h.b16 %v764
  %v855 = vunpack.c.l.b16 %v765
  %v856 = vunpack.c.h.b16 %v765
  %v857 = vpack.c.b16 %v843, %v841
  %v858 = vpack.c.b16 %v844, %v842
  %v859 = vpack.c.b16 %v847, %v845
  %v860 = vpack.c.b16 %v848, %v846
  %v861 = vpack.c.b16 %v851, %v849
  %v862 = vpack.c.b16 %v852, %v850
  %v863 = vpack.c.b16 %v855, %v853
  %v864 = vpack.c.b16 %v856, %v854
  %v894 = vunpack.c.l.b16 %v808
  %v895 = vunpack.c.l.b16 %v809
  %v896 = vunpack.c.l.b16 %v810
  %v897 = vunpack.c.l.b16 %v811
  %v898 = vunpack.c.l.b16 %v812
  %v899 = vunpack.c.l.b16 %v813
  %v900 = vunpack.c.l.b16 %v814
  %v901 = vunpack.c.l.b16 %v815
  %v902 = vunpack.c.l.b16 %v816
  %v903 = vunpack.c.l.b16 %v817
  %v904 = vunpack.c.l.b16 %v818
  %v905 = vunpack.c.l.b16 %v819
  %v906 = vunpack.c.l.b16 %v820
  %v907 = vunpack.c.l.b16 %v821
  %v908 = vunpack.c.l.b16 %v822
  %v909 = vunpack.c.l.b16 %v823
  %v910 = vunpack.c.l.b16 %v824
  %v911 = vunpack.c.l.b16 %v825
  %v912 = vunpack.c.l.b16 %v826
  %v913 = vunpack.c.l.b16 %v827
  %v914 = vunpack.c.l.b16 %v828
  %v915 = vunpack.c.l.b16 %v829
  %v916 = vunpack.c.l.b16 %v830
  %v917 = vunpack.c.l.b16 %v831
  %v918 = vunpack.c.l.b16 %v832
  %v919 = vpack.c.b16 %v895, %v894
  %v920 = vpack.c.b16 %v897, %v896
  %v921 = vpack.c.b16 %v899, %v898
  %v922 = vpack.c.b16 %v901, %v900
  %v923 = vpack.c.b16 %v903, %v902
  %v924 = vpack.c.b16 %v905, %v904
  %v925 = vpack.c.b16 %v907, %v906
  %v926 = vpack.c.b16 %v909, %v908
  %v927 = vpack.c.b16 %v911, %v910
  %v928 = vpack.c.b16 %v913, %v912
  %v929 = vpack.c.b16 %v915, %v914
  %v930 = vpack.c.b16 %v917, %v916
  %v931 = vpack.c.b16 %v918, %v918
  %vm944 = vcmask 572416
  %v946 = vsel %vm944, %v858, 0
  %v949 = vsel %vm944, %v860, 0
  %v952 = vsel %vm944, %v862, 0
  %v955 = vsel %vm944, %v864, 0
  %vm957 = vcmask 1042432
  %v959 = vsel %vm957, %v931, 0
  %961 = vmatpush.bf16.msra.mxu0 %v926
  %962 = vmatpush.bf16.msra.mxu0 %v925
  %963 = vmatpush.bf16.msra.mxu0 %v924
  %964 = vmatpush.bf16.msra.mxu0 %v923
  %965 = vmatpush.bf16.msra.mxu0 %v922
  %966 = vmatpush.bf16.msra.mxu0 %v921
  %967 = vmatpush.bf16.msra.mxu0 %v920
  %968 = vmatpush.bf16.msra.mxu0 %v919
  %969 = vmatmul.bf16.gmra.mxu0 %v857
  %v970 = vpop.f32.mrf.mxu0
  %v971 = vadd.f32 0.0, %v970
  %v972 = vpop.f32.mrf.mxu0
  %v973 = vadd.f32 0.0, %v972
  %974 = vmatmul.bf16.gmra.mxu0 %v859
  %v975 = vpop.f32.mrf.mxu0
  %v976 = vadd.f32 0.0, %v975
  %v977 = vpop.f32.mrf.mxu0
  %v978 = vadd.f32 0.0, %v977
  %979 = vmatmul.bf16.gmra.mxu0 %v861
  %v980 = vpop.f32.mrf.mxu0
  %v981 = vadd.f32 0.0, %v980
  %v982 = vpop.f32.mrf.mxu0
  %v983 = vadd.f32 0.0, %v982
  %984 = vmatmul.bf16.gmra.mxu0 %v863
  %v985 = vpop.f32.mrf.mxu0
  %v986 = vadd.f32 0.0, %v985
  %v987 = vpop.f32.mrf.mxu0
  %v988 = vadd.f32 0.0, %v987
  %989 = vdwg.mxu0
  %990 = vmatpush.bf16.msra.mxu0 0
  %991 = vmatpush.bf16.msra.mxu0 0
  %992 = vmatpush.bf16.msra.mxu0 0
  %993 = vmatpush.bf16.msra.mxu0 %v959
  %994 = vmatpush.bf16.msra.mxu0 %v930
  %995 = vmatpush.bf16.msra.mxu0 %v929
  %996 = vmatpush.bf16.msra.mxu0 %v928
  %997 = vmatpush.bf16.msra.mxu0 %v927
  %998 = vmatmul.bf16.gmra.mxu0 %v946
  %v999 = vpop.f32.mrf.mxu0
  %v1000 = vadd.f32 %v971, %v999
  %v1001 = vpop.f32.mrf.mxu0
  %v1002 = vadd.f32 %v973, %v1001
  %1003 = vmatmul.bf16.gmra.mxu0 %v949
  %v1004 = vpop.f32.mrf.mxu0
  %v1005 = vadd.f32 %v976, %v1004
  %v1006 = vpop.f32.mrf.mxu0
  %v1007 = vadd.f32 %v978, %v1006
  %1008 = vmatmul.bf16.gmra.mxu0 %v952
  %v1009 = vpop.f32.mrf.mxu0
  %v1010 = vadd.f32 %v981, %v1009
  %v1011 = vpop.f32.mrf.mxu0
  %v1012 = vadd.f32 %v983, %v1011
  %1013 = vmatmul.bf16.gmra.mxu0 %v955
  %v1014 = vpop.f32.mrf.mxu0
  %v1015 = vadd.f32 %v986, %v1014
  %v1016 = vpop.f32.mrf.mxu0
  %v1017 = vadd.f32 %v988, %v1016
  %1018 = vdwg.mxu0
  %v1027 = vunpack.c.l.b16 %v750
  %v1028 = vunpack.c.h.b16 %v750
  %v1029 = vunpack.c.l.b16 %v751
  %v1030 = vunpack.c.h.b16 %v751
  %v1031 = vunpack.c.l.b16 %v752
  %v1032 = vunpack.c.h.b16 %v752
  %v1033 = vunpack.c.l.b16 %v753
  %v1034 = vunpack.c.h.b16 %v753
  %v1035 = vunpack.c.l.b16 %v754
  %v1036 = vunpack.c.h.b16 %v754
  %v1037 = vunpack.c.l.b16 %v755
  %v1038 = vunpack.c.h.b16 %v755
  %v1039 = vunpack.c.l.b16 %v756
  %v1040 = vunpack.c.h.b16 %v756
  %v1041 = vunpack.c.l.b16 %v757
  %v1042 = vunpack.c.h.b16 %v757
  %v1043 = vpack.c.b16 %v1029, %v1027
  %v1044 = vpack.c.b16 %v1030, %v1028
  %v1045 = vpack.c.b16 %v1033, %v1031
  %v1046 = vpack.c.b16 %v1034, %v1032
  %v1047 = vpack.c.b16 %v1037, %v1035
  %v1048 = vpack.c.b16 %v1038, %v1036
  %v1049 = vpack.c.b16 %v1041, %v1039
  %v1050 = vpack.c.b16 %v1042, %v1040
  %v1080 = vunpack.c.l.b16 %v782
  %v1081 = vunpack.c.l.b16 %v783
  %v1082 = vunpack.c.l.b16 %v784
  %v1083 = vunpack.c.l.b16 %v785
  %v1084 = vunpack.c.l.b16 %v786
  %v1085 = vunpack.c.l.b16 %v787
  %v1086 = vunpack.c.l.b16 %v788
  %v1087 = vunpack.c.l.b16 %v789
  %v1088 = vunpack.c.l.b16 %v790
  %v1089 = vunpack.c.l.b16 %v791
  %v1090 = vunpack.c.l.b16 %v792
  %v1091 = vunpack.c.l.b16 %v793
  %v1092 = vunpack.c.l.b16 %v794
  %v1093 = vunpack.c.l.b16 %v795
  %v1094 = vunpack.c.l.b16 %v796
  %v1095 = vunpack.c.l.b16 %v797
  %v1096 = vunpack.c.l.b16 %v798
  %v1097 = vunpack.c.l.b16 %v799
  %v1098 = vunpack.c.l.b16 %v800
  %v1099 = vunpack.c.l.b16 %v801
  %v1100 = vunpack.c.l.b16 %v802
  %v1101 = vunpack.c.l.b16 %v803
  %v1102 = vunpack.c.l.b16 %v804
  %v1103 = vunpack.c.l.b16 %v805
  %v1104 = vunpack.c.l.b16 %v806
  %v1105 = vpack.c.b16 %v1081, %v1080
  %v1106 = vpack.c.b16 %v1083, %v1082
  %v1107 = vpack.c.b16 %v1085, %v1084
  %v1108 = vpack.c.b16 %v1087, %v1086
  %v1109 = vpack.c.b16 %v1089, %v1088
  %v1110 = vpack.c.b16 %v1091, %v1090
  %v1111 = vpack.c.b16 %v1093, %v1092
  %v1112 = vpack.c.b16 %v1095, %v1094
  %v1113 = vpack.c.b16 %v1097, %v1096
  %v1114 = vpack.c.b16 %v1099, %v1098
  %v1115 = vpack.c.b16 %v1101, %v1100
  %v1116 = vpack.c.b16 %v1103, %v1102
  %v1117 = vpack.c.b16 %v1104, %v1104
  %v1131 = vsel %vm944, %v1044, 0
  %v1134 = vsel %vm944, %v1046, 0
  %v1137 = vsel %vm944, %v1048, 0
  %v1140 = vsel %vm944, %v1050, 0
  %v1143 = vsel %vm957, %v1117, 0
  %1145 = vmatpush.bf16.msra.mxu0 %v1112
  %1146 = vmatpush.bf16.msra.mxu0 %v1111
  %1147 = vmatpush.bf16.msra.mxu0 %v1110
  %1148 = vmatpush.bf16.msra.mxu0 %v1109
  %1149 = vmatpush.bf16.msra.mxu0 %v1108
  %1150 = vmatpush.bf16.msra.mxu0 %v1107
  %1151 = vmatpush.bf16.msra.mxu0 %v1106
  %1152 = vmatpush.bf16.msra.mxu0 %v1105
  %1153 = vmatmul.bf16.gmra.mxu0 %v1043
  %v1154 = vpop.f32.mrf.mxu0
  %v1155 = vadd.f32 %v1000, %v1154
  %v1156 = vpop.f32.mrf.mxu0
  %v1157 = vadd.f32 %v1002, %v1156
  %1158 = vmatmul.bf16.gmra.mxu0 %v1045
  %v1159 = vpop.f32.mrf.mxu0
  %v1160 = vadd.f32 %v1005, %v1159
  %v1161 = vpop.f32.mrf.mxu0
  %v1162 = vadd.f32 %v1007, %v1161
  %1163 = vmatmul.bf16.gmra.mxu0 %v1047
  %v1164 = vpop.f32.mrf.mxu0
  %v1165 = vadd.f32 %v1010, %v1164
  %v1166 = vpop.f32.mrf.mxu0
  %v1167 = vadd.f32 %v1012, %v1166
  %1168 = vmatmul.bf16.gmra.mxu0 %v1049
  %v1169 = vpop.f32.mrf.mxu0
  %v1170 = vadd.f32 %v1015, %v1169
  %v1171 = vpop.f32.mrf.mxu0
  %v1172 = vadd.f32 %v1017, %v1171
  %1173 = vdwg.mxu0
  %1174 = vmatpush.bf16.msra.mxu0 0
  %1175 = vmatpush.bf16.msra.mxu0 0
  %1176 = vmatpush.bf16.msra.mxu0 0
  %1177 = vmatpush.bf16.msra.mxu0 %v1143
  %1178 = vmatpush.bf16.msra.mxu0 %v1116
  %1179 = vmatpush.bf16.msra.mxu0 %v1115
  %1180 = vmatpush.bf16.msra.mxu0 %v1114
  %1181 = vmatpush.bf16.msra.mxu0 %v1113
  %1182 = vmatmul.bf16.gmra.mxu0 %v1131
  %v1183 = vpop.f32.mrf.mxu0
  %v1184 = vadd.f32 %v1155, %v1183
  %v1185 = vpop.f32.mrf.mxu0
  %v1186 = vadd.f32 %v1157, %v1185
  %1187 = vmatmul.bf16.gmra.mxu0 %v1134
  %v1188 = vpop.f32.mrf.mxu0
  %v1189 = vadd.f32 %v1160, %v1188
  %v1190 = vpop.f32.mrf.mxu0
  %v1191 = vadd.f32 %v1162, %v1190
  %1192 = vmatmul.bf16.gmra.mxu0 %v1137
  %v1193 = vpop.f32.mrf.mxu0
  %v1194 = vadd.f32 %v1165, %v1193
  %v1195 = vpop.f32.mrf.mxu0
  %v1196 = vadd.f32 %v1167, %v1195
  %1197 = vmatmul.bf16.gmra.mxu0 %v1140
  %v1198 = vpop.f32.mrf.mxu0
  %v1199 = vadd.f32 %v1170, %v1198
  %v1200 = vpop.f32.mrf.mxu0
  %v1201 = vadd.f32 %v1172, %v1200
  %1202 = vdwg.mxu0
  %s1203 = scalar_lea.vmem %s2, 200
  %v1204 = vld [vmem:[%s1203] sm:$0xf]
  %v1205 = vld [vmem:[%s1203 + $0x4] sm:$0xf]
  %v1206 = vld [vmem:[%s1203 + $0x8] sm:$0xf]
  %v1207 = vld [vmem:[%s1203 + $0xc] sm:$0xf]
  %v1208 = vld [vmem:[%s1203 + $0x10] sm:$0xf]
  %v1209 = vld [vmem:[%s1203 + $0x14] sm:$0xf]
  %v1210 = vld [vmem:[%s1203 + $0x18] sm:$0xf]
  %v1211 = vld [vmem:[%s1203 + $0x1c] sm:$0xf]
  %v1212 = vld [vmem:[%s1203 + $0x20] sm:$0xf]
  %v1213 = vld [vmem:[%s1203 + $0x24] sm:$0xf]
  %v1214 = vld [vmem:[%s1203 + $0x28] sm:$0xf]
  %v1215 = vld [vmem:[%s1203 + $0x2c] sm:$0xf]
  %v1216 = vld [vmem:[%s1203 + $0x30] sm:$0xf]
  %v1217 = vld [vmem:[%s1203 + $0x34] sm:$0xf]
  %v1218 = vld [vmem:[%s1203 + $0x38] sm:$0xf]
  %v1219 = vld [vmem:[%s1203 + $0x3c] sm:$0xf]
  %v1220 = vld [vmem:[%s1203 + $0x40] sm:$0xf]
  %v1221 = vld [vmem:[%s1203 + $0x44] sm:$0xf]
  %v1222 = vld [vmem:[%s1203 + $0x48] sm:$0xf]
  %v1223 = vld [vmem:[%s1203 + $0x4c] sm:$0xf]
  %v1224 = vld [vmem:[%s1203 + $0x50] sm:$0xf]
  %v1225 = vld [vmem:[%s1203 + $0x54] sm:$0xf]
  %v1226 = vld [vmem:[%s1203 + $0x58] sm:$0xf]
  %v1227 = vld [vmem:[%s1203 + $0x5c] sm:$0xf]
  %v1228 = vld [vmem:[%s1203 + $0x60] sm:$0x7]
  %v1237 = vunpack.c.l.b16 %v766
  %v1238 = vunpack.c.h.b16 %v766
  %v1239 = vunpack.c.l.b16 %v767
  %v1240 = vunpack.c.h.b16 %v767
  %v1241 = vunpack.c.l.b16 %v768
  %v1242 = vunpack.c.h.b16 %v768
  %v1243 = vunpack.c.l.b16 %v769
  %v1244 = vunpack.c.h.b16 %v769
  %v1245 = vunpack.c.l.b16 %v770
  %v1246 = vunpack.c.h.b16 %v770
  %v1247 = vunpack.c.l.b16 %v771
  %v1248 = vunpack.c.h.b16 %v771
  %v1249 = vunpack.c.l.b16 %v772
  %v1250 = vunpack.c.h.b16 %v772
  %v1251 = vunpack.c.l.b16 %v773
  %v1252 = vunpack.c.h.b16 %v773
  %v1253 = vpack.c.b16 %v1239, %v1237
  %v1254 = vpack.c.b16 %v1240, %v1238
  %v1255 = vpack.c.b16 %v1243, %v1241
  %v1256 = vpack.c.b16 %v1244, %v1242
  %v1257 = vpack.c.b16 %v1247, %v1245
  %v1258 = vpack.c.b16 %v1248, %v1246
  %v1259 = vpack.c.b16 %v1251, %v1249
  %v1260 = vpack.c.b16 %v1252, %v1250
  %v1290 = vunpack.c.l.b16 %v1204
  %v1291 = vunpack.c.l.b16 %v1205
  %v1292 = vunpack.c.l.b16 %v1206
  %v1293 = vunpack.c.l.b16 %v1207
  %v1294 = vunpack.c.l.b16 %v1208
  %v1295 = vunpack.c.l.b16 %v1209
  %v1296 = vunpack.c.l.b16 %v1210
  %v1297 = vunpack.c.l.b16 %v1211
  %v1298 = vunpack.c.l.b16 %v1212
  %v1299 = vunpack.c.l.b16 %v1213
  %v1300 = vunpack.c.l.b16 %v1214
  %v1301 = vunpack.c.l.b16 %v1215
  %v1302 = vunpack.c.l.b16 %v1216
  %v1303 = vunpack.c.l.b16 %v1217
  %v1304 = vunpack.c.l.b16 %v1218
  %v1305 = vunpack.c.l.b16 %v1219
  %v1306 = vunpack.c.l.b16 %v1220
  %v1307 = vunpack.c.l.b16 %v1221
  %v1308 = vunpack.c.l.b16 %v1222
  %v1309 = vunpack.c.l.b16 %v1223
  %v1310 = vunpack.c.l.b16 %v1224
  %v1311 = vunpack.c.l.b16 %v1225
  %v1312 = vunpack.c.l.b16 %v1226
  %v1313 = vunpack.c.l.b16 %v1227
  %v1314 = vunpack.c.l.b16 %v1228
  %v1315 = vpack.c.b16 %v1291, %v1290
  %v1316 = vpack.c.b16 %v1293, %v1292
  %v1317 = vpack.c.b16 %v1295, %v1294
  %v1318 = vpack.c.b16 %v1297, %v1296
  %v1319 = vpack.c.b16 %v1299, %v1298
  %v1320 = vpack.c.b16 %v1301, %v1300
  %v1321 = vpack.c.b16 %v1303, %v1302
  %v1322 = vpack.c.b16 %v1305, %v1304
  %v1323 = vpack.c.b16 %v1307, %v1306
  %v1324 = vpack.c.b16 %v1309, %v1308
  %v1325 = vpack.c.b16 %v1311, %v1310
  %v1326 = vpack.c.b16 %v1313, %v1312
  %v1327 = vpack.c.b16 %v1314, %v1314
  %v1341 = vsel %vm944, %v1254, 0
  %v1344 = vsel %vm944, %v1256, 0
  %v1347 = vsel %vm944, %v1258, 0
  %v1350 = vsel %vm944, %v1260, 0
  %v1353 = vsel %vm957, %v1327, 0
  %1355 = vmatpush.bf16.msra.mxu0 %v1322
  %1356 = vmatpush.bf16.msra.mxu0 %v1321
  %1357 = vmatpush.bf16.msra.mxu0 %v1320
  %1358 = vmatpush.bf16.msra.mxu0 %v1319
  %1359 = vmatpush.bf16.msra.mxu0 %v1318
  %1360 = vmatpush.bf16.msra.mxu0 %v1317
  %1361 = vmatpush.bf16.msra.mxu0 %v1316
  %1362 = vmatpush.bf16.msra.mxu0 %v1315
  %1363 = vmatmul.bf16.gmra.mxu0 %v1253
  %v1364 = vpop.f32.mrf.mxu0
  %v1365 = vadd.f32 0.0, %v1364
  %v1366 = vpop.f32.mrf.mxu0
  %v1367 = vadd.f32 0.0, %v1366
  %1368 = vmatmul.bf16.gmra.mxu0 %v1255
  %v1369 = vpop.f32.mrf.mxu0
  %v1370 = vadd.f32 0.0, %v1369
  %v1371 = vpop.f32.mrf.mxu0
  %v1372 = vadd.f32 0.0, %v1371
  %1373 = vmatmul.bf16.gmra.mxu0 %v1257
  %v1374 = vpop.f32.mrf.mxu0
  %v1375 = vadd.f32 0.0, %v1374
  %v1376 = vpop.f32.mrf.mxu0
  %v1377 = vadd.f32 0.0, %v1376
  %1378 = vmatmul.bf16.gmra.mxu0 %v1259
  %v1379 = vpop.f32.mrf.mxu0
  %v1380 = vadd.f32 0.0, %v1379
  %v1381 = vpop.f32.mrf.mxu0
  %v1382 = vadd.f32 0.0, %v1381
  %1383 = vdwg.mxu0
  %1384 = vmatpush.bf16.msra.mxu0 0
  %1385 = vmatpush.bf16.msra.mxu0 0
  %1386 = vmatpush.bf16.msra.mxu0 0
  %1387 = vmatpush.bf16.msra.mxu0 %v1353
  %1388 = vmatpush.bf16.msra.mxu0 %v1326
  %1389 = vmatpush.bf16.msra.mxu0 %v1325
  %1390 = vmatpush.bf16.msra.mxu0 %v1324
  %1391 = vmatpush.bf16.msra.mxu0 %v1323
  %1392 = vmatmul.bf16.gmra.mxu0 %v1341
  %v1393 = vpop.f32.mrf.mxu0
  %v1394 = vadd.f32 %v1365, %v1393
  %v1395 = vpop.f32.mrf.mxu0
  %v1396 = vadd.f32 %v1367, %v1395
  %1397 = vmatmul.bf16.gmra.mxu0 %v1344
  %v1398 = vpop.f32.mrf.mxu0
  %v1399 = vadd.f32 %v1370, %v1398
  %v1400 = vpop.f32.mrf.mxu0
  %v1401 = vadd.f32 %v1372, %v1400
  %1402 = vmatmul.bf16.gmra.mxu0 %v1347
  %v1403 = vpop.f32.mrf.mxu0
  %v1404 = vadd.f32 %v1375, %v1403
  %v1405 = vpop.f32.mrf.mxu0
  %v1406 = vadd.f32 %v1377, %v1405
  %1407 = vmatmul.bf16.gmra.mxu0 %v1350
  %v1408 = vpop.f32.mrf.mxu0
  %v1409 = vadd.f32 %v1380, %v1408
  %v1410 = vpop.f32.mrf.mxu0
  %v1411 = vadd.f32 %v1382, %v1410
  %1412 = vdwg.mxu0
  %v1413 = vadd.f32 %v1184, %v1394
  %v1414 = vadd.f32 %v1186, %v1396
  %v1415 = vadd.f32 %v1189, %v1399
  %v1416 = vadd.f32 %v1191, %v1401
  %v1417 = vadd.f32 %v1194, %v1404
  %v1418 = vadd.f32 %v1196, %v1406
  %v1419 = vadd.f32 %v1199, %v1409
  %v1420 = vadd.f32 %v1201, %v1411
  %s1421 = scalar_lea.vmem %s2, 300
  %v1422 = vld [vmem:[%s1421] sm:$0xf]
  %v1423 = vld [vmem:[%s1421 + $0x4] sm:$0xf]
  %v1424 = vld [vmem:[%s1421 + $0x8] sm:$0xf]
  %v1425 = vld [vmem:[%s1421 + $0xc] sm:$0xf]
  %v1426 = vld [vmem:[%s1421 + $0x10] sm:$0xf]
  %v1427 = vld [vmem:[%s1421 + $0x14] sm:$0xf]
  %v1428 = vld [vmem:[%s1421 + $0x18] sm:$0xf]
  %v1429 = vld [vmem:[%s1421 + $0x1c] sm:$0xf]
  %v1430 = vld [vmem:[%s1421 + $0x20] sm:$0xf]
  %v1431 = vld [vmem:[%s1421 + $0x24] sm:$0xf]
  %v1432 = vld [vmem:[%s1421 + $0x28] sm:$0xf]
  %v1433 = vld [vmem:[%s1421 + $0x2c] sm:$0xf]
  %v1434 = vld [vmem:[%s1421 + $0x30] sm:$0xf]
  %v1435 = vld [vmem:[%s1421 + $0x34] sm:$0xf]
  %v1436 = vld [vmem:[%s1421 + $0x38] sm:$0xf]
  %v1437 = vld [vmem:[%s1421 + $0x3c] sm:$0xf]
  %v1438 = vld [vmem:[%s1421 + $0x40] sm:$0xf]
  %v1439 = vld [vmem:[%s1421 + $0x44] sm:$0xf]
  %v1440 = vld [vmem:[%s1421 + $0x48] sm:$0xf]
  %v1441 = vld [vmem:[%s1421 + $0x4c] sm:$0xf]
  %v1442 = vld [vmem:[%s1421 + $0x50] sm:$0xf]
  %v1443 = vld [vmem:[%s1421 + $0x54] sm:$0xf]
  %v1444 = vld [vmem:[%s1421 + $0x58] sm:$0xf]
  %v1445 = vld [vmem:[%s1421 + $0x5c] sm:$0xf]
  %v1446 = vld [vmem:[%s1421 + $0x60] sm:$0x7]
  %v1455 = vunpack.c.l.b16 %v774
  %v1456 = vunpack.c.h.b16 %v774
  %v1457 = vunpack.c.l.b16 %v775
  %v1458 = vunpack.c.h.b16 %v775
  %v1459 = vunpack.c.l.b16 %v776
  %v1460 = vunpack.c.h.b16 %v776
  %v1461 = vunpack.c.l.b16 %v777
  %v1462 = vunpack.c.h.b16 %v777
  %v1463 = vunpack.c.l.b16 %v778
  %v1464 = vunpack.c.h.b16 %v778
  %v1465 = vunpack.c.l.b16 %v779
  %v1466 = vunpack.c.h.b16 %v779
  %v1467 = vunpack.c.l.b16 %v780
  %v1468 = vunpack.c.h.b16 %v780
  %v1469 = vunpack.c.l.b16 %v781
  %v1470 = vunpack.c.h.b16 %v781
  %v1471 = vpack.c.b16 %v1457, %v1455
  %v1472 = vpack.c.b16 %v1458, %v1456
  %v1473 = vpack.c.b16 %v1461, %v1459
  %v1474 = vpack.c.b16 %v1462, %v1460
  %v1475 = vpack.c.b16 %v1465, %v1463
  %v1476 = vpack.c.b16 %v1466, %v1464
  %v1477 = vpack.c.b16 %v1469, %v1467
  %v1478 = vpack.c.b16 %v1470, %v1468
  %v1508 = vunpack.c.l.b16 %v1422
  %v1509 = vunpack.c.l.b16 %v1423
  %v1510 = vunpack.c.l.b16 %v1424
  %v1511 = vunpack.c.l.b16 %v1425
  %v1512 = vunpack.c.l.b16 %v1426
  %v1513 = vunpack.c.l.b16 %v1427
  %v1514 = vunpack.c.l.b16 %v1428
  %v1515 = vunpack.c.l.b16 %v1429
  %v1516 = vunpack.c.l.b16 %v1430
  %v1517 = vunpack.c.l.b16 %v1431
  %v1518 = vunpack.c.l.b16 %v1432
  %v1519 = vunpack.c.l.b16 %v1433
  %v1520 = vunpack.c.l.b16 %v1434
  %v1521 = vunpack.c.l.b16 %v1435
  %v1522 = vunpack.c.l.b16 %v1436
  %v1523 = vunpack.c.l.b16 %v1437
  %v1524 = vunpack.c.l.b16 %v1438
  %v1525 = vunpack.c.l.b16 %v1439
  %v1526 = vunpack.c.l.b16 %v1440
  %v1527 = vunpack.c.l.b16 %v1441
  %v1528 = vunpack.c.l.b16 %v1442
  %v1529 = vunpack.c.l.b16 %v1443
  %v1530 = vunpack.c.l.b16 %v1444
  %v1531 = vunpack.c.l.b16 %v1445
  %v1532 = vunpack.c.l.b16 %v1446
  %v1533 = vpack.c.b16 %v1509, %v1508
  %v1534 = vpack.c.b16 %v1511, %v1510
  %v1535 = vpack.c.b16 %v1513, %v1512
  %v1536 = vpack.c.b16 %v1515, %v1514
  %v1537 = vpack.c.b16 %v1517, %v1516
  %v1538 = vpack.c.b16 %v1519, %v1518
  %v1539 = vpack.c.b16 %v1521, %v1520
  %v1540 = vpack.c.b16 %v1523, %v1522
  %v1541 = vpack.c.b16 %v1525, %v1524
  %v1542 = vpack.c.b16 %v1527, %v1526
  %v1543 = vpack.c.b16 %v1529, %v1528
  %v1544 = vpack.c.b16 %v1531, %v1530
  %v1545 = vpack.c.b16 %v1532, %v1532
  %v1559 = vsel %vm944, %v1472, 0
  %v1562 = vsel %vm944, %v1474, 0
  %v1565 = vsel %vm944, %v1476, 0
  %v1568 = vsel %vm944, %v1478, 0
  %v1571 = vsel %vm957, %v1545, 0
  %1573 = vmatpush.bf16.msra.mxu0 %v1540
  %1574 = vmatpush.bf16.msra.mxu0 %v1539
  %1575 = vmatpush.bf16.msra.mxu0 %v1538
  %1576 = vmatpush.bf16.msra.mxu0 %v1537
  %1577 = vmatpush.bf16.msra.mxu0 %v1536
  %1578 = vmatpush.bf16.msra.mxu0 %v1535
  %1579 = vmatpush.bf16.msra.mxu0 %v1534
  %1580 = vmatpush.bf16.msra.mxu0 %v1533
  %1581 = vmatmul.bf16.gmra.mxu0 %v1471
  %v1582 = vpop.f32.mrf.mxu0
  %v1583 = vadd.f32 0.0, %v1582
  %v1584 = vpop.f32.mrf.mxu0
  %v1585 = vadd.f32 0.0, %v1584
  %1586 = vmatmul.bf16.gmra.mxu0 %v1473
  %v1587 = vpop.f32.mrf.mxu0
  %v1588 = vadd.f32 0.0, %v1587
  %v1589 = vpop.f32.mrf.mxu0
  %v1590 = vadd.f32 0.0, %v1589
  %1591 = vmatmul.bf16.gmra.mxu0 %v1475
  %v1592 = vpop.f32.mrf.mxu0
  %v1593 = vadd.f32 0.0, %v1592
  %v1594 = vpop.f32.mrf.mxu0
  %v1595 = vadd.f32 0.0, %v1594
  %1596 = vmatmul.bf16.gmra.mxu0 %v1477
  %v1597 = vpop.f32.mrf.mxu0
  %v1598 = vadd.f32 0.0, %v1597
  %v1599 = vpop.f32.mrf.mxu0
  %v1600 = vadd.f32 0.0, %v1599
  %1601 = vdwg.mxu0
  %1602 = vmatpush.bf16.msra.mxu0 0
  %1603 = vmatpush.bf16.msra.mxu0 0
  %1604 = vmatpush.bf16.msra.mxu0 0
  %1605 = vmatpush.bf16.msra.mxu0 %v1571
  %1606 = vmatpush.bf16.msra.mxu0 %v1544
  %1607 = vmatpush.bf16.msra.mxu0 %v1543
  %1608 = vmatpush.bf16.msra.mxu0 %v1542
  %1609 = vmatpush.bf16.msra.mxu0 %v1541
  %1610 = vmatmul.bf16.gmra.mxu0 %v1559
  %v1611 = vpop.f32.mrf.mxu0
  %v1612 = vadd.f32 %v1583, %v1611
  %v1613 = vpop.f32.mrf.mxu0
  %v1614 = vadd.f32 %v1585, %v1613
  %1615 = vmatmul.bf16.gmra.mxu0 %v1562
  %v1616 = vpop.f32.mrf.mxu0
  %v1617 = vadd.f32 %v1588, %v1616
  %v1618 = vpop.f32.mrf.mxu0
  %v1619 = vadd.f32 %v1590, %v1618
  %1620 = vmatmul.bf16.gmra.mxu0 %v1565
  %v1621 = vpop.f32.mrf.mxu0
  %v1622 = vadd.f32 %v1593, %v1621
  %v1623 = vpop.f32.mrf.mxu0
  %v1624 = vadd.f32 %v1595, %v1623
  %1625 = vmatmul.bf16.gmra.mxu0 %v1568
  %v1626 = vpop.f32.mrf.mxu0
  %v1627 = vadd.f32 %v1598, %v1626
  %v1628 = vpop.f32.mrf.mxu0
  %v1629 = vadd.f32 %v1600, %v1628
  %1630 = vdwg.mxu0
  %v1631 = vadd.f32 %v1413, %v1612
  %v1632 = vadd.f32 %v1414, %v1614
  %v1633 = vadd.f32 %v1415, %v1617
  %v1634 = vadd.f32 %v1416, %v1619
  %v1635 = vadd.f32 %v1417, %v1622
  %v1636 = vadd.f32 %v1418, %v1624
  %v1637 = vadd.f32 %v1419, %v1627
  %v1638 = vadd.f32 %v1420, %v1629
  %v1639 = vld [vmem:[%s3] sm:$0x1]
  %v1641 = vperm.slane %v1639, 0
  %v1643 = vadd.f32 %v1631, %v1641
  %v1644 = vadd.f32 %v1632, %v1641
  %v1645 = vadd.f32 %v1633, %v1641
  %v1646 = vadd.f32 %v1634, %v1641
  %v1647 = vadd.f32 %v1635, %v1641
  %v1648 = vadd.f32 %v1636, %v1641
  %v1649 = vadd.f32 %v1637, %v1641
  %v1650 = vadd.f32 %v1638, %v1641
  %vm1651 = vcmp.ge.f32.partialorder %v1643, 0.0
  %vm1652 = vcmp.ge.f32.partialorder %v1644, 0.0
  %vm1653 = vcmp.ge.f32.partialorder %v1645, 0.0
  %vm1654 = vcmp.ge.f32.partialorder %v1646, 0.0
  %vm1655 = vcmp.ge.f32.partialorder %v1647, 0.0
  %vm1656 = vcmp.ge.f32.partialorder %v1648, 0.0
  %vm1657 = vcmp.ge.f32.partialorder %v1649, 0.0
  %vm1658 = vcmp.ge.f32.partialorder %v1650, 0.0
  %v1659 = vmul.f32 %v1643, 0.01
  %v1660 = vmul.f32 %v1644, 0.01
  %v1661 = vmul.f32 %v1645, 0.01
  %v1662 = vmul.f32 %v1646, 0.01
  %v1663 = vmul.f32 %v1647, 0.01
  %v1664 = vmul.f32 %v1648, 0.01
  %v1665 = vmul.f32 %v1649, 0.01
  %v1666 = vmul.f32 %v1650, 0.01
  %v1667 = vsel %vm1651, %v1643, %v1659
  %v1668 = vsel %vm1652, %v1644, %v1660
  %v1669 = vsel %vm1653, %v1645, %v1661
  %v1670 = vsel %vm1654, %v1646, %v1662
  %v1671 = vsel %vm1655, %v1647, %v1663
  %v1672 = vsel %vm1656, %v1648, %v1664
  %v1673 = vsel %vm1657, %v1649, %v1665
  %v1674 = vsel %vm1658, %v1650, %v1666
  %v1675 = vpack.c.bf16 %v1667, %v1667
  %v1676 = vpack.c.bf16 %v1668, %v1668
  %v1677 = vpack.c.bf16 %v1669, %v1669
  %v1678 = vpack.c.bf16 %v1670, %v1670
  %v1679 = vpack.c.bf16 %v1671, %v1671
  %v1680 = vpack.c.bf16 %v1672, %v1672
  %v1681 = vpack.c.bf16 %v1673, %v1673
  %v1682 = vpack.c.bf16 %v1674, %v1674
  %vm1683 = vcmask 1043456
  %vm1684 = vcmask 64516
  %vm1685 = vmor %vm1684, %vm1683
  %1686 = vst.msk [vmem:[#allocation2] sm:$0xff] %vm1685, 0
  %1687 = vst.msk [vmem:[#allocation2 + $0x8] sm:$0xff] %vm1685, 0
  %1688 = vst.msk [vmem:[#allocation2 + $0x10] sm:$0xff] %vm1685, 0
  %1689 = vst.msk [vmem:[#allocation2 + $0x18] sm:$0xff] %vm1685, 0
  %1690 = vst.msk [vmem:[#allocation2 + $0x20] sm:$0xff] %vm1685, 0
  %1691 = vst.msk [vmem:[#allocation2 + $0x28] sm:$0xff] %vm1685, 0
  %1692 = vst.msk [vmem:[#allocation2 + $0x30] sm:$0xff] %vm1685, 0
  %1693 = vst.msk [vmem:[#allocation2 + $0x38] sm:$0xff] %vm1685, 0
  %vm1694 = vcmask 62468
  %vm1695 = vmor %vm1694, %vm387
  %1696 = vst.msk [vmem:[#allocation2 + $0x40] sm:$0x33] %vm1695, 0
  %vm1697 = vsmask.f32 256
  %vm1698 = vsmask.f32 4368
  %vm1699 = vmor %vm1697, %vm1698
  %v1701 = vshrl.u32 %v1675, 16
  %v1703 = vrot.slane %v1701, 7
  %v1704 = vshll.u32 %v1675, 16
  %v1706 = vor.u32 %v1703, %v1704
  %v1707 = vrot.slane %v1703, 4
  %v1709 = vshrl.u32 %v1676, 16
  %v1711 = vrot.slane %v1709, 7
  %v1712 = vshll.u32 %v1676, 16
  %v1714 = vor.u32 %v1711, %v1712
  %v1715 = vsel %vm1699, %v1707, %v1714
  %v1716 = vrot.slane %v1711, 4
  %v1718 = vshrl.u32 %v1677, 16
  %v1720 = vrot.slane %v1718, 7
  %v1721 = vshll.u32 %v1677, 16
  %v1723 = vor.u32 %v1720, %v1721
  %v1724 = vsel %vm1699, %v1716, %v1723
  %v1725 = vrot.slane %v1720, 4
  %v1727 = vshrl.u32 %v1678, 16
  %v1729 = vrot.slane %v1727, 7
  %v1730 = vshll.u32 %v1678, 16
  %v1732 = vor.u32 %v1729, %v1730
  %v1733 = vsel %vm1699, %v1725, %v1732
  %v1734 = vrot.slane %v1729, 4
  %1735 = vrot.lane.b32.xlu0 %v1706, 4
  %v1736 = vpop.permute.xlu0 %1735
  %1737 = vrot.lane.b32.xlu0 %v1715, 4
  %v1738 = vpop.permute.xlu0 %1737
  %1739 = vrot.lane.b32.xlu0 %v1724, 4
  %v1740 = vpop.permute.xlu0 %1739
  %1741 = vrot.lane.b32.xlu0 %v1733, 4
  %v1742 = vpop.permute.xlu0 %1741
  %1743 = vrot.lane.b32.xlu0 %v1734, 4
  %v1744 = vpop.permute.xlu0 %1743
  %v1745 = vrot.slane %v1736, 4
  %v1746 = vrot.slane %v1738, 4
  %v1747 = vrot.slane %v1740, 4
  %v1748 = vrot.slane %v1742, 4
  %v1749 = vrot.slane %v1744, 4
  %vm1750 = vcmask 31744
  %v1751 = vsel %vm1750, %v1745, %v1736
  %v1752 = vsel %vm1750, %v1746, %v1738
  %v1753 = vsel %vm1750, %v1747, %v1740
  %v1754 = vsel %vm1750, %v1748, %v1742
  %v1755 = vsel %vm1750, %v1749, %v1744
  %vm1761 = vcmask 1043488
  %vm1762 = vsmask.f32 7938
  %vm1763 = vmand %vm1761, %vm1762
  %vm1764 = vcmask 31748
  %vm1765 = vsmask.f32 7954
  %vm1766 = vmand %vm1764, %vm1765
  %vm1767 = vmor %vm1766, %vm1763
  %v1768 = vld [vmem:[#allocation2] sm:$0xff]
  %v1769 = vsel %vm1767, %v1751, %v1768
  %1770 = vst [vmem:[#allocation2] sm:$0xff] %v1769
  %vm1771 = vcmask 1043488
  %vm1772 = vcmask 31748
  %vm1773 = vmor %vm1772, %vm1771
  %1774 = vst.msk [vmem:[#allocation2 + $0x8] sm:$0xff] %vm1773, %v1752
  %1775 = vst.msk [vmem:[#allocation2 + $0x10] sm:$0xff] %vm1773, %v1753
  %1776 = vst.msk [vmem:[#allocation2 + $0x18] sm:$0xff] %vm1773, %v1754
  %vm1777 = vcmask 1040416
  %vm1778 = vmand %vm1777, %vm1697
  %vm1779 = vcmask 28676
  %vm1780 = vsmask.f32 4352
  %vm1781 = vmand %vm1779, %vm1780
  %vm1782 = vmor %vm1781, %vm1778
  %v1783 = vld [vmem:[#allocation2 + $0x20] sm:$0x11]
  %v1784 = vsel %vm1782, %v1755, %v1783
  %1785 = vst [vmem:[#allocation2 + $0x20] sm:$0x11] %v1784
  %vm1786 = vsmask.f32 1280
  %vm1787 = vsmask.f32 5392
  %vm1788 = vmor %vm1786, %vm1787
  %v1790 = vshrl.u32 %v1679, 16
  %v1792 = vrot.slane %v1790, 6
  %v1793 = vshll.u32 %v1679, 16
  %v1795 = vrot.slane %v1793, 7
  %v1796 = vor.u32 %v1792, %v1795
  %v1797 = vrot.slane %v1796, 4
  %v1799 = vshrl.u32 %v1680, 16
  %v1801 = vrot.slane %v1799, 6
  %v1802 = vshll.u32 %v1680, 16
  %v1804 = vrot.slane %v1802, 7
  %v1805 = vor.u32 %v1801, %v1804
  %v1806 = vsel %vm1788, %v1797, %v1805
  %v1807 = vrot.slane %v1805, 4
  %v1809 = vshrl.u32 %v1681, 16
  %v1811 = vrot.slane %v1809, 6
  %v1812 = vshll.u32 %v1681, 16
  %v1814 = vrot.slane %v1812, 7
  %v1815 = vor.u32 %v1811, %v1814
  %v1816 = vsel %vm1788, %v1807, %v1815
  %v1817 = vrot.slane %v1815, 4
  %v1819 = vshrl.u32 %v1682, 16
  %v1821 = vrot.slane %v1819, 6
  %v1822 = vshll.u32 %v1682, 16
  %v1824 = vrot.slane %v1822, 7
  %v1825 = vor.u32 %v1821, %v1824
  %v1826 = vsel %vm1788, %v1817, %v1825
  %v1827 = vrot.slane %v1825, 4
  %1828 = vrot.lane.b32.xlu0 %v1796, 4
  %v1829 = vpop.permute.xlu0 %1828
  %1830 = vrot.lane.b32.xlu0 %v1806, 4
  %v1831 = vpop.permute.xlu0 %1830
  %1832 = vrot.lane.b32.xlu0 %v1816, 4
  %v1833 = vpop.permute.xlu0 %1832
  %1834 = vrot.lane.b32.xlu0 %v1826, 4
  %v1835 = vpop.permute.xlu0 %1834
  %1836 = vrot.lane.b32.xlu0 %v1827, 4
  %v1837 = vpop.permute.xlu0 %1836
  %v1838 = vrot.slane %v1829, 4
  %v1839 = vrot.slane %v1831, 4
  %v1840 = vrot.slane %v1833, 4
  %v1841 = vrot.slane %v1835, 4
  %v1842 = vrot.slane %v1837, 4
  %v1843 = vsel %vm1750, %v1838, %v1829
  %v1844 = vsel %vm1750, %v1839, %v1831
  %v1845 = vsel %vm1750, %v1840, %v1833
  %v1846 = vsel %vm1750, %v1841, %v1835
  %v1847 = vsel %vm1750, %v1842, %v1837
  %vm1853 = vcmask 1043489
  %vm1854 = vsmask.f32 7942
  %vm1855 = vmand %vm1853, %vm1854
  %vm1856 = vcmask 31749
  %vm1857 = vsmask.f32 7958
  %vm1858 = vmand %vm1856, %vm1857
  %vm1859 = vmor %vm1858, %vm1855
  %v1860 = vld [vmem:[#allocation2 + $0x20] sm:$0xee]
  %v1861 = vsel %vm1859, %v1843, %v1860
  %1862 = vst [vmem:[#allocation2 + $0x20] sm:$0xee] %v1861
  %1863 = vst.msk [vmem:[#allocation2 + $0x28] sm:$0xff] %vm1773, %v1844
  %1864 = vst.msk [vmem:[#allocation2 + $0x30] sm:$0xff] %vm1773, %v1845
  %1865 = vst.msk [vmem:[#allocation2 + $0x38] sm:$0xff] %vm1773, %v1846
  %vm1866 = vcmask 1041440
  %vm1867 = vmand %vm1866, %vm1786
  %vm1868 = vcmask 29700
  %vm1869 = vsmask.f32 5376
  %vm1870 = vmand %vm1868, %vm1869
  %vm1871 = vmor %vm1870, %vm1867
  %v1872 = vld [vmem:[#allocation2 + $0x40] sm:$0x33]
  %v1873 = vsel %vm1871, %v1847, %v1872
  %1874 = vst [vmem:[#allocation2 + $0x40] sm:$0x33] %v1873
  %v1875 = vld [vmem:[#allocation2] sm:$0xff]
  %v1876 = vld [vmem:[#allocation2 + $0x8] sm:$0xff]
  %v1877 = vld [vmem:[#allocation2 + $0x10] sm:$0xff]
  %v1878 = vld [vmem:[#allocation2 + $0x18] sm:$0xff]
  %v1879 = vld [vmem:[#allocation2 + $0x20] sm:$0xff]
  %v1880 = vld [vmem:[#allocation2 + $0x28] sm:$0xff]
  %v1881 = vld [vmem:[#allocation2 + $0x30] sm:$0xff]
  %v1882 = vld [vmem:[#allocation2 + $0x38] sm:$0xff]
  %v1883 = vld [vmem:[#allocation2 + $0x40] sm:$0x33]
  %v1884 = vld [vmem:[%s4] sm:$0xf]
  %v1885 = vld [vmem:[%s4 + $0x4] sm:$0xf]
  %v1886 = vld [vmem:[%s4 + $0x8] sm:$0xf]
  %v1887 = vld [vmem:[%s4 + $0xc] sm:$0xf]
  %v1888 = vld [vmem:[%s4 + $0x10] sm:$0xf]
  %v1889 = vld [vmem:[%s4 + $0x14] sm:$0xf]
  %v1890 = vld [vmem:[%s4 + $0x18] sm:$0xf]
  %v1891 = vld [vmem:[%s4 + $0x1c] sm:$0xf]
  %v1892 = vld [vmem:[%s4 + $0x20] sm:$0xf]
  %v1893 = vld [vmem:[%s4 + $0x24] sm:$0xf]
  %v1894 = vld [vmem:[%s4 + $0x28] sm:$0xf]
  %v1895 = vld [vmem:[%s4 + $0x2c] sm:$0xf]
  %v1896 = vld [vmem:[%s4 + $0x30] sm:$0xf]
  %v1897 = vld [vmem:[%s4 + $0x34] sm:$0xf]
  %v1898 = vld [vmem:[%s4 + $0x38] sm:$0xf]
  %v1899 = vld [vmem:[%s4 + $0x3c] sm:$0xf]
  %v1916 = vunpack.c.l.b16 %v1884
  %v1917 = vunpack.c.l.b16 %v1885
  %v1918 = vunpack.c.l.b16 %v1886
  %v1919 = vunpack.c.l.b16 %v1887
  %v1920 = vunpack.c.l.b16 %v1888
  %v1921 = vunpack.c.l.b16 %v1889
  %v1922 = vunpack.c.l.b16 %v1890
  %v1923 = vunpack.c.l.b16 %v1891
  %v1924 = vunpack.c.l.b16 %v1892
  %v1925 = vunpack.c.l.b16 %v1893
  %v1926 = vunpack.c.l.b16 %v1894
  %v1927 = vunpack.c.l.b16 %v1895
  %v1928 = vunpack.c.l.b16 %v1896
  %v1929 = vunpack.c.l.b16 %v1897
  %v1930 = vunpack.c.l.b16 %v1898
  %v1931 = vunpack.c.l.b16 %v1899
  %v1932 = vpack.c.b16 %v1917, %v1916
  %v1933 = vpack.c.b16 %v1919, %v1918
  %v1934 = vpack.c.b16 %v1921, %v1920
  %v1935 = vpack.c.b16 %v1923, %v1922
  %v1936 = vpack.c.b16 %v1925, %v1924
  %v1937 = vpack.c.b16 %v1927, %v1926
  %v1938 = vpack.c.b16 %v1929, %v1928
  %v1939 = vpack.c.b16 %v1931, %v1930
  %v1949 = vunpack.c.l.b16 %v1875
  %v1950 = vunpack.c.h.b16 %v1875
  %v1951 = vunpack.c.l.b16 %v1876
  %v1952 = vunpack.c.h.b16 %v1876
  %v1953 = vunpack.c.l.b16 %v1877
  %v1954 = vunpack.c.h.b16 %v1877
  %v1955 = vunpack.c.l.b16 %v1878
  %v1956 = vunpack.c.h.b16 %v1878
  %v1957 = vunpack.c.l.b16 %v1879
  %v1958 = vunpack.c.h.b16 %v1879
  %v1959 = vunpack.c.l.b16 %v1880
  %v1960 = vunpack.c.h.b16 %v1880
  %v1961 = vunpack.c.l.b16 %v1881
  %v1962 = vunpack.c.h.b16 %v1881
  %v1963 = vunpack.c.l.b16 %v1882
  %v1964 = vunpack.c.h.b16 %v1882
  %v1965 = vunpack.c.l.b16 %v1883
  %v1966 = vunpack.c.h.b16 %v1883
  %v1967 = vpack.c.b16 %v1951, %v1949
  %v1968 = vpack.c.b16 %v1952, %v1950
  %v1969 = vpack.c.b16 %v1955, %v1953
  %v1970 = vpack.c.b16 %v1956, %v1954
  %v1971 = vpack.c.b16 %v1959, %v1957
  %v1972 = vpack.c.b16 %v1960, %v1958
  %v1973 = vpack.c.b16 %v1963, %v1961
  %v1974 = vpack.c.b16 %v1964, %v1962
  %v1975 = vpack.c.b16 %v1965, %v1965
  %v1976 = vpack.c.b16 %v1966, %v1966
  %vm1985 = vcmask 556032
  %v1987 = vsel %vm1985, %v1932, 0
  %v1990 = vsel %vm1985, %v1933, 0
  %v1993 = vsel %vm1985, %v1934, 0
  %v1996 = vsel %vm1985, %v1935, 0
  %v1999 = vsel %vm1985, %v1936, 0
  %v2002 = vsel %vm1985, %v1937, 0
  %v2005 = vsel %vm1985, %v1938, 0
  %v2008 = vsel %vm1985, %v1939, 0
  %v2011 = vsel %vm387, %v1975, 0
  %v2014 = vsel %vm387, %v1976, 0
  %2016 = vmatpush.bf16.msra.mxu0 0
  %2017 = vmatpush.bf16.msra.mxu0 0
  %2018 = vmatpush.bf16.msra.mxu0 0
  %2019 = vmatpush.bf16.msra.mxu0 %v2011
  %2020 = vmatpush.bf16.msra.mxu0 %v1973
  %2021 = vmatpush.bf16.msra.mxu0 %v1971
  %2022 = vmatpush.bf16.msra.mxu0 %v1969
  %2023 = vmatpush.bf16.msra.mxu0 %v1967
  %2024 = vmatmul.bf16.gmra.mxu0 %v1987
  %v2025 = vpop.f32.mrf.mxu0
  %v2026 = vadd.f32 0.0, %v2025
  %v2027 = vpop.f32.mrf.mxu0
  %v2028 = vadd.f32 0.0, %v2027
  %2029 = vmatmul.bf16.gmra.mxu0 %v1990
  %v2030 = vpop.f32.mrf.mxu0
  %v2031 = vadd.f32 0.0, %v2030
  %v2032 = vpop.f32.mrf.mxu0
  %v2033 = vadd.f32 0.0, %v2032
  %2034 = vmatmul.bf16.gmra.mxu0 %v1993
  %v2035 = vpop.f32.mrf.mxu0
  %v2036 = vadd.f32 0.0, %v2035
  %v2037 = vpop.f32.mrf.mxu0
  %v2038 = vadd.f32 0.0, %v2037
  %2039 = vmatmul.bf16.gmra.mxu0 %v1996
  %v2040 = vpop.f32.mrf.mxu0
  %v2041 = vadd.f32 0.0, %v2040
  %v2042 = vpop.f32.mrf.mxu0
  %v2043 = vadd.f32 0.0, %v2042
  %2044 = vmatmul.bf16.gmra.mxu0 %v1999
  %v2045 = vpop.f32.mrf.mxu0
  %v2046 = vadd.f32 0.0, %v2045
  %v2047 = vpop.f32.mrf.mxu0
  %v2048 = vadd.f32 0.0, %v2047
  %2049 = vmatmul.bf16.gmra.mxu0 %v2002
  %v2050 = vpop.f32.mrf.mxu0
  %v2051 = vadd.f32 0.0, %v2050
  %v2052 = vpop.f32.mrf.mxu0
  %v2053 = vadd.f32 0.0, %v2052
  %2054 = vmatmul.bf16.gmra.mxu0 %v2005
  %v2055 = vpop.f32.mrf.mxu0
  %v2056 = vadd.f32 0.0, %v2055
  %v2057 = vpop.f32.mrf.mxu0
  %v2058 = vadd.f32 0.0, %v2057
  %2059 = vmatmul.bf16.gmra.mxu0 %v2008
  %v2060 = vpop.f32.mrf.mxu0
  %v2061 = vadd.f32 0.0, %v2060
  %v2062 = vpop.f32.mrf.mxu0
  %v2063 = vadd.f32 0.0, %v2062
  %2064 = vdwg.mxu0
  %2065 = vmatpush.bf16.msra.mxu0 0
  %2066 = vmatpush.bf16.msra.mxu0 0
  %2067 = vmatpush.bf16.msra.mxu0 0
  %2068 = vmatpush.bf16.msra.mxu0 %v2014
  %2069 = vmatpush.bf16.msra.mxu0 %v1974
  %2070 = vmatpush.bf16.msra.mxu0 %v1972
  %2071 = vmatpush.bf16.msra.mxu0 %v1970
  %2072 = vmatpush.bf16.msra.mxu0 %v1968
  %2073 = vmatmul.bf16.gmra.mxu0 %v1987
  %v2074 = vpop.f32.mrf.mxu0
  %v2075 = vadd.f32 0.0, %v2074
  %v2076 = vpop.f32.mrf.mxu0
  %v2077 = vadd.f32 0.0, %v2076
  %2078 = vmatmul.bf16.gmra.mxu0 %v1990
  %v2079 = vpop.f32.mrf.mxu0
  %v2080 = vadd.f32 0.0, %v2079
  %v2081 = vpop.f32.mrf.mxu0
  %v2082 = vadd.f32 0.0, %v2081
  %2083 = vmatmul.bf16.gmra.mxu0 %v1993
  %v2084 = vpop.f32.mrf.mxu0
  %v2085 = vadd.f32 0.0, %v2084
  %v2086 = vpop.f32.mrf.mxu0
  %v2087 = vadd.f32 0.0, %v2086
  %2088 = vmatmul.bf16.gmra.mxu0 %v1996
  %v2089 = vpop.f32.mrf.mxu0
  %v2090 = vadd.f32 0.0, %v2089
  %v2091 = vpop.f32.mrf.mxu0
  %v2092 = vadd.f32 0.0, %v2091
  %2093 = vmatmul.bf16.gmra.mxu0 %v1999
  %v2094 = vpop.f32.mrf.mxu0
  %v2095 = vadd.f32 0.0, %v2094
  %v2096 = vpop.f32.mrf.mxu0
  %v2097 = vadd.f32 0.0, %v2096
  %2098 = vmatmul.bf16.gmra.mxu0 %v2002
  %v2099 = vpop.f32.mrf.mxu0
  %v2100 = vadd.f32 0.0, %v2099
  %v2101 = vpop.f32.mrf.mxu0
  %v2102 = vadd.f32 0.0, %v2101
  %2103 = vmatmul.bf16.gmra.mxu0 %v2005
  %v2104 = vpop.f32.mrf.mxu0
  %v2105 = vadd.f32 0.0, %v2104
  %v2106 = vpop.f32.mrf.mxu0
  %v2107 = vadd.f32 0.0, %v2106
  %2108 = vmatmul.bf16.gmra.mxu0 %v2008
  %v2109 = vpop.f32.mrf.mxu0
  %v2110 = vadd.f32 0.0, %v2109
  %v2111 = vpop.f32.mrf.mxu0
  %v2112 = vadd.f32 0.0, %v2111
  %2113 = vdwg.mxu0
  %v2114 = vpack.c.bf16 %v2075, %v2026
  %v2115 = vpack.c.bf16 %v2077, %v2028
  %v2116 = vpack.c.bf16 %v2080, %v2031
  %v2117 = vpack.c.bf16 %v2082, %v2033
  %v2118 = vpack.c.bf16 %v2085, %v2036
  %v2119 = vpack.c.bf16 %v2087, %v2038
  %v2120 = vpack.c.bf16 %v2090, %v2041
  %v2121 = vpack.c.bf16 %v2092, %v2043
  %v2122 = vpack.c.bf16 %v2095, %v2046
  %v2123 = vpack.c.bf16 %v2097, %v2048
  %v2124 = vpack.c.bf16 %v2100, %v2051
  %v2125 = vpack.c.bf16 %v2102, %v2053
  %v2126 = vpack.c.bf16 %v2105, %v2056
  %v2127 = vpack.c.bf16 %v2107, %v2058
  %v2128 = vpack.c.bf16 %v2110, %v2061
  %v2129 = vpack.c.bf16 %v2112, %v2063
  %v2130 = vld [vmem:[%s5] sm:$0xf]
  %v2131 = vld [vmem:[%s5 + $0x4] sm:$0xf]
  %v2132 = vld [vmem:[%s5 + $0x8] sm:$0xf]
  %v2133 = vld [vmem:[%s5 + $0xc] sm:$0xf]
  %v2134 = vld [vmem:[%s5 + $0x10] sm:$0xf]
  %v2135 = vld [vmem:[%s5 + $0x14] sm:$0xf]
  %v2136 = vld [vmem:[%s5 + $0x18] sm:$0xf]
  %v2137 = vld [vmem:[%s5 + $0x1c] sm:$0xf]
  %v2138 = vld [vmem:[%s5 + $0x20] sm:$0xf]
  %v2139 = vld [vmem:[%s5 + $0x24] sm:$0xf]
  %v2140 = vld [vmem:[%s5 + $0x28] sm:$0xf]
  %v2141 = vld [vmem:[%s5 + $0x2c] sm:$0xf]
  %v2142 = vld [vmem:[%s5 + $0x30] sm:$0xf]
  %v2143 = vld [vmem:[%s5 + $0x34] sm:$0xf]
  %v2144 = vld [vmem:[%s5 + $0x38] sm:$0xf]
  %v2145 = vld [vmem:[%s5 + $0x3c] sm:$0xf]
  %v2146 = vld [vmem:[%s5 + $0x40] sm:$0xf]
  %s2147 = scalar_lea.vmem %s5, 68
  %v2148 = vld [vmem:[%s2147] sm:$0xf]
  %v2149 = vld [vmem:[%s2147 + $0x4] sm:$0xf]
  %v2150 = vld [vmem:[%s2147 + $0x8] sm:$0xf]
  %v2151 = vld [vmem:[%s2147 + $0xc] sm:$0xf]
  %v2152 = vld [vmem:[%s2147 + $0x10] sm:$0xf]
  %v2153 = vld [vmem:[%s2147 + $0x14] sm:$0xf]
  %v2154 = vld [vmem:[%s2147 + $0x18] sm:$0xf]
  %v2155 = vld [vmem:[%s2147 + $0x1c] sm:$0xf]
  %v2156 = vld [vmem:[%s2147 + $0x20] sm:$0xf]
  %v2157 = vld [vmem:[%s2147 + $0x24] sm:$0xf]
  %v2158 = vld [vmem:[%s2147 + $0x28] sm:$0xf]
  %v2159 = vld [vmem:[%s2147 + $0x2c] sm:$0xf]
  %v2160 = vld [vmem:[%s2147 + $0x30] sm:$0xf]
  %v2161 = vld [vmem:[%s2147 + $0x34] sm:$0xf]
  %v2162 = vld [vmem:[%s2147 + $0x38] sm:$0xf]
  %v2163 = vld [vmem:[%s2147 + $0x3c] sm:$0xf]
  %v2164 = vld [vmem:[%s2147 + $0x40] sm:$0xf]
  %v2169 = vunpack.c.l.b16 %v2118
  %v2170 = vunpack.c.h.b16 %v2118
  %v2171 = vunpack.c.l.b16 %v2119
  %v2172 = vunpack.c.h.b16 %v2119
  %v2173 = vunpack.c.l.b16 %v2120
  %v2174 = vunpack.c.h.b16 %v2120
  %v2175 = vunpack.c.l.b16 %v2121
  %v2176 = vunpack.c.h.b16 %v2121
  %v2177 = vpack.c.b16 %v2171, %v2169
  %v2178 = vpack.c.b16 %v2172, %v2170
  %v2179 = vpack.c.b16 %v2175, %v2173
  %v2180 = vpack.c.b16 %v2176, %v2174
  %v2200 = vunpack.c.l.b16 %v2148
  %v2201 = vunpack.c.l.b16 %v2149
  %v2202 = vunpack.c.l.b16 %v2150
  %v2203 = vunpack.c.l.b16 %v2151
  %v2204 = vunpack.c.l.b16 %v2152
  %v2205 = vunpack.c.l.b16 %v2153
  %v2206 = vunpack.c.l.b16 %v2154
  %v2207 = vunpack.c.l.b16 %v2155
  %v2208 = vunpack.c.l.b16 %v2156
  %v2209 = vunpack.c.l.b16 %v2157
  %v2210 = vunpack.c.l.b16 %v2158
  %v2211 = vunpack.c.l.b16 %v2159
  %v2212 = vunpack.c.l.b16 %v2160
  %v2213 = vunpack.c.l.b16 %v2161
  %v2214 = vunpack.c.l.b16 %v2162
  %v2215 = vunpack.c.l.b16 %v2163
  %v2216 = vunpack.c.l.b16 %v2164
  %v2217 = vpack.c.b16 %v2201, %v2200
  %v2218 = vpack.c.b16 %v2203, %v2202
  %v2219 = vpack.c.b16 %v2205, %v2204
  %v2220 = vpack.c.b16 %v2207, %v2206
  %v2221 = vpack.c.b16 %v2209, %v2208
  %v2222 = vpack.c.b16 %v2211, %v2210
  %v2223 = vpack.c.b16 %v2213, %v2212
  %v2224 = vpack.c.b16 %v2215, %v2214
  %v2225 = vpack.c.b16 %v2216, %v2216
  %vm2234 = vcmask 64512
  %v2236 = vsel %vm2234, %v2178, 0
  %v2239 = vsel %vm2234, %v2180, 0
  %v2242 = vsel %vm1683, %v2225, 0
  %2244 = vmatpush.bf16.msra.mxu0 %v2224
  %2245 = vmatpush.bf16.msra.mxu0 %v2223
  %2246 = vmatpush.bf16.msra.mxu0 %v2222
  %2247 = vmatpush.bf16.msra.mxu0 %v2221
  %2248 = vmatpush.bf16.msra.mxu0 %v2220
  %2249 = vmatpush.bf16.msra.mxu0 %v2219
  %2250 = vmatpush.bf16.msra.mxu0 %v2218
  %2251 = vmatpush.bf16.msra.mxu0 %v2217
  %2252 = vmatmul.bf16.gmra.mxu0 %v2177
  %v2253 = vpop.f32.mrf.mxu0
  %v2254 = vadd.f32 0.0, %v2253
  %v2255 = vpop.f32.mrf.mxu0
  %v2256 = vadd.f32 0.0, %v2255
  %2257 = vmatmul.bf16.gmra.mxu0 %v2179
  %v2258 = vpop.f32.mrf.mxu0
  %v2259 = vadd.f32 0.0, %v2258
  %v2260 = vpop.f32.mrf.mxu0
  %v2261 = vadd.f32 0.0, %v2260
  %2262 = vdwg.mxu0
  %2263 = vmatpush.bf16.msra.mxu0 0
  %2264 = vmatpush.bf16.msra.mxu0 0
  %2265 = vmatpush.bf16.msra.mxu0 0
  %2266 = vmatpush.bf16.msra.mxu0 0
  %2267 = vmatpush.bf16.msra.mxu0 0
  %2268 = vmatpush.bf16.msra.mxu0 0
  %2269 = vmatpush.bf16.msra.mxu0 0
  %2270 = vmatpush.bf16.msra.mxu0 %v2242
  %2271 = vmatmul.bf16.gmra.mxu0 %v2236
  %v2272 = vpop.f32.mrf.mxu0
  %v2273 = vadd.f32 %v2254, %v2272
  %v2274 = vpop.f32.mrf.mxu0
  %v2275 = vadd.f32 %v2256, %v2274
  %2276 = vmatmul.bf16.gmra.mxu0 %v2239
  %v2277 = vpop.f32.mrf.mxu0
  %v2278 = vadd.f32 %v2259, %v2277
  %v2279 = vpop.f32.mrf.mxu0
  %v2280 = vadd.f32 %v2261, %v2279
  %2281 = vdwg.mxu0
  %v2286 = vunpack.c.l.b16 %v2114
  %v2287 = vunpack.c.h.b16 %v2114
  %v2288 = vunpack.c.l.b16 %v2115
  %v2289 = vunpack.c.h.b16 %v2115
  %v2290 = vunpack.c.l.b16 %v2116
  %v2291 = vunpack.c.h.b16 %v2116
  %v2292 = vunpack.c.l.b16 %v2117
  %v2293 = vunpack.c.h.b16 %v2117
  %v2294 = vpack.c.b16 %v2288, %v2286
  %v2295 = vpack.c.b16 %v2289, %v2287
  %v2296 = vpack.c.b16 %v2292, %v2290
  %v2297 = vpack.c.b16 %v2293, %v2291
  %v2317 = vunpack.c.l.b16 %v2130
  %v2318 = vunpack.c.l.b16 %v2131
  %v2319 = vunpack.c.l.b16 %v2132
  %v2320 = vunpack.c.l.b16 %v2133
  %v2321 = vunpack.c.l.b16 %v2134
  %v2322 = vunpack.c.l.b16 %v2135
  %v2323 = vunpack.c.l.b16 %v2136
  %v2324 = vunpack.c.l.b16 %v2137
  %v2325 = vunpack.c.l.b16 %v2138
  %v2326 = vunpack.c.l.b16 %v2139
  %v2327 = vunpack.c.l.b16 %v2140
  %v2328 = vunpack.c.l.b16 %v2141
  %v2329 = vunpack.c.l.b16 %v2142
  %v2330 = vunpack.c.l.b16 %v2143
  %v2331 = vunpack.c.l.b16 %v2144
  %v2332 = vunpack.c.l.b16 %v2145
  %v2333 = vunpack.c.l.b16 %v2146
  %v2334 = vpack.c.b16 %v2318, %v2317
  %v2335 = vpack.c.b16 %v2320, %v2319
  %v2336 = vpack.c.b16 %v2322, %v2321
  %v2337 = vpack.c.b16 %v2324, %v2323
  %v2338 = vpack.c.b16 %v2326, %v2325
  %v2339 = vpack.c.b16 %v2328, %v2327
  %v2340 = vpack.c.b16 %v2330, %v2329
  %v2341 = vpack.c.b16 %v2332, %v2331
  %v2342 = vpack.c.b16 %v2333, %v2333
  %v2352 = vsel %vm2234, %v2295, 0
  %v2355 = vsel %vm2234, %v2297, 0
  %v2358 = vsel %vm1683, %v2342, 0
  %2360 = vmatpush.bf16.msra.mxu0 %v2341
  %2361 = vmatpush.bf16.msra.mxu0 %v2340
  %2362 = vmatpush.bf16.msra.mxu0 %v2339
  %2363 = vmatpush.bf16.msra.mxu0 %v2338
  %2364 = vmatpush.bf16.msra.mxu0 %v2337
  %2365 = vmatpush.bf16.msra.mxu0 %v2336
  %2366 = vmatpush.bf16.msra.mxu0 %v2335
  %2367 = vmatpush.bf16.msra.mxu0 %v2334
  %2368 = vmatmul.bf16.gmra.mxu0 %v2294
  %v2369 = vpop.f32.mrf.mxu0
  %v2370 = vadd.f32 %v2273, %v2369
  %v2371 = vpop.f32.mrf.mxu0
  %v2372 = vadd.f32 %v2275, %v2371
  %2373 = vmatmul.bf16.gmra.mxu0 %v2296
  %v2374 = vpop.f32.mrf.mxu0
  %v2375 = vadd.f32 %v2278, %v2374
  %v2376 = vpop.f32.mrf.mxu0
  %v2377 = vadd.f32 %v2280, %v2376
  %2378 = vdwg.mxu0
  %2379 = vmatpush.bf16.msra.mxu0 0
  %2380 = vmatpush.bf16.msra.mxu0 0
  %2381 = vmatpush.bf16.msra.mxu0 0
  %2382 = vmatpush.bf16.msra.mxu0 0
  %2383 = vmatpush.bf16.msra.mxu0 0
  %2384 = vmatpush.bf16.msra.mxu0 0
  %2385 = vmatpush.bf16.msra.mxu0 0
  %2386 = vmatpush.bf16.msra.mxu0 %v2358
  %2387 = vmatmul.bf16.gmra.mxu0 %v2352
  %v2388 = vpop.f32.mrf.mxu0
  %v2389 = vadd.f32 %v2370, %v2388
  %v2390 = vpop.f32.mrf.mxu0
  %v2391 = vadd.f32 %v2372, %v2390
  %2392 = vmatmul.bf16.gmra.mxu0 %v2355
  %v2393 = vpop.f32.mrf.mxu0
  %v2394 = vadd.f32 %v2375, %v2393
  %v2395 = vpop.f32.mrf.mxu0
  %v2396 = vadd.f32 %v2377, %v2395
  %2397 = vdwg.mxu0
  %s2398 = scalar_lea.vmem %s5, 136
  %v2399 = vld [vmem:[%s2398] sm:$0xf]
  %v2400 = vld [vmem:[%s2398 + $0x4] sm:$0xf]
  %v2401 = vld [vmem:[%s2398 + $0x8] sm:$0xf]
  %v2402 = vld [vmem:[%s2398 + $0xc] sm:$0xf]
  %v2403 = vld [vmem:[%s2398 + $0x10] sm:$0xf]
  %v2404 = vld [vmem:[%s2398 + $0x14] sm:$0xf]
  %v2405 = vld [vmem:[%s2398 + $0x18] sm:$0xf]
  %v2406 = vld [vmem:[%s2398 + $0x1c] sm:$0xf]
  %v2407 = vld [vmem:[%s2398 + $0x20] sm:$0xf]
  %v2408 = vld [vmem:[%s2398 + $0x24] sm:$0xf]
  %v2409 = vld [vmem:[%s2398 + $0x28] sm:$0xf]
  %v2410 = vld [vmem:[%s2398 + $0x2c] sm:$0xf]
  %v2411 = vld [vmem:[%s2398 + $0x30] sm:$0xf]
  %v2412 = vld [vmem:[%s2398 + $0x34] sm:$0xf]
  %v2413 = vld [vmem:[%s2398 + $0x38] sm:$0xf]
  %v2414 = vld [vmem:[%s2398 + $0x3c] sm:$0xf]
  %v2415 = vld [vmem:[%s2398 + $0x40] sm:$0xf]
  %v2420 = vunpack.c.l.b16 %v2122
  %v2421 = vunpack.c.h.b16 %v2122
  %v2422 = vunpack.c.l.b16 %v2123
  %v2423 = vunpack.c.h.b16 %v2123
  %v2424 = vunpack.c.l.b16 %v2124
  %v2425 = vunpack.c.h.b16 %v2124
  %v2426 = vunpack.c.l.b16 %v2125
  %v2427 = vunpack.c.h.b16 %v2125
  %v2428 = vpack.c.b16 %v2422, %v2420
  %v2429 = vpack.c.b16 %v2423, %v2421
  %v2430 = vpack.c.b16 %v2426, %v2424
  %v2431 = vpack.c.b16 %v2427, %v2425
  %v2451 = vunpack.c.l.b16 %v2399
  %v2452 = vunpack.c.l.b16 %v2400
  %v2453 = vunpack.c.l.b16 %v2401
  %v2454 = vunpack.c.l.b16 %v2402
  %v2455 = vunpack.c.l.b16 %v2403
  %v2456 = vunpack.c.l.b16 %v2404
  %v2457 = vunpack.c.l.b16 %v2405
  %v2458 = vunpack.c.l.b16 %v2406
  %v2459 = vunpack.c.l.b16 %v2407
  %v2460 = vunpack.c.l.b16 %v2408
  %v2461 = vunpack.c.l.b16 %v2409
  %v2462 = vunpack.c.l.b16 %v2410
  %v2463 = vunpack.c.l.b16 %v2411
  %v2464 = vunpack.c.l.b16 %v2412
  %v2465 = vunpack.c.l.b16 %v2413
  %v2466 = vunpack.c.l.b16 %v2414
  %v2467 = vunpack.c.l.b16 %v2415
  %v2468 = vpack.c.b16 %v2452, %v2451
  %v2469 = vpack.c.b16 %v2454, %v2453
  %v2470 = vpack.c.b16 %v2456, %v2455
  %v2471 = vpack.c.b16 %v2458, %v2457
  %v2472 = vpack.c.b16 %v2460, %v2459
  %v2473 = vpack.c.b16 %v2462, %v2461
  %v2474 = vpack.c.b16 %v2464, %v2463
  %v2475 = vpack.c.b16 %v2466, %v2465
  %v2476 = vpack.c.b16 %v2467, %v2467
  %v2486 = vsel %vm2234, %v2429, 0
  %v2489 = vsel %vm2234, %v2431, 0
  %v2492 = vsel %vm1683, %v2476, 0
  %2494 = vmatpush.bf16.msra.mxu0 %v2475
  %2495 = vmatpush.bf16.msra.mxu0 %v2474
  %2496 = vmatpush.bf16.msra.mxu0 %v2473
  %2497 = vmatpush.bf16.msra.mxu0 %v2472
  %2498 = vmatpush.bf16.msra.mxu0 %v2471
  %2499 = vmatpush.bf16.msra.mxu0 %v2470
  %2500 = vmatpush.bf16.msra.mxu0 %v2469
  %2501 = vmatpush.bf16.msra.mxu0 %v2468
  %2502 = vmatmul.bf16.gmra.mxu0 %v2428
  %v2503 = vpop.f32.mrf.mxu0
  %v2504 = vadd.f32 0.0, %v2503
  %v2505 = vpop.f32.mrf.mxu0
  %v2506 = vadd.f32 0.0, %v2505
  %2507 = vmatmul.bf16.gmra.mxu0 %v2430
  %v2508 = vpop.f32.mrf.mxu0
  %v2509 = vadd.f32 0.0, %v2508
  %v2510 = vpop.f32.mrf.mxu0
  %v2511 = vadd.f32 0.0, %v2510
  %2512 = vdwg.mxu0
  %2513 = vmatpush.bf16.msra.mxu0 0
  %2514 = vmatpush.bf16.msra.mxu0 0
  %2515 = vmatpush.bf16.msra.mxu0 0
  %2516 = vmatpush.bf16.msra.mxu0 0
  %2517 = vmatpush.bf16.msra.mxu0 0
  %2518 = vmatpush.bf16.msra.mxu0 0
  %2519 = vmatpush.bf16.msra.mxu0 0
  %2520 = vmatpush.bf16.msra.mxu0 %v2492
  %2521 = vmatmul.bf16.gmra.mxu0 %v2486
  %v2522 = vpop.f32.mrf.mxu0
  %v2523 = vadd.f32 %v2504, %v2522
  %v2524 = vpop.f32.mrf.mxu0
  %v2525 = vadd.f32 %v2506, %v2524
  %2526 = vmatmul.bf16.gmra.mxu0 %v2489
  %v2527 = vpop.f32.mrf.mxu0
  %v2528 = vadd.f32 %v2509, %v2527
  %v2529 = vpop.f32.mrf.mxu0
  %v2530 = vadd.f32 %v2511, %v2529
  %2531 = vdwg.mxu0
  %v2532 = vadd.f32 %v2389, %v2523
  %v2533 = vadd.f32 %v2391, %v2525
  %v2534 = vadd.f32 %v2394, %v2528
  %v2535 = vadd.f32 %v2396, %v2530
  %s2536 = scalar_lea.vmem %s5, 204
  %v2537 = vld [vmem:[%s2536] sm:$0xf]
  %v2538 = vld [vmem:[%s2536 + $0x4] sm:$0xf]
  %v2539 = vld [vmem:[%s2536 + $0x8] sm:$0xf]
  %v2540 = vld [vmem:[%s2536 + $0xc] sm:$0xf]
  %v2541 = vld [vmem:[%s2536 + $0x10] sm:$0xf]
  %v2542 = vld [vmem:[%s2536 + $0x14] sm:$0xf]
  %v2543 = vld [vmem:[%s2536 + $0x18] sm:$0xf]
  %v2544 = vld [vmem:[%s2536 + $0x1c] sm:$0xf]
  %v2545 = vld [vmem:[%s2536 + $0x20] sm:$0xf]
  %v2546 = vld [vmem:[%s2536 + $0x24] sm:$0xf]
  %v2547 = vld [vmem:[%s2536 + $0x28] sm:$0xf]
  %v2548 = vld [vmem:[%s2536 + $0x2c] sm:$0xf]
  %v2549 = vld [vmem:[%s2536 + $0x30] sm:$0xf]
  %v2550 = vld [vmem:[%s2536 + $0x34] sm:$0xf]
  %v2551 = vld [vmem:[%s2536 + $0x38] sm:$0xf]
  %v2552 = vld [vmem:[%s2536 + $0x3c] sm:$0xf]
  %v2553 = vld [vmem:[%s2536 + $0x40] sm:$0xf]
  %v2558 = vunpack.c.l.b16 %v2126
  %v2559 = vunpack.c.h.b16 %v2126
  %v2560 = vunpack.c.l.b16 %v2127
  %v2561 = vunpack.c.h.b16 %v2127
  %v2562 = vunpack.c.l.b16 %v2128
  %v2563 = vunpack.c.h.b16 %v2128
  %v2564 = vunpack.c.l.b16 %v2129
  %v2565 = vunpack.c.h.b16 %v2129
  %v2566 = vpack.c.b16 %v2560, %v2558
  %v2567 = vpack.c.b16 %v2561, %v2559
  %v2568 = vpack.c.b16 %v2564, %v2562
  %v2569 = vpack.c.b16 %v2565, %v2563
  %v2589 = vunpack.c.l.b16 %v2537
  %v2590 = vunpack.c.l.b16 %v2538
  %v2591 = vunpack.c.l.b16 %v2539
  %v2592 = vunpack.c.l.b16 %v2540
  %v2593 = vunpack.c.l.b16 %v2541
  %v2594 = vunpack.c.l.b16 %v2542
  %v2595 = vunpack.c.l.b16 %v2543
  %v2596 = vunpack.c.l.b16 %v2544
  %v2597 = vunpack.c.l.b16 %v2545
  %v2598 = vunpack.c.l.b16 %v2546
  %v2599 = vunpack.c.l.b16 %v2547
  %v2600 = vunpack.c.l.b16 %v2548
  %v2601 = vunpack.c.l.b16 %v2549
  %v2602 = vunpack.c.l.b16 %v2550
  %v2603 = vunpack.c.l.b16 %v2551
  %v2604 = vunpack.c.l.b16 %v2552
  %v2605 = vunpack.c.l.b16 %v2553
  %v2606 = vpack.c.b16 %v2590, %v2589
  %v2607 = vpack.c.b16 %v2592, %v2591
  %v2608 = vpack.c.b16 %v2594, %v2593
  %v2609 = vpack.c.b16 %v2596, %v2595
  %v2610 = vpack.c.b16 %v2598, %v2597
  %v2611 = vpack.c.b16 %v2600, %v2599
  %v2612 = vpack.c.b16 %v2602, %v2601
  %v2613 = vpack.c.b16 %v2604, %v2603
  %v2614 = vpack.c.b16 %v2605, %v2605
  %v2624 = vsel %vm2234, %v2567, 0
  %v2627 = vsel %vm2234, %v2569, 0
  %v2630 = vsel %vm1683, %v2614, 0
  %2632 = vmatpush.bf16.msra.mxu0 %v2613
  %2633 = vmatpush.bf16.msra.mxu0 %v2612
  %2634 = vmatpush.bf16.msra.mxu0 %v2611
  %2635 = vmatpush.bf16.msra.mxu0 %v2610
  %2636 = vmatpush.bf16.msra.mxu0 %v2609
  %2637 = vmatpush.bf16.msra.mxu0 %v2608
  %2638 = vmatpush.bf16.msra.mxu0 %v2607
  %2639 = vmatpush.bf16.msra.mxu0 %v2606
  %2640 = vmatmul.bf16.gmra.mxu0 %v2566
  %v2641 = vpop.f32.mrf.mxu0
  %v2642 = vadd.f32 0.0, %v2641
  %v2643 = vpop.f32.mrf.mxu0
  %v2644 = vadd.f32 0.0, %v2643
  %2645 = vmatmul.bf16.gmra.mxu0 %v2568
  %v2646 = vpop.f32.mrf.mxu0
  %v2647 = vadd.f32 0.0, %v2646
  %v2648 = vpop.f32.mrf.mxu0
  %v2649 = vadd.f32 0.0, %v2648
  %2650 = vdwg.mxu0
  %2651 = vmatpush.bf16.msra.mxu0 0
  %2652 = vmatpush.bf16.msra.mxu0 0
  %2653 = vmatpush.bf16.msra.mxu0 0
  %2654 = vmatpush.bf16.msra.mxu0 0
  %2655 = vmatpush.bf16.msra.mxu0 0
  %2656 = vmatpush.bf16.msra.mxu0 0
  %2657 = vmatpush.bf16.msra.mxu0 0
  %2658 = vmatpush.bf16.msra.mxu0 %v2630
  %2659 = vmatmul.bf16.gmra.mxu0 %v2624
  %v2660 = vpop.f32.mrf.mxu0
  %v2661 = vadd.f32 %v2642, %v2660
  %v2662 = vpop.f32.mrf.mxu0
  %v2663 = vadd.f32 %v2644, %v2662
  %2664 = vmatmul.bf16.gmra.mxu0 %v2627
  %v2665 = vpop.f32.mrf.mxu0
  %v2666 = vadd.f32 %v2647, %v2665
  %v2667 = vpop.f32.mrf.mxu0
  %v2668 = vadd.f32 %v2649, %v2667
  %2669 = vdwg.mxu0
  %v2670 = vadd.f32 %v2532, %v2661
  %v2671 = vadd.f32 %v2533, %v2663
  %v2672 = vadd.f32 %v2534, %v2666
  %v2673 = vadd.f32 %v2535, %v2668
  %v2674 = vld [vmem:[%s6] sm:$0x1]
  %v2676 = vperm.slane %v2674, 0
  %v2678 = vadd.f32 %v2670, %v2676
  %v2679 = vadd.f32 %v2671, %v2676
  %v2680 = vadd.f32 %v2672, %v2676
  %v2681 = vadd.f32 %v2673, %v2676
  %vm2682 = vcmp.ge.f32.partialorder %v2678, 0.0
  %vm2683 = vcmp.ge.f32.partialorder %v2679, 0.0
  %vm2684 = vcmp.ge.f32.partialorder %v2680, 0.0
  %vm2685 = vcmp.ge.f32.partialorder %v2681, 0.0
  %v2686 = vmul.f32 %v2678, 0.01
  %v2687 = vmul.f32 %v2679, 0.01
  %v2688 = vmul.f32 %v2680, 0.01
  %v2689 = vmul.f32 %v2681, 0.01
  %v2690 = vsel %vm2682, %v2678, %v2686
  %v2691 = vsel %vm2683, %v2679, %v2687
  %v2692 = vsel %vm2684, %v2680, %v2688
  %v2693 = vsel %vm2685, %v2681, %v2689
  %v2694 = vpack.c.bf16 %v2690, %v2690
  %v2695 = vpack.c.bf16 %v2691, %v2691
  %v2696 = vpack.c.bf16 %v2692, %v2692
  %v2697 = vpack.c.bf16 %v2693, %v2693
  %vm2698 = vcmask 130052
  %vm2699 = vmor %vm2698, %vm1683
  %2700 = vst.msk [vmem:[#allocation3] sm:$0xff] %vm2699, 0
  %2701 = vst.msk [vmem:[#allocation3 + $0x8] sm:$0xff] %vm2699, 0
  %2702 = vst.msk [vmem:[#allocation3 + $0x10] sm:$0xff] %vm2699, 0
  %2703 = vst.msk [vmem:[#allocation3 + $0x18] sm:$0xff] %vm2699, 0
  %vm2704 = vcmask 128004
  %vm2705 = vmor %vm2704, %vm387
  %2706 = vst.msk [vmem:[#allocation3 + $0x20] sm:$0x33] %vm2705, 0
  %v2708 = vshrl.u32 %v2694, 16
  %v2710 = vrot.slane %v2708, 7
  %v2711 = vshll.u32 %v2694, 16
  %v2713 = vor.u32 %v2710, %v2711
  %v2714 = vrot.slane %v2710, 4
  %v2716 = vshrl.u32 %v2695, 16
  %v2718 = vrot.slane %v2716, 7
  %v2719 = vshll.u32 %v2695, 16
  %v2721 = vor.u32 %v2718, %v2719
  %v2722 = vsel %vm1699, %v2714, %v2721
  %v2723 = vrot.slane %v2718, 4
  %2724 = vrot.lane.b32.xlu0 %v2713, 8
  %v2725 = vpop.permute.xlu0 %2724
  %2726 = vrot.lane.b32.xlu0 %v2722, 8
  %v2727 = vpop.permute.xlu0 %2726
  %2728 = vrot.lane.b32.xlu0 %v2723, 8
  %v2729 = vpop.permute.xlu0 %2728
  %v2730 = vrot.slane %v2725, 4
  %v2731 = vrot.slane %v2727, 4
  %v2732 = vrot.slane %v2729, 4
  %vm2733 = vcmask 64512
  %v2734 = vsel %vm2733, %v2730, %v2725
  %v2735 = vsel %vm2733, %v2731, %v2727
  %v2736 = vsel %vm2733, %v2732, %v2729
  %vm2740 = vcmask 1043520
  %vm2741 = vmand %vm2740, %vm1762
  %vm2742 = vcmask 64516
  %vm2743 = vmand %vm2742, %vm1765
  %vm2744 = vmor %vm2743, %vm2741
  %v2745 = vld [vmem:[#allocation3] sm:$0xff]
  %v2746 = vsel %vm2744, %v2734, %v2745
  %2747 = vst [vmem:[#allocation3] sm:$0xff] %v2746
  %vm2748 = vcmask 1043520
  %vm2749 = vmor %vm1684, %vm2748
  %2750 = vst.msk [vmem:[#allocation3 + $0x8] sm:$0xff] %vm2749, %v2735
  %vm2751 = vcmask 1040448
  %vm2752 = vmand %vm2751, %vm1697
  %vm2753 = vcmask 61444
  %vm2754 = vmand %vm2753, %vm1780
  %vm2755 = vmor %vm2754, %vm2752
  %v2756 = vld [vmem:[#allocation3 + $0x10] sm:$0x11]
  %v2757 = vsel %vm2755, %v2736, %v2756
  %2758 = vst [vmem:[#allocation3 + $0x10] sm:$0x11] %v2757
  %v2760 = vshrl.u32 %v2696, 16
  %v2762 = vrot.slane %v2760, 6
  %v2763 = vshll.u32 %v2696, 16
  %v2765 = vrot.slane %v2763, 7
  %v2766 = vor.u32 %v2762, %v2765
  %v2767 = vrot.slane %v2766, 4
  %v2769 = vshrl.u32 %v2697, 16
  %v2771 = vrot.slane %v2769, 6
  %v2772 = vshll.u32 %v2697, 16
  %v2774 = vrot.slane %v2772, 7
  %v2775 = vor.u32 %v2771, %v2774
  %v2776 = vsel %vm1788, %v2767, %v2775
  %v2777 = vrot.slane %v2775, 4
  %2778 = vrot.lane.b32.xlu0 %v2766, 8
  %v2779 = vpop.permute.xlu0 %2778
  %2780 = vrot.lane.b32.xlu0 %v2776, 8
  %v2781 = vpop.permute.xlu0 %2780
  %2782 = vrot.lane.b32.xlu0 %v2777, 8
  %v2783 = vpop.permute.xlu0 %2782
  %v2784 = vrot.slane %v2779, 4
  %v2785 = vrot.slane %v2781, 4
  %v2786 = vrot.slane %v2783, 4
  %v2787 = vsel %vm2733, %v2784, %v2779
  %v2788 = vsel %vm2733, %v2785, %v2781
  %v2789 = vsel %vm2733, %v2786, %v2783
  %vm2793 = vcmask 1043521
  %vm2794 = vmand %vm2793, %vm1854
  %vm2795 = vcmask 64517
  %vm2796 = vmand %vm2795, %vm1857
  %vm2797 = vmor %vm2796, %vm2794
  %v2798 = vld [vmem:[#allocation3 + $0x10] sm:$0xee]
  %v2799 = vsel %vm2797, %v2787, %v2798
  %2800 = vst [vmem:[#allocation3 + $0x10] sm:$0xee] %v2799
  %2801 = vst.msk [vmem:[#allocation3 + $0x18] sm:$0xff] %vm2749, %v2788
  %vm2802 = vcmask 1041472
  %vm2803 = vmand %vm2802, %vm1786
  %vm2804 = vcmask 62468
  %vm2805 = vmand %vm2804, %vm1869
  %vm2806 = vmor %vm2805, %vm2803
  %v2807 = vld [vmem:[#allocation3 + $0x20] sm:$0x33]
  %v2808 = vsel %vm2806, %v2789, %v2807
  %2809 = vst [vmem:[#allocation3 + $0x20] sm:$0x33] %v2808
  %v2810 = vld [vmem:[#allocation3] sm:$0xff]
  %v2811 = vld [vmem:[#allocation3 + $0x8] sm:$0xff]
  %v2812 = vld [vmem:[#allocation3 + $0x10] sm:$0xff]
  %v2813 = vld [vmem:[#allocation3 + $0x18] sm:$0xff]
  %v2814 = vld [vmem:[#allocation3 + $0x20] sm:$0x33]
  %v2815 = vld [vmem:[%s7] sm:$0xf]
  %v2816 = vld [vmem:[%s7 + $0x4] sm:$0xf]
  %v2817 = vld [vmem:[%s7 + $0x8] sm:$0xf]
  %v2818 = vld [vmem:[%s7 + $0xc] sm:$0xf]
  %v2819 = vld [vmem:[%s7 + $0x10] sm:$0xf]
  %v2820 = vld [vmem:[%s7 + $0x14] sm:$0xf]
  %v2821 = vld [vmem:[%s7 + $0x18] sm:$0xf]
  %v2822 = vld [vmem:[%s7 + $0x1c] sm:$0xf]
  %v2831 = vunpack.c.l.b16 %v2815
  %v2832 = vunpack.c.l.b16 %v2816
  %v2833 = vunpack.c.l.b16 %v2817
  %v2834 = vunpack.c.l.b16 %v2818
  %v2835 = vunpack.c.l.b16 %v2819
  %v2836 = vunpack.c.l.b16 %v2820
  %v2837 = vunpack.c.l.b16 %v2821
  %v2838 = vunpack.c.l.b16 %v2822
  %v2839 = vpack.c.b16 %v2832, %v2831
  %v2840 = vpack.c.b16 %v2834, %v2833
  %v2841 = vpack.c.b16 %v2836, %v2835
  %v2842 = vpack.c.b16 %v2838, %v2837
  %v2848 = vunpack.c.l.b16 %v2810
  %v2849 = vunpack.c.h.b16 %v2810
  %v2850 = vunpack.c.l.b16 %v2811
  %v2851 = vunpack.c.h.b16 %v2811
  %v2852 = vunpack.c.l.b16 %v2812
  %v2853 = vunpack.c.h.b16 %v2812
  %v2854 = vunpack.c.l.b16 %v2813
  %v2855 = vunpack.c.h.b16 %v2813
  %v2856 = vunpack.c.l.b16 %v2814
  %v2857 = vunpack.c.h.b16 %v2814
  %v2858 = vpack.c.b16 %v2850, %v2848
  %v2859 = vpack.c.b16 %v2851, %v2849
  %v2860 = vpack.c.b16 %v2854, %v2852
  %v2861 = vpack.c.b16 %v2855, %v2853
  %v2862 = vpack.c.b16 %v2856, %v2856
  %v2863 = vpack.c.b16 %v2857, %v2857
  %vm2868 = vcmask 293888
  %v2870 = vsel %vm2868, %v2839, 0
  %v2873 = vsel %vm2868, %v2840, 0
  %v2876 = vsel %vm2868, %v2841, 0
  %v2879 = vsel %vm2868, %v2842, 0
  %v2882 = vsel %vm387, %v2862, 0
  %v2885 = vsel %vm387, %v2863, 0
  %2887 = vmatpush.bf16.msra.mxu0 0
  %2888 = vmatpush.bf16.msra.mxu0 0
  %2889 = vmatpush.bf16.msra.mxu0 0
  %2890 = vmatpush.bf16.msra.mxu0 0
  %2891 = vmatpush.bf16.msra.mxu0 0
  %2892 = vmatpush.bf16.msra.mxu0 %v2882
  %2893 = vmatpush.bf16.msra.mxu0 %v2860
  %2894 = vmatpush.bf16.msra.mxu0 %v2858
  %2895 = vmatmul.bf16.gmra.mxu0 %v2870
  %v2896 = vpop.f32.mrf.mxu0
  %v2897 = vadd.f32 0.0, %v2896
  %v2898 = vpop.f32.mrf.mxu0
  %v2899 = vadd.f32 0.0, %v2898
  %2900 = vmatmul.bf16.gmra.mxu0 %v2873
  %v2901 = vpop.f32.mrf.mxu0
  %v2902 = vadd.f32 0.0, %v2901
  %v2903 = vpop.f32.mrf.mxu0
  %v2904 = vadd.f32 0.0, %v2903
  %2905 = vmatmul.bf16.gmra.mxu0 %v2876
  %v2906 = vpop.f32.mrf.mxu0
  %v2907 = vadd.f32 0.0, %v2906
  %v2908 = vpop.f32.mrf.mxu0
  %v2909 = vadd.f32 0.0, %v2908
  %2910 = vmatmul.bf16.gmra.mxu0 %v2879
  %v2911 = vpop.f32.mrf.mxu0
  %v2912 = vadd.f32 0.0, %v2911
  %v2913 = vpop.f32.mrf.mxu0
  %v2914 = vadd.f32 0.0, %v2913
  %2915 = vdwg.mxu0
  %2916 = vmatpush.bf16.msra.mxu0 0
  %2917 = vmatpush.bf16.msra.mxu0 0
  %2918 = vmatpush.bf16.msra.mxu0 0
  %2919 = vmatpush.bf16.msra.mxu0 0
  %2920 = vmatpush.bf16.msra.mxu0 0
  %2921 = vmatpush.bf16.msra.mxu0 %v2885
  %2922 = vmatpush.bf16.msra.mxu0 %v2861
  %2923 = vmatpush.bf16.msra.mxu0 %v2859
  %2924 = vmatmul.bf16.gmra.mxu0 %v2870
  %v2925 = vpop.f32.mrf.mxu0
  %v2926 = vadd.f32 0.0, %v2925
  %v2927 = vpop.f32.mrf.mxu0
  %v2928 = vadd.f32 0.0, %v2927
  %2929 = vmatmul.bf16.gmra.mxu0 %v2873
  %v2930 = vpop.f32.mrf.mxu0
  %v2931 = vadd.f32 0.0, %v2930
  %v2932 = vpop.f32.mrf.mxu0
  %v2933 = vadd.f32 0.0, %v2932
  %2934 = vmatmul.bf16.gmra.mxu0 %v2876
  %v2935 = vpop.f32.mrf.mxu0
  %v2936 = vadd.f32 0.0, %v2935
  %v2937 = vpop.f32.mrf.mxu0
  %v2938 = vadd.f32 0.0, %v2937
  %2939 = vmatmul.bf16.gmra.mxu0 %v2879
  %v2940 = vpop.f32.mrf.mxu0
  %v2941 = vadd.f32 0.0, %v2940
  %v2942 = vpop.f32.mrf.mxu0
  %v2943 = vadd.f32 0.0, %v2942
  %2944 = vdwg.mxu0
  %v2945 = vpack.c.bf16 %v2926, %v2897
  %v2946 = vpack.c.bf16 %v2928, %v2899
  %v2947 = vpack.c.bf16 %v2931, %v2902
  %v2948 = vpack.c.bf16 %v2933, %v2904
  %v2949 = vpack.c.bf16 %v2936, %v2907
  %v2950 = vpack.c.bf16 %v2938, %v2909
  %v2951 = vpack.c.bf16 %v2941, %v2912
  %v2952 = vpack.c.bf16 %v2943, %v2914
  %v2953 = vld [vmem:[%s8] sm:$0xf]
  %v2954 = vld [vmem:[%s8 + $0x4] sm:$0xf]
  %v2955 = vld [vmem:[%s8 + $0x8] sm:$0xf]
  %v2956 = vld [vmem:[%s8 + $0xc] sm:$0xf]
  %v2957 = vld [vmem:[%s8 + $0x10] sm:$0xf]
  %v2958 = vld [vmem:[%s8 + $0x14] sm:$0xf]
  %v2959 = vld [vmem:[%s8 + $0x18] sm:$0xf]
  %v2960 = vld [vmem:[%s8 + $0x1c] sm:$0xf]
  %v2961 = vld [vmem:[%s8 + $0x20] sm:$0xf]
  %v2962 = vld [vmem:[%s8 + $0x24] sm:$0xf]
  %v2963 = vld [vmem:[%s8 + $0x28] sm:$0xf]
  %v2964 = vld [vmem:[%s8 + $0x2c] sm:$0xf]
  %v2965 = vld [vmem:[%s8 + $0x30] sm:$0xf]
  %v2966 = vld [vmem:[%s8 + $0x34] sm:$0xf]
  %v2967 = vld [vmem:[%s8 + $0x38] sm:$0xf]
  %v2968 = vld [vmem:[%s8 + $0x3c] sm:$0xf]
  %v2969 = vld [vmem:[%s8 + $0x40] sm:$0xf]
  %v2970 = vld [vmem:[%s8 + $0x44] sm:$0xf]
  %s2971 = scalar_lea.vmem %s8, 72
  %v2972 = vld [vmem:[%s2971] sm:$0xf]
  %v2973 = vld [vmem:[%s2971 + $0x4] sm:$0xf]
  %v2974 = vld [vmem:[%s2971 + $0x8] sm:$0xf]
  %v2975 = vld [vmem:[%s2971 + $0xc] sm:$0xf]
  %v2976 = vld [vmem:[%s2971 + $0x10] sm:$0xf]
  %v2977 = vld [vmem:[%s2971 + $0x14] sm:$0xf]
  %v2978 = vld [vmem:[%s2971 + $0x18] sm:$0xf]
  %v2979 = vld [vmem:[%s2971 + $0x1c] sm:$0xf]
  %v2980 = vld [vmem:[%s2971 + $0x20] sm:$0xf]
  %v2981 = vld [vmem:[%s2971 + $0x24] sm:$0xf]
  %v2982 = vld [vmem:[%s2971 + $0x28] sm:$0xf]
  %v2983 = vld [vmem:[%s2971 + $0x2c] sm:$0xf]
  %v2984 = vld [vmem:[%s2971 + $0x30] sm:$0xf]
  %v2985 = vld [vmem:[%s2971 + $0x34] sm:$0xf]
  %v2986 = vld [vmem:[%s2971 + $0x38] sm:$0xf]
  %v2987 = vld [vmem:[%s2971 + $0x3c] sm:$0xf]
  %v2988 = vld [vmem:[%s2971 + $0x40] sm:$0xf]
  %v2989 = vld [vmem:[%s2971 + $0x44] sm:$0xf]
  %v2992 = vunpack.c.l.b16 %v2947
  %v2993 = vunpack.c.h.b16 %v2947
  %v2994 = vunpack.c.l.b16 %v2948
  %v2995 = vunpack.c.h.b16 %v2948
  %v2996 = vpack.c.b16 %v2994, %v2992
  %v2997 = vpack.c.b16 %v2995, %v2993
  %v3017 = vunpack.c.l.b16 %v2972
  %v3018 = vunpack.c.l.b16 %v2973
  %v3019 = vunpack.c.l.b16 %v2974
  %v3020 = vunpack.c.l.b16 %v2975
  %v3021 = vunpack.c.l.b16 %v2976
  %v3022 = vunpack.c.l.b16 %v2977
  %v3023 = vunpack.c.l.b16 %v2978
  %v3024 = vunpack.c.l.b16 %v2979
  %v3025 = vunpack.c.l.b16 %v2980
  %v3026 = vunpack.c.l.b16 %v2981
  %v3027 = vunpack.c.l.b16 %v2982
  %v3028 = vunpack.c.l.b16 %v2983
  %v3029 = vunpack.c.l.b16 %v2984
  %v3030 = vunpack.c.l.b16 %v2985
  %v3031 = vunpack.c.l.b16 %v2986
  %v3032 = vunpack.c.l.b16 %v2987
  %v3033 = vunpack.c.l.b16 %v2988
  %v3034 = vunpack.c.l.b16 %v2989
  %v3035 = vpack.c.b16 %v3018, %v3017
  %v3036 = vpack.c.b16 %v3020, %v3019
  %v3037 = vpack.c.b16 %v3022, %v3021
  %v3038 = vpack.c.b16 %v3024, %v3023
  %v3039 = vpack.c.b16 %v3026, %v3025
  %v3040 = vpack.c.b16 %v3028, %v3027
  %v3041 = vpack.c.b16 %v3030, %v3029
  %v3042 = vpack.c.b16 %v3032, %v3031
  %v3043 = vpack.c.b16 %v3034, %v3033
  %vm3053 = vcmask 130048
  %v3055 = vsel %vm3053, %v2997, 0
  %3057 = vmatpush.bf16.msra.mxu0 %v3042
  %3058 = vmatpush.bf16.msra.mxu0 %v3041
  %3059 = vmatpush.bf16.msra.mxu0 %v3040
  %3060 = vmatpush.bf16.msra.mxu0 %v3039
  %3061 = vmatpush.bf16.msra.mxu0 %v3038
  %3062 = vmatpush.bf16.msra.mxu0 %v3037
  %3063 = vmatpush.bf16.msra.mxu0 %v3036
  %3064 = vmatpush.bf16.msra.mxu0 %v3035
  %3065 = vmatmul.bf16.gmra.mxu0 %v2996
  %v3066 = vpop.f32.mrf.mxu0
  %v3067 = vadd.f32 0.0, %v3066
  %v3068 = vpop.f32.mrf.mxu0
  %v3069 = vadd.f32 0.0, %v3068
  %3070 = vdwg.mxu0
  %3071 = vmatpush.bf16.msra.mxu0 0
  %3072 = vmatpush.bf16.msra.mxu0 0
  %3073 = vmatpush.bf16.msra.mxu0 0
  %3074 = vmatpush.bf16.msra.mxu0 0
  %3075 = vmatpush.bf16.msra.mxu0 0
  %3076 = vmatpush.bf16.msra.mxu0 0
  %3077 = vmatpush.bf16.msra.mxu0 0
  %3078 = vmatpush.bf16.msra.mxu0 %v3043
  %3079 = vmatmul.bf16.gmra.mxu0 %v3055
  %v3080 = vpop.f32.mrf.mxu0
  %v3081 = vadd.f32 %v3067, %v3080
  %v3082 = vpop.f32.mrf.mxu0
  %v3083 = vadd.f32 %v3069, %v3082
  %3084 = vdwg.mxu0
  %v3087 = vunpack.c.l.b16 %v2945
  %v3088 = vunpack.c.h.b16 %v2945
  %v3089 = vunpack.c.l.b16 %v2946
  %v3090 = vunpack.c.h.b16 %v2946
  %v3091 = vpack.c.b16 %v3089, %v3087
  %v3092 = vpack.c.b16 %v3090, %v3088
  %v3112 = vunpack.c.l.b16 %v2953
  %v3113 = vunpack.c.l.b16 %v2954
  %v3114 = vunpack.c.l.b16 %v2955
  %v3115 = vunpack.c.l.b16 %v2956
  %v3116 = vunpack.c.l.b16 %v2957
  %v3117 = vunpack.c.l.b16 %v2958
  %v3118 = vunpack.c.l.b16 %v2959
  %v3119 = vunpack.c.l.b16 %v2960
  %v3120 = vunpack.c.l.b16 %v2961
  %v3121 = vunpack.c.l.b16 %v2962
  %v3122 = vunpack.c.l.b16 %v2963
  %v3123 = vunpack.c.l.b16 %v2964
  %v3124 = vunpack.c.l.b16 %v2965
  %v3125 = vunpack.c.l.b16 %v2966
  %v3126 = vunpack.c.l.b16 %v2967
  %v3127 = vunpack.c.l.b16 %v2968
  %v3128 = vunpack.c.l.b16 %v2969
  %v3129 = vunpack.c.l.b16 %v2970
  %v3130 = vpack.c.b16 %v3113, %v3112
  %v3131 = vpack.c.b16 %v3115, %v3114
  %v3132 = vpack.c.b16 %v3117, %v3116
  %v3133 = vpack.c.b16 %v3119, %v3118
  %v3134 = vpack.c.b16 %v3121, %v3120
  %v3135 = vpack.c.b16 %v3123, %v3122
  %v3136 = vpack.c.b16 %v3125, %v3124
  %v3137 = vpack.c.b16 %v3127, %v3126
  %v3138 = vpack.c.b16 %v3129, %v3128
  %v3149 = vsel %vm3053, %v3092, 0
  %3151 = vmatpush.bf16.msra.mxu0 %v3137
  %3152 = vmatpush.bf16.msra.mxu0 %v3136
  %3153 = vmatpush.bf16.msra.mxu0 %v3135
  %3154 = vmatpush.bf16.msra.mxu0 %v3134
  %3155 = vmatpush.bf16.msra.mxu0 %v3133
  %3156 = vmatpush.bf16.msra.mxu0 %v3132
  %3157 = vmatpush.bf16.msra.mxu0 %v3131
  %3158 = vmatpush.bf16.msra.mxu0 %v3130
  %3159 = vmatmul.bf16.gmra.mxu0 %v3091
  %v3160 = vpop.f32.mrf.mxu0
  %v3161 = vadd.f32 %v3081, %v3160
  %v3162 = vpop.f32.mrf.mxu0
  %v3163 = vadd.f32 %v3083, %v3162
  %3164 = vdwg.mxu0
  %3165 = vmatpush.bf16.msra.mxu0 0
  %3166 = vmatpush.bf16.msra.mxu0 0
  %3167 = vmatpush.bf16.msra.mxu0 0
  %3168 = vmatpush.bf16.msra.mxu0 0
  %3169 = vmatpush.bf16.msra.mxu0 0
  %3170 = vmatpush.bf16.msra.mxu0 0
  %3171 = vmatpush.bf16.msra.mxu0 0
  %3172 = vmatpush.bf16.msra.mxu0 %v3138
  %3173 = vmatmul.bf16.gmra.mxu0 %v3149
  %v3174 = vpop.f32.mrf.mxu0
  %v3175 = vadd.f32 %v3161, %v3174
  %v3176 = vpop.f32.mrf.mxu0
  %v3177 = vadd.f32 %v3163, %v3176
  %3178 = vdwg.mxu0
  %s3179 = scalar_lea.vmem %s8, 144
  %v3180 = vld [vmem:[%s3179] sm:$0xf]
  %v3181 = vld [vmem:[%s3179 + $0x4] sm:$0xf]
  %v3182 = vld [vmem:[%s3179 + $0x8] sm:$0xf]
  %v3183 = vld [vmem:[%s3179 + $0xc] sm:$0xf]
  %v3184 = vld [vmem:[%s3179 + $0x10] sm:$0xf]
  %v3185 = vld [vmem:[%s3179 + $0x14] sm:$0xf]
  %v3186 = vld [vmem:[%s3179 + $0x18] sm:$0xf]
  %v3187 = vld [vmem:[%s3179 + $0x1c] sm:$0xf]
  %v3188 = vld [vmem:[%s3179 + $0x20] sm:$0xf]
  %v3189 = vld [vmem:[%s3179 + $0x24] sm:$0xf]
  %v3190 = vld [vmem:[%s3179 + $0x28] sm:$0xf]
  %v3191 = vld [vmem:[%s3179 + $0x2c] sm:$0xf]
  %v3192 = vld [vmem:[%s3179 + $0x30] sm:$0xf]
  %v3193 = vld [vmem:[%s3179 + $0x34] sm:$0xf]
  %v3194 = vld [vmem:[%s3179 + $0x38] sm:$0xf]
  %v3195 = vld [vmem:[%s3179 + $0x3c] sm:$0xf]
  %v3196 = vld [vmem:[%s3179 + $0x40] sm:$0xf]
  %v3197 = vld [vmem:[%s3179 + $0x44] sm:$0xf]
  %v3200 = vunpack.c.l.b16 %v2949
  %v3201 = vunpack.c.h.b16 %v2949
  %v3202 = vunpack.c.l.b16 %v2950
  %v3203 = vunpack.c.h.b16 %v2950
  %v3204 = vpack.c.b16 %v3202, %v3200
  %v3205 = vpack.c.b16 %v3203, %v3201
  %v3225 = vunpack.c.l.b16 %v3180
  %v3226 = vunpack.c.l.b16 %v3181
  %v3227 = vunpack.c.l.b16 %v3182
  %v3228 = vunpack.c.l.b16 %v3183
  %v3229 = vunpack.c.l.b16 %v3184
  %v3230 = vunpack.c.l.b16 %v3185
  %v3231 = vunpack.c.l.b16 %v3186
  %v3232 = vunpack.c.l.b16 %v3187
  %v3233 = vunpack.c.l.b16 %v3188
  %v3234 = vunpack.c.l.b16 %v3189
  %v3235 = vunpack.c.l.b16 %v3190
  %v3236 = vunpack.c.l.b16 %v3191
  %v3237 = vunpack.c.l.b16 %v3192
  %v3238 = vunpack.c.l.b16 %v3193
  %v3239 = vunpack.c.l.b16 %v3194
  %v3240 = vunpack.c.l.b16 %v3195
  %v3241 = vunpack.c.l.b16 %v3196
  %v3242 = vunpack.c.l.b16 %v3197
  %v3243 = vpack.c.b16 %v3226, %v3225
  %v3244 = vpack.c.b16 %v3228, %v3227
  %v3245 = vpack.c.b16 %v3230, %v3229
  %v3246 = vpack.c.b16 %v3232, %v3231
  %v3247 = vpack.c.b16 %v3234, %v3233
  %v3248 = vpack.c.b16 %v3236, %v3235
  %v3249 = vpack.c.b16 %v3238, %v3237
  %v3250 = vpack.c.b16 %v3240, %v3239
  %v3251 = vpack.c.b16 %v3242, %v3241
  %v3262 = vsel %vm3053, %v3205, 0
  %3264 = vmatpush.bf16.msra.mxu0 %v3250
  %3265 = vmatpush.bf16.msra.mxu0 %v3249
  %3266 = vmatpush.bf16.msra.mxu0 %v3248
  %3267 = vmatpush.bf16.msra.mxu0 %v3247
  %3268 = vmatpush.bf16.msra.mxu0 %v3246
  %3269 = vmatpush.bf16.msra.mxu0 %v3245
  %3270 = vmatpush.bf16.msra.mxu0 %v3244
  %3271 = vmatpush.bf16.msra.mxu0 %v3243
  %3272 = vmatmul.bf16.gmra.mxu0 %v3204
  %v3273 = vpop.f32.mrf.mxu0
  %v3274 = vadd.f32 0.0, %v3273
  %v3275 = vpop.f32.mrf.mxu0
  %v3276 = vadd.f32 0.0, %v3275
  %3277 = vdwg.mxu0
  %3278 = vmatpush.bf16.msra.mxu0 0
  %3279 = vmatpush.bf16.msra.mxu0 0
  %3280 = vmatpush.bf16.msra.mxu0 0
  %3281 = vmatpush.bf16.msra.mxu0 0
  %3282 = vmatpush.bf16.msra.mxu0 0
  %3283 = vmatpush.bf16.msra.mxu0 0
  %3284 = vmatpush.bf16.msra.mxu0 0
  %3285 = vmatpush.bf16.msra.mxu0 %v3251
  %3286 = vmatmul.bf16.gmra.mxu0 %v3262
  %v3287 = vpop.f32.mrf.mxu0
  %v3288 = vadd.f32 %v3274, %v3287
  %v3289 = vpop.f32.mrf.mxu0
  %v3290 = vadd.f32 %v3276, %v3289
  %3291 = vdwg.mxu0
  %v3292 = vadd.f32 %v3175, %v3288
  %v3293 = vadd.f32 %v3177, %v3290
  %s3294 = scalar_lea.vmem %s8, 216
  %v3295 = vld [vmem:[%s3294] sm:$0xf]
  %v3296 = vld [vmem:[%s3294 + $0x4] sm:$0xf]
  %v3297 = vld [vmem:[%s3294 + $0x8] sm:$0xf]
  %v3298 = vld [vmem:[%s3294 + $0xc] sm:$0xf]
  %v3299 = vld [vmem:[%s3294 + $0x10] sm:$0xf]
  %v3300 = vld [vmem:[%s3294 + $0x14] sm:$0xf]
  %v3301 = vld [vmem:[%s3294 + $0x18] sm:$0xf]
  %v3302 = vld [vmem:[%s3294 + $0x1c] sm:$0xf]
  %v3303 = vld [vmem:[%s3294 + $0x20] sm:$0xf]
  %v3304 = vld [vmem:[%s3294 + $0x24] sm:$0xf]
  %v3305 = vld [vmem:[%s3294 + $0x28] sm:$0xf]
  %v3306 = vld [vmem:[%s3294 + $0x2c] sm:$0xf]
  %v3307 = vld [vmem:[%s3294 + $0x30] sm:$0xf]
  %v3308 = vld [vmem:[%s3294 + $0x34] sm:$0xf]
  %v3309 = vld [vmem:[%s3294 + $0x38] sm:$0xf]
  %v3310 = vld [vmem:[%s3294 + $0x3c] sm:$0xf]
  %v3311 = vld [vmem:[%s3294 + $0x40] sm:$0xf]
  %v3312 = vld [vmem:[%s3294 + $0x44] sm:$0xf]
  %v3315 = vunpack.c.l.b16 %v2951
  %v3316 = vunpack.c.h.b16 %v2951
  %v3317 = vunpack.c.l.b16 %v2952
  %v3318 = vunpack.c.h.b16 %v2952
  %v3319 = vpack.c.b16 %v3317, %v3315
  %v3320 = vpack.c.b16 %v3318, %v3316
  %v3340 = vunpack.c.l.b16 %v3295
  %v3341 = vunpack.c.l.b16 %v3296
  %v3342 = vunpack.c.l.b16 %v3297
  %v3343 = vunpack.c.l.b16 %v3298
  %v3344 = vunpack.c.l.b16 %v3299
  %v3345 = vunpack.c.l.b16 %v3300
  %v3346 = vunpack.c.l.b16 %v3301
  %v3347 = vunpack.c.l.b16 %v3302
  %v3348 = vunpack.c.l.b16 %v3303
  %v3349 = vunpack.c.l.b16 %v3304
  %v3350 = vunpack.c.l.b16 %v3305
  %v3351 = vunpack.c.l.b16 %v3306
  %v3352 = vunpack.c.l.b16 %v3307
  %v3353 = vunpack.c.l.b16 %v3308
  %v3354 = vunpack.c.l.b16 %v3309
  %v3355 = vunpack.c.l.b16 %v3310
  %v3356 = vunpack.c.l.b16 %v3311
  %v3357 = vunpack.c.l.b16 %v3312
  %v3358 = vpack.c.b16 %v3341, %v3340
  %v3359 = vpack.c.b16 %v3343, %v3342
  %v3360 = vpack.c.b16 %v3345, %v3344
  %v3361 = vpack.c.b16 %v3347, %v3346
  %v3362 = vpack.c.b16 %v3349, %v3348
  %v3363 = vpack.c.b16 %v3351, %v3350
  %v3364 = vpack.c.b16 %v3353, %v3352
  %v3365 = vpack.c.b16 %v3355, %v3354
  %v3366 = vpack.c.b16 %v3357, %v3356
  %v3377 = vsel %vm3053, %v3320, 0
  %3379 = vmatpush.bf16.msra.mxu0 %v3365
  %3380 = vmatpush.bf16.msra.mxu0 %v3364
  %3381 = vmatpush.bf16.msra.mxu0 %v3363
  %3382 = vmatpush.bf16.msra.mxu0 %v3362
  %3383 = vmatpush.bf16.msra.mxu0 %v3361
  %3384 = vmatpush.bf16.msra.mxu0 %v3360
  %3385 = vmatpush.bf16.msra.mxu0 %v3359
  %3386 = vmatpush.bf16.msra.mxu0 %v3358
  %3387 = vmatmul.bf16.gmra.mxu0 %v3319
  %v3388 = vpop.f32.mrf.mxu0
  %v3389 = vadd.f32 0.0, %v3388
  %v3390 = vpop.f32.mrf.mxu0
  %v3391 = vadd.f32 0.0, %v3390
  %3392 = vdwg.mxu0
  %3393 = vmatpush.bf16.msra.mxu0 0
  %3394 = vmatpush.bf16.msra.mxu0 0
  %3395 = vmatpush.bf16.msra.mxu0 0
  %3396 = vmatpush.bf16.msra.mxu0 0
  %3397 = vmatpush.bf16.msra.mxu0 0
  %3398 = vmatpush.bf16.msra.mxu0 0
  %3399 = vmatpush.bf16.msra.mxu0 0
  %3400 = vmatpush.bf16.msra.mxu0 %v3366
  %3401 = vmatmul.bf16.gmra.mxu0 %v3377
  %v3402 = vpop.f32.mrf.mxu0
  %v3403 = vadd.f32 %v3389, %v3402
  %v3404 = vpop.f32.mrf.mxu0
  %v3405 = vadd.f32 %v3391, %v3404
  %3406 = vdwg.mxu0
  %v3407 = vadd.f32 %v3292, %v3403
  %v3408 = vadd.f32 %v3293, %v3405
  %v3409 = vld [vmem:[%s9] sm:$0x1]
  %v3411 = vperm.slane %v3409, 0
  %v3413 = vadd.f32 %v3407, %v3411
  %v3414 = vadd.f32 %v3408, %v3411
  %vm3415 = vcmp.ge.f32.partialorder %v3413, 0.0
  %vm3416 = vcmp.ge.f32.partialorder %v3414, 0.0
  %v3417 = vmul.f32 %v3413, 0.01
  %v3418 = vmul.f32 %v3414, 0.01
  %v3419 = vsel %vm3415, %v3413, %v3417
  %v3420 = vsel %vm3416, %v3414, %v3418
  %v3421 = vpack.c.bf16 %v3419, %v3419
  %v3422 = vpack.c.bf16 %v3420, %v3420
  %vm3423 = vcmask 261124
  %vm3424 = vmor %vm3423, %vm1683
  %3425 = vst.msk [vmem:[#allocation4] sm:$0xff] %vm3424, 0
  %3426 = vst.msk [vmem:[#allocation4 + $0x8] sm:$0xff] %vm3424, 0
  %vm3427 = vcmask 259076
  %vm3428 = vmor %vm3427, %vm387
  %3429 = vst.msk [vmem:[#allocation4 + $0x10] sm:$0x33] %vm3428, 0
  %v3431 = vshrl.u32 %v3421, 16
  %v3433 = vrot.slane %v3431, 7
  %v3434 = vshll.u32 %v3421, 16
  %v3436 = vor.u32 %v3433, %v3434
  %v3437 = vrot.slane %v3433, 4
  %3438 = vrot.lane.b32.xlu0 %v3436, 16
  %v3439 = vpop.permute.xlu0 %3438
  %3440 = vrot.lane.b32.xlu0 %v3437, 16
  %v3441 = vpop.permute.xlu0 %3440
  %v3442 = vrot.slane %v3439, 4
  %v3443 = vrot.slane %v3441, 4
  %vm3444 = vcmask 130048
  %v3445 = vsel %vm3444, %v3442, %v3439
  %v3446 = vsel %vm3444, %v3443, %v3441
  %vm3449 = vcmask 1043584
  %vm3450 = vmand %vm3449, %vm1762
  %vm3451 = vcmask 130052
  %vm3452 = vmand %vm3451, %vm1765
  %vm3453 = vmor %vm3452, %vm3450
  %v3454 = vld [vmem:[#allocation4] sm:$0xff]
  %v3455 = vsel %vm3453, %v3445, %v3454
  %3456 = vst [vmem:[#allocation4] sm:$0xff] %v3455
  %vm3457 = vcmask 1040512
  %vm3458 = vmand %vm3457, %vm1697
  %vm3459 = vcmask 126980
  %vm3460 = vmand %vm3459, %vm1780
  %vm3461 = vmor %vm3460, %vm3458
  %v3462 = vld [vmem:[#allocation4 + $0x8] sm:$0x11]
  %v3463 = vsel %vm3461, %v3446, %v3462
  %3464 = vst [vmem:[#allocation4 + $0x8] sm:$0x11] %v3463
  %v3466 = vshrl.u32 %v3422, 16
  %v3468 = vrot.slane %v3466, 6
  %v3469 = vshll.u32 %v3422, 16
  %v3471 = vrot.slane %v3469, 7
  %v3472 = vor.u32 %v3468, %v3471
  %v3473 = vrot.slane %v3472, 4
  %3474 = vrot.lane.b32.xlu0 %v3472, 16
  %v3475 = vpop.permute.xlu0 %3474
  %3476 = vrot.lane.b32.xlu0 %v3473, 16
  %v3477 = vpop.permute.xlu0 %3476
  %v3478 = vrot.slane %v3475, 4
  %v3479 = vrot.slane %v3477, 4
  %v3480 = vsel %vm3444, %v3478, %v3475
  %v3481 = vsel %vm3444, %v3479, %v3477
  %vm3484 = vcmask 1043585
  %vm3485 = vmand %vm3484, %vm1854
  %vm3486 = vcmask 130053
  %vm3487 = vmand %vm3486, %vm1857
  %vm3488 = vmor %vm3487, %vm3485
  %v3489 = vld [vmem:[#allocation4 + $0x8] sm:$0xee]
  %v3490 = vsel %vm3488, %v3480, %v3489
  %3491 = vst [vmem:[#allocation4 + $0x8] sm:$0xee] %v3490
  %vm3492 = vcmask 1041536
  %vm3493 = vmand %vm3492, %vm1786
  %vm3494 = vcmask 128004
  %vm3495 = vmand %vm3494, %vm1869
  %vm3496 = vmor %vm3495, %vm3493
  %v3497 = vld [vmem:[#allocation4 + $0x10] sm:$0x33]
  %v3498 = vsel %vm3496, %v3481, %v3497
  %3499 = vst [vmem:[#allocation4 + $0x10] sm:$0x33] %v3498
  %v3500 = vld [vmem:[#allocation4] sm:$0xff]
  %v3501 = vld [vmem:[#allocation4 + $0x8] sm:$0xff]
  %v3502 = vld [vmem:[#allocation4 + $0x10] sm:$0x33]
  %v3503 = vld [vmem:[%s10] sm:$0xf]
  %v3504 = vld [vmem:[%s10 + $0x4] sm:$0xf]
  %v3505 = vld [vmem:[%s10 + $0x8] sm:$0xf]
  %v3506 = vld [vmem:[%s10 + $0xc] sm:$0xf]
  %v3511 = vunpack.c.l.b16 %v3503
  %v3512 = vunpack.c.l.b16 %v3504
  %v3513 = vunpack.c.l.b16 %v3505
  %v3514 = vunpack.c.l.b16 %v3506
  %v3515 = vpack.c.b16 %v3512, %v3511
  %v3516 = vpack.c.b16 %v3514, %v3513
  %v3520 = vunpack.c.l.b16 %v3500
  %v3521 = vunpack.c.h.b16 %v3500
  %v3522 = vunpack.c.l.b16 %v3501
  %v3523 = vunpack.c.h.b16 %v3501
  %v3524 = vunpack.c.l.b16 %v3502
  %v3525 = vunpack.c.h.b16 %v3502
  %v3526 = vpack.c.b16 %v3522, %v3520
  %v3527 = vpack.c.b16 %v3523, %v3521
  %v3528 = vpack.c.b16 %v3524, %v3524
  %v3529 = vpack.c.b16 %v3525, %v3525
  %vm3532 = vcmask 162816
  %v3534 = vsel %vm3532, %v3515, 0
  %v3537 = vsel %vm3532, %v3516, 0
  %v3540 = vsel %vm387, %v3528, 0
  %v3543 = vsel %vm387, %v3529, 0
  %3545 = vmatpush.bf16.msra.mxu0 0
  %3546 = vmatpush.bf16.msra.mxu0 0
  %3547 = vmatpush.bf16.msra.mxu0 0
  %3548 = vmatpush.bf16.msra.mxu0 0
  %3549 = vmatpush.bf16.msra.mxu0 0
  %3550 = vmatpush.bf16.msra.mxu0 0
  %3551 = vmatpush.bf16.msra.mxu0 %v3540
  %3552 = vmatpush.bf16.msra.mxu0 %v3526
  %3553 = vmatmul.bf16.gmra.mxu0 %v3534
  %v3554 = vpop.f32.mrf.mxu0
  %v3555 = vadd.f32 0.0, %v3554
  %v3556 = vpop.f32.mrf.mxu0
  %v3557 = vadd.f32 0.0, %v3556
  %3558 = vmatmul.bf16.gmra.mxu0 %v3537
  %v3559 = vpop.f32.mrf.mxu0
  %v3560 = vadd.f32 0.0, %v3559
  %v3561 = vpop.f32.mrf.mxu0
  %v3562 = vadd.f32 0.0, %v3561
  %3563 = vdwg.mxu0
  %3564 = vmatpush.bf16.msra.mxu0 0
  %3565 = vmatpush.bf16.msra.mxu0 0
  %3566 = vmatpush.bf16.msra.mxu0 0
  %3567 = vmatpush.bf16.msra.mxu0 0
  %3568 = vmatpush.bf16.msra.mxu0 0
  %3569 = vmatpush.bf16.msra.mxu0 0
  %3570 = vmatpush.bf16.msra.mxu0 %v3543
  %3571 = vmatpush.bf16.msra.mxu0 %v3527
  %3572 = vmatmul.bf16.gmra.mxu0 %v3534
  %v3573 = vpop.f32.mrf.mxu0
  %v3574 = vadd.f32 0.0, %v3573
  %v3575 = vpop.f32.mrf.mxu0
  %v3576 = vadd.f32 0.0, %v3575
  %3577 = vmatmul.bf16.gmra.mxu0 %v3537
  %v3578 = vpop.f32.mrf.mxu0
  %v3579 = vadd.f32 0.0, %v3578
  %v3580 = vpop.f32.mrf.mxu0
  %v3581 = vadd.f32 0.0, %v3580
  %3582 = vdwg.mxu0
  %v3583 = vpack.c.bf16 %v3574, %v3555
  %v3584 = vpack.c.bf16 %v3576, %v3557
  %v3585 = vpack.c.bf16 %v3579, %v3560
  %v3586 = vpack.c.bf16 %v3581, %v3562
  %v3587 = vld [vmem:[%s11] sm:$0xf]
  %v3588 = vld [vmem:[%s11 + $0x4] sm:$0xf]
  %v3589 = vld [vmem:[%s11 + $0x8] sm:$0xf]
  %v3590 = vld [vmem:[%s11 + $0xc] sm:$0xf]
  %v3591 = vld [vmem:[%s11 + $0x10] sm:$0xf]
  %v3592 = vld [vmem:[%s11 + $0x14] sm:$0xf]
  %v3593 = vld [vmem:[%s11 + $0x18] sm:$0xf]
  %v3594 = vld [vmem:[%s11 + $0x1c] sm:$0xf]
  %v3595 = vld [vmem:[%s11 + $0x20] sm:$0xf]
  %v3596 = vld [vmem:[%s11 + $0x24] sm:$0xf]
  %v3597 = vld [vmem:[%s11 + $0x28] sm:$0xf]
  %v3598 = vld [vmem:[%s11 + $0x2c] sm:$0xf]
  %v3599 = vld [vmem:[%s11 + $0x30] sm:$0xf]
  %v3600 = vld [vmem:[%s11 + $0x34] sm:$0xf]
  %v3601 = vld [vmem:[%s11 + $0x38] sm:$0xf]
  %v3602 = vld [vmem:[%s11 + $0x3c] sm:$0xf]
  %v3603 = vld [vmem:[%s11 + $0x40] sm:$0xf]
  %v3604 = vld [vmem:[%s11 + $0x44] sm:$0xf]
  %v3605 = vld [vmem:[%s11 + $0x48] sm:$0xf]
  %v3606 = vld [vmem:[%s11 + $0x4c] sm:$0xf]
  %s3607 = scalar_lea.vmem %s11, 80
  %v3608 = vld [vmem:[%s3607] sm:$0xf]
  %v3609 = vld [vmem:[%s3607 + $0x4] sm:$0xf]
  %v3610 = vld [vmem:[%s3607 + $0x8] sm:$0xf]
  %v3611 = vld [vmem:[%s3607 + $0xc] sm:$0xf]
  %v3612 = vld [vmem:[%s3607 + $0x10] sm:$0xf]
  %v3613 = vld [vmem:[%s3607 + $0x14] sm:$0xf]
  %v3614 = vld [vmem:[%s3607 + $0x18] sm:$0xf]
  %v3615 = vld [vmem:[%s3607 + $0x1c] sm:$0xf]
  %v3616 = vld [vmem:[%s3607 + $0x20] sm:$0xf]
  %v3617 = vld [vmem:[%s3607 + $0x24] sm:$0xf]
  %v3618 = vld [vmem:[%s3607 + $0x28] sm:$0xf]
  %v3619 = vld [vmem:[%s3607 + $0x2c] sm:$0xf]
  %v3620 = vld [vmem:[%s3607 + $0x30] sm:$0xf]
  %v3621 = vld [vmem:[%s3607 + $0x34] sm:$0xf]
  %v3622 = vld [vmem:[%s3607 + $0x38] sm:$0xf]
  %v3623 = vld [vmem:[%s3607 + $0x3c] sm:$0xf]
  %v3624 = vld [vmem:[%s3607 + $0x40] sm:$0xf]
  %v3625 = vld [vmem:[%s3607 + $0x44] sm:$0xf]
  %v3626 = vld [vmem:[%s3607 + $0x48] sm:$0xf]
  %v3627 = vld [vmem:[%s3607 + $0x4c] sm:$0xf]
  %v3629 = vunpack.c.l.b16 %v3584
  %v3630 = vunpack.c.h.b16 %v3584
  %v3631 = vpack.c.b16 %v3629, %v3629
  %v3632 = vpack.c.b16 %v3630, %v3630
  %v3654 = vunpack.c.l.b16 %v3608
  %v3655 = vunpack.c.l.b16 %v3609
  %v3656 = vunpack.c.l.b16 %v3610
  %v3657 = vunpack.c.l.b16 %v3611
  %v3658 = vunpack.c.l.b16 %v3612
  %v3659 = vunpack.c.l.b16 %v3613
  %v3660 = vunpack.c.l.b16 %v3614
  %v3661 = vunpack.c.l.b16 %v3615
  %v3662 = vunpack.c.l.b16 %v3616
  %v3663 = vunpack.c.l.b16 %v3617
  %v3664 = vunpack.c.l.b16 %v3618
  %v3665 = vunpack.c.l.b16 %v3619
  %v3666 = vunpack.c.l.b16 %v3620
  %v3667 = vunpack.c.l.b16 %v3621
  %v3668 = vunpack.c.l.b16 %v3622
  %v3669 = vunpack.c.l.b16 %v3623
  %v3670 = vunpack.c.l.b16 %v3624
  %v3671 = vunpack.c.l.b16 %v3625
  %v3672 = vunpack.c.l.b16 %v3626
  %v3673 = vunpack.c.l.b16 %v3627
  %v3674 = vpack.c.b16 %v3655, %v3654
  %v3675 = vpack.c.b16 %v3657, %v3656
  %v3676 = vpack.c.b16 %v3659, %v3658
  %v3677 = vpack.c.b16 %v3661, %v3660
  %v3678 = vpack.c.b16 %v3663, %v3662
  %v3679 = vpack.c.b16 %v3665, %v3664
  %v3680 = vpack.c.b16 %v3667, %v3666
  %v3681 = vpack.c.b16 %v3669, %v3668
  %v3682 = vpack.c.b16 %v3671, %v3670
  %v3683 = vpack.c.b16 %v3673, %v3672
  %vm3694 = vcmask 261120
  %v3696 = vsel %vm3694, %v3632, 0
  %3698 = vmatpush.bf16.msra.mxu0 %v3681
  %3699 = vmatpush.bf16.msra.mxu0 %v3680
  %3700 = vmatpush.bf16.msra.mxu0 %v3679
  %3701 = vmatpush.bf16.msra.mxu0 %v3678
  %3702 = vmatpush.bf16.msra.mxu0 %v3677
  %3703 = vmatpush.bf16.msra.mxu0 %v3676
  %3704 = vmatpush.bf16.msra.mxu0 %v3675
  %3705 = vmatpush.bf16.msra.mxu0 %v3674
  %3706 = vmatmul.bf16.gmra.mxu0 %v3631
  %v3707 = vpop.f32.mrf.mxu0
  %v3708 = vadd.f32 0.0, %v3707
  %v3709 = vpop.f32.mrf.mxu0
  %3710 = vdwg.mxu0
  %3711 = vmatpush.bf16.msra.mxu0 0
  %3712 = vmatpush.bf16.msra.mxu0 0
  %3713 = vmatpush.bf16.msra.mxu0 0
  %3714 = vmatpush.bf16.msra.mxu0 0
  %3715 = vmatpush.bf16.msra.mxu0 0
  %3716 = vmatpush.bf16.msra.mxu0 0
  %3717 = vmatpush.bf16.msra.mxu0 %v3683
  %3718 = vmatpush.bf16.msra.mxu0 %v3682
  %3719 = vmatmul.bf16.gmra.mxu0 %v3696
  %v3720 = vpop.f32.mrf.mxu0
  %v3721 = vadd.f32 %v3708, %v3720
  %v3722 = vpop.f32.mrf.mxu0
  %3723 = vdwg.mxu0
  %v3725 = vunpack.c.l.b16 %v3583
  %v3726 = vunpack.c.h.b16 %v3583
  %v3727 = vpack.c.b16 %v3725, %v3725
  %v3728 = vpack.c.b16 %v3726, %v3726
  %v3750 = vunpack.c.l.b16 %v3587
  %v3751 = vunpack.c.l.b16 %v3588
  %v3752 = vunpack.c.l.b16 %v3589
  %v3753 = vunpack.c.l.b16 %v3590
  %v3754 = vunpack.c.l.b16 %v3591
  %v3755 = vunpack.c.l.b16 %v3592
  %v3756 = vunpack.c.l.b16 %v3593
  %v3757 = vunpack.c.l.b16 %v3594
  %v3758 = vunpack.c.l.b16 %v3595
  %v3759 = vunpack.c.l.b16 %v3596
  %v3760 = vunpack.c.l.b16 %v3597
  %v3761 = vunpack.c.l.b16 %v3598
  %v3762 = vunpack.c.l.b16 %v3599
  %v3763 = vunpack.c.l.b16 %v3600
  %v3764 = vunpack.c.l.b16 %v3601
  %v3765 = vunpack.c.l.b16 %v3602
  %v3766 = vunpack.c.l.b16 %v3603
  %v3767 = vunpack.c.l.b16 %v3604
  %v3768 = vunpack.c.l.b16 %v3605
  %v3769 = vunpack.c.l.b16 %v3606
  %v3770 = vpack.c.b16 %v3751, %v3750
  %v3771 = vpack.c.b16 %v3753, %v3752
  %v3772 = vpack.c.b16 %v3755, %v3754
  %v3773 = vpack.c.b16 %v3757, %v3756
  %v3774 = vpack.c.b16 %v3759, %v3758
  %v3775 = vpack.c.b16 %v3761, %v3760
  %v3776 = vpack.c.b16 %v3763, %v3762
  %v3777 = vpack.c.b16 %v3765, %v3764
  %v3778 = vpack.c.b16 %v3767, %v3766
  %v3779 = vpack.c.b16 %v3769, %v3768
  %v3791 = vsel %vm3694, %v3728, 0
  %3793 = vmatpush.bf16.msra.mxu0 %v3777
  %3794 = vmatpush.bf16.msra.mxu0 %v3776
  %3795 = vmatpush.bf16.msra.mxu0 %v3775
  %3796 = vmatpush.bf16.msra.mxu0 %v3774
  %3797 = vmatpush.bf16.msra.mxu0 %v3773
  %3798 = vmatpush.bf16.msra.mxu0 %v3772
  %3799 = vmatpush.bf16.msra.mxu0 %v3771
  %3800 = vmatpush.bf16.msra.mxu0 %v3770
  %3801 = vmatmul.bf16.gmra.mxu0 %v3727
  %v3802 = vpop.f32.mrf.mxu0
  %v3803 = vadd.f32 %v3721, %v3802
  %v3804 = vpop.f32.mrf.mxu0
  %3805 = vdwg.mxu0
  %3806 = vmatpush.bf16.msra.mxu0 0
  %3807 = vmatpush.bf16.msra.mxu0 0
  %3808 = vmatpush.bf16.msra.mxu0 0
  %3809 = vmatpush.bf16.msra.mxu0 0
  %3810 = vmatpush.bf16.msra.mxu0 0
  %3811 = vmatpush.bf16.msra.mxu0 0
  %3812 = vmatpush.bf16.msra.mxu0 %v3779
  %3813 = vmatpush.bf16.msra.mxu0 %v3778
  %3814 = vmatmul.bf16.gmra.mxu0 %v3791
  %v3815 = vpop.f32.mrf.mxu0
  %v3816 = vadd.f32 %v3803, %v3815
  %v3817 = vpop.f32.mrf.mxu0
  %3818 = vdwg.mxu0
  %s3819 = scalar_lea.vmem %s11, 160
  %v3820 = vld [vmem:[%s3819] sm:$0xf]
  %v3821 = vld [vmem:[%s3819 + $0x4] sm:$0xf]
  %v3822 = vld [vmem:[%s3819 + $0x8] sm:$0xf]
  %v3823 = vld [vmem:[%s3819 + $0xc] sm:$0xf]
  %v3824 = vld [vmem:[%s3819 + $0x10] sm:$0xf]
  %v3825 = vld [vmem:[%s3819 + $0x14] sm:$0xf]
  %v3826 = vld [vmem:[%s3819 + $0x18] sm:$0xf]
  %v3827 = vld [vmem:[%s3819 + $0x1c] sm:$0xf]
  %v3828 = vld [vmem:[%s3819 + $0x20] sm:$0xf]
  %v3829 = vld [vmem:[%s3819 + $0x24] sm:$0xf]
  %v3830 = vld [vmem:[%s3819 + $0x28] sm:$0xf]
  %v3831 = vld [vmem:[%s3819 + $0x2c] sm:$0xf]
  %v3832 = vld [vmem:[%s3819 + $0x30] sm:$0xf]
  %v3833 = vld [vmem:[%s3819 + $0x34] sm:$0xf]
  %v3834 = vld [vmem:[%s3819 + $0x38] sm:$0xf]
  %v3835 = vld [vmem:[%s3819 + $0x3c] sm:$0xf]
  %v3836 = vld [vmem:[%s3819 + $0x40] sm:$0xf]
  %v3837 = vld [vmem:[%s3819 + $0x44] sm:$0xf]
  %v3838 = vld [vmem:[%s3819 + $0x48] sm:$0xf]
  %v3839 = vld [vmem:[%s3819 + $0x4c] sm:$0xf]
  %v3841 = vunpack.c.l.b16 %v3585
  %v3842 = vunpack.c.h.b16 %v3585
  %v3843 = vpack.c.b16 %v3841, %v3841
  %v3844 = vpack.c.b16 %v3842, %v3842
  %v3866 = vunpack.c.l.b16 %v3820
  %v3867 = vunpack.c.l.b16 %v3821
  %v3868 = vunpack.c.l.b16 %v3822
  %v3869 = vunpack.c.l.b16 %v3823
  %v3870 = vunpack.c.l.b16 %v3824
  %v3871 = vunpack.c.l.b16 %v3825
  %v3872 = vunpack.c.l.b16 %v3826
  %v3873 = vunpack.c.l.b16 %v3827
  %v3874 = vunpack.c.l.b16 %v3828
  %v3875 = vunpack.c.l.b16 %v3829
  %v3876 = vunpack.c.l.b16 %v3830
  %v3877 = vunpack.c.l.b16 %v3831
  %v3878 = vunpack.c.l.b16 %v3832
  %v3879 = vunpack.c.l.b16 %v3833
  %v3880 = vunpack.c.l.b16 %v3834
  %v3881 = vunpack.c.l.b16 %v3835
  %v3882 = vunpack.c.l.b16 %v3836
  %v3883 = vunpack.c.l.b16 %v3837
  %v3884 = vunpack.c.l.b16 %v3838
  %v3885 = vunpack.c.l.b16 %v3839
  %v3886 = vpack.c.b16 %v3867, %v3866
  %v3887 = vpack.c.b16 %v3869, %v3868
  %v3888 = vpack.c.b16 %v3871, %v3870
  %v3889 = vpack.c.b16 %v3873, %v3872
  %v3890 = vpack.c.b16 %v3875, %v3874
  %v3891 = vpack.c.b16 %v3877, %v3876
  %v3892 = vpack.c.b16 %v3879, %v3878
  %v3893 = vpack.c.b16 %v3881, %v3880
  %v3894 = vpack.c.b16 %v3883, %v3882
  %v3895 = vpack.c.b16 %v3885, %v3884
  %v3907 = vsel %vm3694, %v3844, 0
  %3909 = vmatpush.bf16.msra.mxu0 %v3893
  %3910 = vmatpush.bf16.msra.mxu0 %v3892
  %3911 = vmatpush.bf16.msra.mxu0 %v3891
  %3912 = vmatpush.bf16.msra.mxu0 %v3890
  %3913 = vmatpush.bf16.msra.mxu0 %v3889
  %3914 = vmatpush.bf16.msra.mxu0 %v3888
  %3915 = vmatpush.bf16.msra.mxu0 %v3887
  %3916 = vmatpush.bf16.msra.mxu0 %v3886
  %3917 = vmatmul.bf16.gmra.mxu0 %v3843
  %v3918 = vpop.f32.mrf.mxu0
  %v3919 = vadd.f32 0.0, %v3918
  %v3920 = vpop.f32.mrf.mxu0
  %3921 = vdwg.mxu0
  %3922 = vmatpush.bf16.msra.mxu0 0
  %3923 = vmatpush.bf16.msra.mxu0 0
  %3924 = vmatpush.bf16.msra.mxu0 0
  %3925 = vmatpush.bf16.msra.mxu0 0
  %3926 = vmatpush.bf16.msra.mxu0 0
  %3927 = vmatpush.bf16.msra.mxu0 0
  %3928 = vmatpush.bf16.msra.mxu0 %v3895
  %3929 = vmatpush.bf16.msra.mxu0 %v3894
  %3930 = vmatmul.bf16.gmra.mxu0 %v3907
  %v3931 = vpop.f32.mrf.mxu0
  %v3932 = vadd.f32 %v3919, %v3931
  %v3933 = vpop.f32.mrf.mxu0
  %3934 = vdwg.mxu0
  %v3935 = vadd.f32 %v3816, %v3932
  %s3936 = scalar_lea.vmem %s11, 240
  %v3937 = vld [vmem:[%s3936] sm:$0xf]
  %v3938 = vld [vmem:[%s3936 + $0x4] sm:$0xf]
  %v3939 = vld [vmem:[%s3936 + $0x8] sm:$0xf]
  %v3940 = vld [vmem:[%s3936 + $0xc] sm:$0xf]
  %v3941 = vld [vmem:[%s3936 + $0x10] sm:$0xf]
  %v3942 = vld [vmem:[%s3936 + $0x14] sm:$0xf]
  %v3943 = vld [vmem:[%s3936 + $0x18] sm:$0xf]
  %v3944 = vld [vmem:[%s3936 + $0x1c] sm:$0xf]
  %v3945 = vld [vmem:[%s3936 + $0x20] sm:$0xf]
  %v3946 = vld [vmem:[%s3936 + $0x24] sm:$0xf]
  %v3947 = vld [vmem:[%s3936 + $0x28] sm:$0xf]
  %v3948 = vld [vmem:[%s3936 + $0x2c] sm:$0xf]
  %v3949 = vld [vmem:[%s3936 + $0x30] sm:$0xf]
  %v3950 = vld [vmem:[%s3936 + $0x34] sm:$0xf]
  %v3951 = vld [vmem:[%s3936 + $0x38] sm:$0xf]
  %v3952 = vld [vmem:[%s3936 + $0x3c] sm:$0xf]
  %v3953 = vld [vmem:[%s3936 + $0x40] sm:$0xf]
  %v3954 = vld [vmem:[%s3936 + $0x44] sm:$0xf]
  %v3955 = vld [vmem:[%s3936 + $0x48] sm:$0xf]
  %v3956 = vld [vmem:[%s3936 + $0x4c] sm:$0xf]
  %v3958 = vunpack.c.l.b16 %v3586
  %v3959 = vunpack.c.h.b16 %v3586
  %v3960 = vpack.c.b16 %v3958, %v3958
  %v3961 = vpack.c.b16 %v3959, %v3959
  %v3983 = vunpack.c.l.b16 %v3937
  %v3984 = vunpack.c.l.b16 %v3938
  %v3985 = vunpack.c.l.b16 %v3939
  %v3986 = vunpack.c.l.b16 %v3940
  %v3987 = vunpack.c.l.b16 %v3941
  %v3988 = vunpack.c.l.b16 %v3942
  %v3989 = vunpack.c.l.b16 %v3943
  %v3990 = vunpack.c.l.b16 %v3944
  %v3991 = vunpack.c.l.b16 %v3945
  %v3992 = vunpack.c.l.b16 %v3946
  %v3993 = vunpack.c.l.b16 %v3947
  %v3994 = vunpack.c.l.b16 %v3948
  %v3995 = vunpack.c.l.b16 %v3949
  %v3996 = vunpack.c.l.b16 %v3950
  %v3997 = vunpack.c.l.b16 %v3951
  %v3998 = vunpack.c.l.b16 %v3952
  %v3999 = vunpack.c.l.b16 %v3953
  %v4000 = vunpack.c.l.b16 %v3954
  %v4001 = vunpack.c.l.b16 %v3955
  %v4002 = vunpack.c.l.b16 %v3956
  %v4003 = vpack.c.b16 %v3984, %v3983
  %v4004 = vpack.c.b16 %v3986, %v3985
  %v4005 = vpack.c.b16 %v3988, %v3987
  %v4006 = vpack.c.b16 %v3990, %v3989
  %v4007 = vpack.c.b16 %v3992, %v3991
  %v4008 = vpack.c.b16 %v3994, %v3993
  %v4009 = vpack.c.b16 %v3996, %v3995
  %v4010 = vpack.c.b16 %v3998, %v3997
  %v4011 = vpack.c.b16 %v4000, %v3999
  %v4012 = vpack.c.b16 %v4002, %v4001
  %v4024 = vsel %vm3694, %v3961, 0
  %4026 = vmatpush.bf16.msra.mxu0 %v4010
  %4027 = vmatpush.bf16.msra.mxu0 %v4009
  %4028 = vmatpush.bf16.msra.mxu0 %v4008
  %4029 = vmatpush.bf16.msra.mxu0 %v4007
  %4030 = vmatpush.bf16.msra.mxu0 %v4006
  %4031 = vmatpush.bf16.msra.mxu0 %v4005
  %4032 = vmatpush.bf16.msra.mxu0 %v4004
  %4033 = vmatpush.bf16.msra.mxu0 %v4003
  %4034 = vmatmul.bf16.gmra.mxu0 %v3960
  %v4035 = vpop.f32.mrf.mxu0
  %v4036 = vadd.f32 0.0, %v4035
  %v4037 = vpop.f32.mrf.mxu0
  %4038 = vdwg.mxu0
  %4039 = vmatpush.bf16.msra.mxu0 0
  %4040 = vmatpush.bf16.msra.mxu0 0
  %4041 = vmatpush.bf16.msra.mxu0 0
  %4042 = vmatpush.bf16.msra.mxu0 0
  %4043 = vmatpush.bf16.msra.mxu0 0
  %4044 = vmatpush.bf16.msra.mxu0 0
  %4045 = vmatpush.bf16.msra.mxu0 %v4012
  %4046 = vmatpush.bf16.msra.mxu0 %v4011
  %4047 = vmatmul.bf16.gmra.mxu0 %v4024
  %v4048 = vpop.f32.mrf.mxu0
  %v4049 = vadd.f32 %v4036, %v4048
  %v4050 = vpop.f32.mrf.mxu0
  %4051 = vdwg.mxu0
  %v4052 = vadd.f32 %v3935, %v4049
  %v4053 = vld [vmem:[%s12] sm:$0x1]
  %v4055 = vperm.slane %v4053, 0
  %v4057 = vadd.f32 %v4052, %v4055
  %vm4058 = vcmp.ge.f32.partialorder %v4057, 0.0
  %v4059 = vmul.f32 %v4057, 0.01
  %v4060 = vsel %vm4058, %v4057, %v4059
  %v4061 = vpack.c.bf16 %v4060, %v4060
  %vm4062 = vcmask 523268
  %vm4063 = vmor %vm4062, %vm1683
  %4064 = vst.msk [vmem:[#allocation5] sm:$0xff] %vm4063, 0
  %vm4065 = vcmask 521220
  %vm4066 = vmor %vm4065, %vm387
  %4067 = vst.msk [vmem:[#allocation5 + $0x8] sm:$0x33] %vm4066, 0
  %v4069 = vshrl.u32 %v4061, 16
  %v4071 = vrot.slane %v4069, 7
  %v4072 = vshll.u32 %v4061, 16
  %v4074 = vor.u32 %v4071, %v4072
  %4075 = vrot.lane.b32.xlu0 %v4074, 32
  %v4076 = vpop.permute.xlu0 %4075
  %v4077 = vrot.slane %v4076, 4
  %vm4078 = vcmask 261120
  %v4079 = vsel %vm4078, %v4077, %v4076
  %vm4081 = vcmask 1042688
  %vm4082 = vsmask.f32 2306
  %vm4083 = vmand %vm4081, %vm4082
  %vm4084 = vcmask 260100
  %vm4085 = vsmask.f32 6418
  %vm4086 = vmand %vm4084, %vm4085
  %vm4087 = vmor %vm4086, %vm4083
  %v4088 = vld [vmem:[#allocation5] sm:$0x77]
  %v4089 = vsel %vm4087, %v4079, %v4088
  %4090 = vst [vmem:[#allocation5] sm:$0x77] %v4089
  %v4091 = vrot.slane %v4072, 7
  %v4092 = vrot.slane %v4069, 6
  %v4093 = vor.u32 %v4092, %v4091
  %v4094 = vrot.slane %v4093, 4
  %4095 = vrot.lane.b32.xlu0 %v4091, 32
  %v4096 = vpop.permute.xlu0 %4095
  %4097 = vrot.lane.b32.xlu0 %v4094, 32
  %v4098 = vpop.permute.xlu0 %4097
  %v4099 = vrot.slane %v4096, 4
  %v4100 = vrot.slane %v4098, 4
  %v4101 = vsel %vm4078, %v4099, %v4096
  %v4102 = vsel %vm4078, %v4100, %v4098
  %vm4105 = vcmask 1043715
  %vm4106 = vsmask.f32 7950
  %vm4107 = vmand %vm4105, %vm4106
  %vm4108 = vcmask 261127
  %vm4109 = vsmask.f32 7966
  %vm4110 = vmand %vm4108, %vm4109
  %vm4111 = vmor %vm4110, %vm4107
  %v4112 = vld [vmem:[#allocation5] sm:$0x88]
  %v4113 = vsel %vm4111, %v4101, %v4112
  %4114 = vst [vmem:[#allocation5] sm:$0x88] %v4113
  %vm4115 = vcmask 1041664
  %vm4116 = vmand %vm4115, %vm1786
  %vm4117 = vcmask 259076
  %vm4118 = vmand %vm4117, %vm1869
  %vm4119 = vmor %vm4118, %vm4116
  %v4120 = vld [vmem:[#allocation5 + $0x8] sm:$0x33]
  %v4121 = vsel %vm4119, %v4102, %v4120
  %4122 = vst [vmem:[#allocation5 + $0x8] sm:$0x33] %v4121
  %v4123 = vld [vmem:[#allocation5] sm:$0xff]
  %v4124 = vld [vmem:[#allocation5 + $0x8] sm:$0x33]
  %v4125 = vld [vmem:[%s13] sm:$0xf]
  %v4126 = vld [vmem:[%s13 + $0x4] sm:$0xf]
  %v4129 = vunpack.c.l.b16 %v4125
  %v4130 = vunpack.c.l.b16 %v4126
  %v4131 = vpack.c.b16 %v4130, %v4129
  %v4134 = vunpack.c.l.b16 %v4123
  %v4135 = vunpack.c.h.b16 %v4123
  %v4136 = vunpack.c.l.b16 %v4124
  %v4137 = vunpack.c.h.b16 %v4124
  %v4138 = vpack.c.b16 %v4136, %v4134
  %v4139 = vpack.c.b16 %v4137, %v4135
  %vm4140 = vcmask 97280
  %v4142 = vsel %vm4140, %v4131, 0
  %vm4144 = vcmask 1045504
  %v4146 = vsel %vm4144, %v4138, 0
  %v4149 = vsel %vm4144, %v4139, 0
  %4151 = vmatpush.bf16.msra.mxu0 0
  %4152 = vmatpush.bf16.msra.mxu0 0
  %4153 = vmatpush.bf16.msra.mxu0 0
  %4154 = vmatpush.bf16.msra.mxu0 0
  %4155 = vmatpush.bf16.msra.mxu0 0
  %4156 = vmatpush.bf16.msra.mxu0 0
  %4157 = vmatpush.bf16.msra.mxu0 0
  %4158 = vmatpush.bf16.msra.mxu0 %v4146
  %4159 = vmatmul.bf16.gmra.mxu0 %v4142
  %v4160 = vpop.f32.mrf.mxu0
  %v4161 = vadd.f32 0.0, %v4160
  %v4162 = vpop.f32.mrf.mxu0
  %v4163 = vadd.f32 0.0, %v4162
  %4164 = vdwg.mxu0
  %4165 = vmatpush.bf16.msra.mxu0 0
  %4166 = vmatpush.bf16.msra.mxu0 0
  %4167 = vmatpush.bf16.msra.mxu0 0
  %4168 = vmatpush.bf16.msra.mxu0 0
  %4169 = vmatpush.bf16.msra.mxu0 0
  %4170 = vmatpush.bf16.msra.mxu0 0
  %4171 = vmatpush.bf16.msra.mxu0 0
  %4172 = vmatpush.bf16.msra.mxu0 %v4149
  %4173 = vmatmul.bf16.gmra.mxu0 %v4142
  %v4174 = vpop.f32.mrf.mxu0
  %v4175 = vadd.f32 0.0, %v4174
  %v4176 = vpop.f32.mrf.mxu0
  %v4177 = vadd.f32 0.0, %v4176
  %4178 = vdwg.mxu0
  %v4179 = vpack.c.bf16 %v4175, %v4161
  %v4180 = vpack.c.bf16 %v4177, %v4163
  %v4181 = vld [vmem:[%s14] sm:$0xf]
  %v4182 = vld [vmem:[%s14 + $0x4] sm:$0xf]
  %v4183 = vld [vmem:[%s14 + $0x8] sm:$0xf]
  %v4184 = vld [vmem:[%s14 + $0xc] sm:$0xf]
  %v4185 = vld [vmem:[%s14 + $0x10] sm:$0xf]
  %v4186 = vld [vmem:[%s14 + $0x14] sm:$0xf]
  %v4187 = vld [vmem:[%s14 + $0x18] sm:$0xf]
  %v4188 = vld [vmem:[%s14 + $0x1c] sm:$0xf]
  %v4189 = vld [vmem:[%s14 + $0x20] sm:$0xf]
  %v4190 = vld [vmem:[%s14 + $0x24] sm:$0xf]
  %v4191 = vld [vmem:[%s14 + $0x28] sm:$0xf]
  %v4192 = vld [vmem:[%s14 + $0x2c] sm:$0xf]
  %v4193 = vld [vmem:[%s14 + $0x30] sm:$0xf]
  %v4194 = vld [vmem:[%s14 + $0x34] sm:$0xf]
  %v4195 = vld [vmem:[%s14 + $0x38] sm:$0xf]
  %v4196 = vld [vmem:[%s14 + $0x3c] sm:$0xf]
  %v4197 = vld [vmem:[%s14 + $0x40] sm:$0xf]
  %v4198 = vld [vmem:[%s14 + $0x44] sm:$0xf]
  %v4199 = vld [vmem:[%s14 + $0x48] sm:$0xf]
  %v4200 = vld [vmem:[%s14 + $0x4c] sm:$0xf]
  %v4201 = vld [vmem:[%s14 + $0x50] sm:$0xf]
  %v4202 = vld [vmem:[%s14 + $0x54] sm:$0xf]
  %v4203 = vld [vmem:[%s14 + $0x58] sm:$0xf]
  %v4204 = vld [vmem:[%s14 + $0x5c] sm:$0xf]
  %s4205 = scalar_lea.vmem %s14, 96
  %v4206 = vld [vmem:[%s4205] sm:$0xf]
  %v4207 = vld [vmem:[%s4205 + $0x4] sm:$0xf]
  %v4208 = vld [vmem:[%s4205 + $0x8] sm:$0xf]
  %v4209 = vld [vmem:[%s4205 + $0xc] sm:$0xf]
  %v4210 = vld [vmem:[%s4205 + $0x10] sm:$0xf]
  %v4211 = vld [vmem:[%s4205 + $0x14] sm:$0xf]
  %v4212 = vld [vmem:[%s4205 + $0x18] sm:$0xf]
  %v4213 = vld [vmem:[%s4205 + $0x1c] sm:$0xf]
  %v4214 = vld [vmem:[%s4205 + $0x20] sm:$0xf]
  %v4215 = vld [vmem:[%s4205 + $0x24] sm:$0xf]
  %v4216 = vld [vmem:[%s4205 + $0x28] sm:$0xf]
  %v4217 = vld [vmem:[%s4205 + $0x2c] sm:$0xf]
  %v4218 = vld [vmem:[%s4205 + $0x30] sm:$0xf]
  %v4219 = vld [vmem:[%s4205 + $0x34] sm:$0xf]
  %v4220 = vld [vmem:[%s4205 + $0x38] sm:$0xf]
  %v4221 = vld [vmem:[%s4205 + $0x3c] sm:$0xf]
  %v4222 = vld [vmem:[%s4205 + $0x40] sm:$0xf]
  %v4223 = vld [vmem:[%s4205 + $0x44] sm:$0xf]
  %v4224 = vld [vmem:[%s4205 + $0x48] sm:$0xf]
  %v4225 = vld [vmem:[%s4205 + $0x4c] sm:$0xf]
  %v4226 = vld [vmem:[%s4205 + $0x50] sm:$0xf]
  %v4227 = vld [vmem:[%s4205 + $0x54] sm:$0xf]
  %v4228 = vld [vmem:[%s4205 + $0x58] sm:$0xf]
  %v4229 = vld [vmem:[%s4205 + $0x5c] sm:$0xf]
  %v4231 = vunpack.c.l.b16 %v4179
  %v4232 = vunpack.c.h.b16 %v4179
  %v4233 = vpack.c.b16 %v4231, %v4231
  %v4234 = vpack.c.b16 %v4232, %v4232
  %v4235 = vrot.slane %v4233, 2
  %v4236 = vrot.slane %v4234, 2
  %v4262 = vunpack.c.l.b16 %v4206
  %v4263 = vunpack.c.l.b16 %v4207
  %v4264 = vunpack.c.l.b16 %v4208
  %v4265 = vunpack.c.l.b16 %v4209
  %v4266 = vunpack.c.l.b16 %v4210
  %v4267 = vunpack.c.l.b16 %v4211
  %v4268 = vunpack.c.l.b16 %v4212
  %v4269 = vunpack.c.l.b16 %v4213
  %v4270 = vunpack.c.l.b16 %v4214
  %v4271 = vunpack.c.l.b16 %v4215
  %v4272 = vunpack.c.l.b16 %v4216
  %v4273 = vunpack.c.l.b16 %v4217
  %v4274 = vunpack.c.l.b16 %v4218
  %v4275 = vunpack.c.l.b16 %v4219
  %v4276 = vunpack.c.l.b16 %v4220
  %v4277 = vunpack.c.l.b16 %v4221
  %v4278 = vunpack.c.l.b16 %v4222
  %v4279 = vunpack.c.l.b16 %v4223
  %v4280 = vunpack.c.l.b16 %v4224
  %v4281 = vunpack.c.l.b16 %v4225
  %v4282 = vunpack.c.l.b16 %v4226
  %v4283 = vunpack.c.l.b16 %v4227
  %v4284 = vunpack.c.l.b16 %v4228
  %v4285 = vunpack.c.l.b16 %v4229
  %v4286 = vpack.c.b16 %v4263, %v4262
  %v4287 = vpack.c.b16 %v4265, %v4264
  %v4288 = vpack.c.b16 %v4267, %v4266
  %v4289 = vpack.c.b16 %v4269, %v4268
  %v4290 = vpack.c.b16 %v4271, %v4270
  %v4291 = vpack.c.b16 %v4273, %v4272
  %v4292 = vpack.c.b16 %v4275, %v4274
  %v4293 = vpack.c.b16 %v4277, %v4276
  %v4294 = vpack.c.b16 %v4279, %v4278
  %v4295 = vpack.c.b16 %v4281, %v4280
  %v4296 = vpack.c.b16 %v4283, %v4282
  %v4297 = vpack.c.b16 %v4285, %v4284
  %vm4310 = vcmask 523264
  %v4312 = vsel %vm4310, %v4236, 0
  %4314 = vmatpush.bf16.msra.mxu0 %v4293
  %4315 = vmatpush.bf16.msra.mxu0 %v4292
  %4316 = vmatpush.bf16.msra.mxu0 %v4291
  %4317 = vmatpush.bf16.msra.mxu0 %v4290
  %4318 = vmatpush.bf16.msra.mxu0 %v4289
  %4319 = vmatpush.bf16.msra.mxu0 %v4288
  %4320 = vmatpush.bf16.msra.mxu0 %v4287
  %4321 = vmatpush.bf16.msra.mxu0 %v4286
  %4322 = vmatmul.bf16.gmra.mxu0 %v4235
  %v4323 = vpop.f32.mrf.mxu0
  %v4324 = vadd.f32 0.0, %v4323
  %v4325 = vpop.f32.mrf.mxu0
  %4326 = vdwg.mxu0
  %4327 = vmatpush.bf16.msra.mxu0 0
  %4328 = vmatpush.bf16.msra.mxu0 0
  %4329 = vmatpush.bf16.msra.mxu0 0
  %4330 = vmatpush.bf16.msra.mxu0 0
  %4331 = vmatpush.bf16.msra.mxu0 %v4297
  %4332 = vmatpush.bf16.msra.mxu0 %v4296
  %4333 = vmatpush.bf16.msra.mxu0 %v4295
  %4334 = vmatpush.bf16.msra.mxu0 %v4294
  %4335 = vmatmul.bf16.gmra.mxu0 %v4312
  %v4336 = vpop.f32.mrf.mxu0
  %v4337 = vadd.f32 %v4324, %v4336
  %v4338 = vpop.f32.mrf.mxu0
  %4339 = vdwg.mxu0
  %v4365 = vunpack.c.l.b16 %v4181
  %v4366 = vunpack.c.l.b16 %v4182
  %v4367 = vunpack.c.l.b16 %v4183
  %v4368 = vunpack.c.l.b16 %v4184
  %v4369 = vunpack.c.l.b16 %v4185
  %v4370 = vunpack.c.l.b16 %v4186
  %v4371 = vunpack.c.l.b16 %v4187
  %v4372 = vunpack.c.l.b16 %v4188
  %v4373 = vunpack.c.l.b16 %v4189
  %v4374 = vunpack.c.l.b16 %v4190
  %v4375 = vunpack.c.l.b16 %v4191
  %v4376 = vunpack.c.l.b16 %v4192
  %v4377 = vunpack.c.l.b16 %v4193
  %v4378 = vunpack.c.l.b16 %v4194
  %v4379 = vunpack.c.l.b16 %v4195
  %v4380 = vunpack.c.l.b16 %v4196
  %v4381 = vunpack.c.l.b16 %v4197
  %v4382 = vunpack.c.l.b16 %v4198
  %v4383 = vunpack.c.l.b16 %v4199
  %v4384 = vunpack.c.l.b16 %v4200
  %v4385 = vunpack.c.l.b16 %v4201
  %v4386 = vunpack.c.l.b16 %v4202
  %v4387 = vunpack.c.l.b16 %v4203
  %v4388 = vunpack.c.l.b16 %v4204
  %v4389 = vpack.c.b16 %v4366, %v4365
  %v4390 = vpack.c.b16 %v4368, %v4367
  %v4391 = vpack.c.b16 %v4370, %v4369
  %v4392 = vpack.c.b16 %v4372, %v4371
  %v4393 = vpack.c.b16 %v4374, %v4373
  %v4394 = vpack.c.b16 %v4376, %v4375
  %v4395 = vpack.c.b16 %v4378, %v4377
  %v4396 = vpack.c.b16 %v4380, %v4379
  %v4397 = vpack.c.b16 %v4382, %v4381
  %v4398 = vpack.c.b16 %v4384, %v4383
  %v4399 = vpack.c.b16 %v4386, %v4385
  %v4400 = vpack.c.b16 %v4388, %v4387
  %v4414 = vsel %vm4310, %v4234, 0
  %4416 = vmatpush.bf16.msra.mxu0 %v4396
  %4417 = vmatpush.bf16.msra.mxu0 %v4395
  %4418 = vmatpush.bf16.msra.mxu0 %v4394
  %4419 = vmatpush.bf16.msra.mxu0 %v4393
  %4420 = vmatpush.bf16.msra.mxu0 %v4392
  %4421 = vmatpush.bf16.msra.mxu0 %v4391
  %4422 = vmatpush.bf16.msra.mxu0 %v4390
  %4423 = vmatpush.bf16.msra.mxu0 %v4389
  %4424 = vmatmul.bf16.gmra.mxu0 %v4233
  %v4425 = vpop.f32.mrf.mxu0
  %v4426 = vadd.f32 %v4337, %v4425
  %v4427 = vpop.f32.mrf.mxu0
  %4428 = vdwg.mxu0
  %4429 = vmatpush.bf16.msra.mxu0 0
  %4430 = vmatpush.bf16.msra.mxu0 0
  %4431 = vmatpush.bf16.msra.mxu0 0
  %4432 = vmatpush.bf16.msra.mxu0 0
  %4433 = vmatpush.bf16.msra.mxu0 %v4400
  %4434 = vmatpush.bf16.msra.mxu0 %v4399
  %4435 = vmatpush.bf16.msra.mxu0 %v4398
  %4436 = vmatpush.bf16.msra.mxu0 %v4397
  %4437 = vmatmul.bf16.gmra.mxu0 %v4414
  %v4438 = vpop.f32.mrf.mxu0
  %v4439 = vadd.f32 %v4426, %v4438
  %v4440 = vpop.f32.mrf.mxu0
  %4441 = vdwg.mxu0
  %s4442 = scalar_lea.vmem %s14, 192
  %v4443 = vld [vmem:[%s4442] sm:$0xf]
  %v4444 = vld [vmem:[%s4442 + $0x4] sm:$0xf]
  %v4445 = vld [vmem:[%s4442 + $0x8] sm:$0xf]
  %v4446 = vld [vmem:[%s4442 + $0xc] sm:$0xf]
  %v4447 = vld [vmem:[%s4442 + $0x10] sm:$0xf]
  %v4448 = vld [vmem:[%s4442 + $0x14] sm:$0xf]
  %v4449 = vld [vmem:[%s4442 + $0x18] sm:$0xf]
  %v4450 = vld [vmem:[%s4442 + $0x1c] sm:$0xf]
  %v4451 = vld [vmem:[%s4442 + $0x20] sm:$0xf]
  %v4452 = vld [vmem:[%s4442 + $0x24] sm:$0xf]
  %v4453 = vld [vmem:[%s4442 + $0x28] sm:$0xf]
  %v4454 = vld [vmem:[%s4442 + $0x2c] sm:$0xf]
  %v4455 = vld [vmem:[%s4442 + $0x30] sm:$0xf]
  %v4456 = vld [vmem:[%s4442 + $0x34] sm:$0xf]
  %v4457 = vld [vmem:[%s4442 + $0x38] sm:$0xf]
  %v4458 = vld [vmem:[%s4442 + $0x3c] sm:$0xf]
  %v4459 = vld [vmem:[%s4442 + $0x40] sm:$0xf]
  %v4460 = vld [vmem:[%s4442 + $0x44] sm:$0xf]
  %v4461 = vld [vmem:[%s4442 + $0x48] sm:$0xf]
  %v4462 = vld [vmem:[%s4442 + $0x4c] sm:$0xf]
  %v4463 = vld [vmem:[%s4442 + $0x50] sm:$0xf]
  %v4464 = vld [vmem:[%s4442 + $0x54] sm:$0xf]
  %v4465 = vld [vmem:[%s4442 + $0x58] sm:$0xf]
  %v4466 = vld [vmem:[%s4442 + $0x5c] sm:$0xf]
  %v4468 = vunpack.c.l.b16 %v4180
  %v4469 = vunpack.c.h.b16 %v4180
  %v4470 = vpack.c.b16 %v4468, %v4468
  %v4471 = vpack.c.b16 %v4469, %v4469
  %v4497 = vunpack.c.l.b16 %v4443
  %v4498 = vunpack.c.l.b16 %v4444
  %v4499 = vunpack.c.l.b16 %v4445
  %v4500 = vunpack.c.l.b16 %v4446
  %v4501 = vunpack.c.l.b16 %v4447
  %v4502 = vunpack.c.l.b16 %v4448
  %v4503 = vunpack.c.l.b16 %v4449
  %v4504 = vunpack.c.l.b16 %v4450
  %v4505 = vunpack.c.l.b16 %v4451
  %v4506 = vunpack.c.l.b16 %v4452
  %v4507 = vunpack.c.l.b16 %v4453
  %v4508 = vunpack.c.l.b16 %v4454
  %v4509 = vunpack.c.l.b16 %v4455
  %v4510 = vunpack.c.l.b16 %v4456
  %v4511 = vunpack.c.l.b16 %v4457
  %v4512 = vunpack.c.l.b16 %v4458
  %v4513 = vunpack.c.l.b16 %v4459
  %v4514 = vunpack.c.l.b16 %v4460
  %v4515 = vunpack.c.l.b16 %v4461
  %v4516 = vunpack.c.l.b16 %v4462
  %v4517 = vunpack.c.l.b16 %v4463
  %v4518 = vunpack.c.l.b16 %v4464
  %v4519 = vunpack.c.l.b16 %v4465
  %v4520 = vunpack.c.l.b16 %v4466
  %v4521 = vpack.c.b16 %v4498, %v4497
  %v4522 = vpack.c.b16 %v4500, %v4499
  %v4523 = vpack.c.b16 %v4502, %v4501
  %v4524 = vpack.c.b16 %v4504, %v4503
  %v4525 = vpack.c.b16 %v4506, %v4505
  %v4526 = vpack.c.b16 %v4508, %v4507
  %v4527 = vpack.c.b16 %v4510, %v4509
  %v4528 = vpack.c.b16 %v4512, %v4511
  %v4529 = vpack.c.b16 %v4514, %v4513
  %v4530 = vpack.c.b16 %v4516, %v4515
  %v4531 = vpack.c.b16 %v4518, %v4517
  %v4532 = vpack.c.b16 %v4520, %v4519
  %v4546 = vsel %vm4310, %v4471, 0
  %4548 = vmatpush.bf16.msra.mxu0 %v4528
  %4549 = vmatpush.bf16.msra.mxu0 %v4527
  %4550 = vmatpush.bf16.msra.mxu0 %v4526
  %4551 = vmatpush.bf16.msra.mxu0 %v4525
  %4552 = vmatpush.bf16.msra.mxu0 %v4524
  %4553 = vmatpush.bf16.msra.mxu0 %v4523
  %4554 = vmatpush.bf16.msra.mxu0 %v4522
  %4555 = vmatpush.bf16.msra.mxu0 %v4521
  %4556 = vmatmul.bf16.gmra.mxu0 %v4470
  %v4557 = vpop.f32.mrf.mxu0
  %v4558 = vadd.f32 0.0, %v4557
  %v4559 = vpop.f32.mrf.mxu0
  %4560 = vdwg.mxu0
  %4561 = vmatpush.bf16.msra.mxu0 0
  %4562 = vmatpush.bf16.msra.mxu0 0
  %4563 = vmatpush.bf16.msra.mxu0 0
  %4564 = vmatpush.bf16.msra.mxu0 0
  %4565 = vmatpush.bf16.msra.mxu0 %v4532
  %4566 = vmatpush.bf16.msra.mxu0 %v4531
  %4567 = vmatpush.bf16.msra.mxu0 %v4530
  %4568 = vmatpush.bf16.msra.mxu0 %v4529
  %4569 = vmatmul.bf16.gmra.mxu0 %v4546
  %v4570 = vpop.f32.mrf.mxu0
  %v4571 = vadd.f32 %v4558, %v4570
  %v4572 = vpop.f32.mrf.mxu0
  %4573 = vdwg.mxu0
  %v4574 = vadd.f32 %v4439, %v4571
  %s4575 = scalar_lea.vmem %s14, 288
  %v4576 = vld [vmem:[%s4575] sm:$0xf]
  %v4577 = vld [vmem:[%s4575 + $0x4] sm:$0xf]
  %v4578 = vld [vmem:[%s4575 + $0x8] sm:$0xf]
  %v4579 = vld [vmem:[%s4575 + $0xc] sm:$0xf]
  %v4580 = vld [vmem:[%s4575 + $0x10] sm:$0xf]
  %v4581 = vld [vmem:[%s4575 + $0x14] sm:$0xf]
  %v4582 = vld [vmem:[%s4575 + $0x18] sm:$0xf]
  %v4583 = vld [vmem:[%s4575 + $0x1c] sm:$0xf]
  %v4584 = vld [vmem:[%s4575 + $0x20] sm:$0xf]
  %v4585 = vld [vmem:[%s4575 + $0x24] sm:$0xf]
  %v4586 = vld [vmem:[%s4575 + $0x28] sm:$0xf]
  %v4587 = vld [vmem:[%s4575 + $0x2c] sm:$0xf]
  %v4588 = vld [vmem:[%s4575 + $0x30] sm:$0xf]
  %v4589 = vld [vmem:[%s4575 + $0x34] sm:$0xf]
  %v4590 = vld [vmem:[%s4575 + $0x38] sm:$0xf]
  %v4591 = vld [vmem:[%s4575 + $0x3c] sm:$0xf]
  %v4592 = vld [vmem:[%s4575 + $0x40] sm:$0xf]
  %v4593 = vld [vmem:[%s4575 + $0x44] sm:$0xf]
  %v4594 = vld [vmem:[%s4575 + $0x48] sm:$0xf]
  %v4595 = vld [vmem:[%s4575 + $0x4c] sm:$0xf]
  %v4596 = vld [vmem:[%s4575 + $0x50] sm:$0xf]
  %v4597 = vld [vmem:[%s4575 + $0x54] sm:$0xf]
  %v4598 = vld [vmem:[%s4575 + $0x58] sm:$0xf]
  %v4599 = vld [vmem:[%s4575 + $0x5c] sm:$0xf]
  %v4600 = vrot.slane %v4470, 2
  %v4601 = vrot.slane %v4471, 2
  %v4627 = vunpack.c.l.b16 %v4576
  %v4628 = vunpack.c.l.b16 %v4577
  %v4629 = vunpack.c.l.b16 %v4578
  %v4630 = vunpack.c.l.b16 %v4579
  %v4631 = vunpack.c.l.b16 %v4580
  %v4632 = vunpack.c.l.b16 %v4581
  %v4633 = vunpack.c.l.b16 %v4582
  %v4634 = vunpack.c.l.b16 %v4583
  %v4635 = vunpack.c.l.b16 %v4584
  %v4636 = vunpack.c.l.b16 %v4585
  %v4637 = vunpack.c.l.b16 %v4586
  %v4638 = vunpack.c.l.b16 %v4587
  %v4639 = vunpack.c.l.b16 %v4588
  %v4640 = vunpack.c.l.b16 %v4589
  %v4641 = vunpack.c.l.b16 %v4590
  %v4642 = vunpack.c.l.b16 %v4591
  %v4643 = vunpack.c.l.b16 %v4592
  %v4644 = vunpack.c.l.b16 %v4593
  %v4645 = vunpack.c.l.b16 %v4594
  %v4646 = vunpack.c.l.b16 %v4595
  %v4647 = vunpack.c.l.b16 %v4596
  %v4648 = vunpack.c.l.b16 %v4597
  %v4649 = vunpack.c.l.b16 %v4598
  %v4650 = vunpack.c.l.b16 %v4599
  %v4651 = vpack.c.b16 %v4628, %v4627
  %v4652 = vpack.c.b16 %v4630, %v4629
  %v4653 = vpack.c.b16 %v4632, %v4631
  %v4654 = vpack.c.b16 %v4634, %v4633
  %v4655 = vpack.c.b16 %v4636, %v4635
  %v4656 = vpack.c.b16 %v4638, %v4637
  %v4657 = vpack.c.b16 %v4640, %v4639
  %v4658 = vpack.c.b16 %v4642, %v4641
  %v4659 = vpack.c.b16 %v4644, %v4643
  %v4660 = vpack.c.b16 %v4646, %v4645
  %v4661 = vpack.c.b16 %v4648, %v4647
  %v4662 = vpack.c.b16 %v4650, %v4649
  %v4676 = vsel %vm4310, %v4601, 0
  %4678 = vmatpush.bf16.msra.mxu0 %v4658
  %4679 = vmatpush.bf16.msra.mxu0 %v4657
  %4680 = vmatpush.bf16.msra.mxu0 %v4656
  %4681 = vmatpush.bf16.msra.mxu0 %v4655
  %4682 = vmatpush.bf16.msra.mxu0 %v4654
  %4683 = vmatpush.bf16.msra.mxu0 %v4653
  %4684 = vmatpush.bf16.msra.mxu0 %v4652
  %4685 = vmatpush.bf16.msra.mxu0 %v4651
  %4686 = vmatmul.bf16.gmra.mxu0 %v4600
  %v4687 = vpop.f32.mrf.mxu0
  %v4688 = vadd.f32 0.0, %v4687
  %v4689 = vpop.f32.mrf.mxu0
  %4690 = vdwg.mxu0
  %4691 = vmatpush.bf16.msra.mxu0 0
  %4692 = vmatpush.bf16.msra.mxu0 0
  %4693 = vmatpush.bf16.msra.mxu0 0
  %4694 = vmatpush.bf16.msra.mxu0 0
  %4695 = vmatpush.bf16.msra.mxu0 %v4662
  %4696 = vmatpush.bf16.msra.mxu0 %v4661
  %4697 = vmatpush.bf16.msra.mxu0 %v4660
  %4698 = vmatpush.bf16.msra.mxu0 %v4659
  %4699 = vmatmul.bf16.gmra.mxu0 %v4676
  %v4700 = vpop.f32.mrf.mxu0
  %v4701 = vadd.f32 %v4688, %v4700
  %v4702 = vpop.f32.mrf.mxu0
  %4703 = vdwg.mxu0
  %v4704 = vadd.f32 %v4574, %v4701
  %v4705 = vld [vmem:[%s15] sm:$0x1]
  %v4707 = vperm.slane %v4705, 0
  %v4709 = vadd.f32 %v4704, %v4707
  %vm4710 = vcmp.ge.f32.partialorder %v4709, 0.0
  %v4711 = vmul.f32 %v4709, 0.01
  %v4712 = vsel %vm4710, %v4709, %v4711
  %v4713 = vpack.c.bf16 %v4712, %v4712
  %v4714 = vld [vmem:[%s16] sm:$0xf]
  %v4715 = vld [vmem:[%s16 + $0x4] sm:$0xf]
  %v4716 = vld [vmem:[%s16 + $0x8] sm:$0xf]
  %v4717 = vld [vmem:[%s16 + $0xc] sm:$0xf]
  %v4718 = vld [vmem:[%s16 + $0x10] sm:$0xf]
  %v4719 = vld [vmem:[%s16 + $0x14] sm:$0xf]
  %v4720 = vld [vmem:[%s16 + $0x18] sm:$0xf]
  %v4721 = vld [vmem:[%s16 + $0x1c] sm:$0xf]
  %s4722 = scalar_lea.vmem %s16, 32
  %v4723 = vld [vmem:[%s4722] sm:$0xf]
  %v4724 = vld [vmem:[%s4722 + $0x4] sm:$0xf]
  %v4725 = vld [vmem:[%s4722 + $0x8] sm:$0xf]
  %v4726 = vld [vmem:[%s4722 + $0xc] sm:$0xf]
  %v4727 = vld [vmem:[%s4722 + $0x10] sm:$0xf]
  %v4728 = vld [vmem:[%s4722 + $0x14] sm:$0xf]
  %v4729 = vld [vmem:[%s4722 + $0x18] sm:$0xf]
  %v4730 = vld [vmem:[%s4722 + $0x1c] sm:$0xf]
  %v4732 = vunpack.c.l.b16 %v4713
  %v4733 = vpack.c.b16 %v4732, %v4732
  %v4734 = vrot.slane %v4733, 1
  %v4743 = vunpack.c.l.b16 %v4723
  %v4744 = vunpack.c.l.b16 %v4724
  %v4745 = vunpack.c.l.b16 %v4725
  %v4746 = vunpack.c.l.b16 %v4726
  %v4747 = vunpack.c.l.b16 %v4727
  %v4748 = vunpack.c.l.b16 %v4728
  %v4749 = vunpack.c.l.b16 %v4729
  %v4750 = vunpack.c.l.b16 %v4730
  %v4751 = vpack.c.b16 %v4744, %v4743
  %v4752 = vpack.c.b16 %v4746, %v4745
  %v4753 = vpack.c.b16 %v4748, %v4747
  %v4754 = vpack.c.b16 %v4750, %v4749
  %v4760 = vsel %vm4310, %v4734, 0
  %4762 = vmatpush.bf16.msra.mxu0 0
  %4763 = vmatpush.bf16.msra.mxu0 0
  %4764 = vmatpush.bf16.msra.mxu0 0
  %4765 = vmatpush.bf16.msra.mxu0 0
  %4766 = vmatpush.bf16.msra.mxu0 %v4754
  %4767 = vmatpush.bf16.msra.mxu0 %v4753
  %4768 = vmatpush.bf16.msra.mxu0 %v4752
  %4769 = vmatpush.bf16.msra.mxu0 %v4751
  %4770 = vmatmul.bf16.gmra.mxu0 %v4760
  %v4771 = vpop.f32.mrf.mxu0
  %v4772 = vadd.f32 0.0, %v4771
  %v4773 = vpop.f32.mrf.mxu0
  %4774 = vdwg.mxu0
  %v4783 = vunpack.c.l.b16 %v4714
  %v4784 = vunpack.c.l.b16 %v4715
  %v4785 = vunpack.c.l.b16 %v4716
  %v4786 = vunpack.c.l.b16 %v4717
  %v4787 = vunpack.c.l.b16 %v4718
  %v4788 = vunpack.c.l.b16 %v4719
  %v4789 = vunpack.c.l.b16 %v4720
  %v4790 = vunpack.c.l.b16 %v4721
  %v4791 = vpack.c.b16 %v4784, %v4783
  %v4792 = vpack.c.b16 %v4786, %v4785
  %v4793 = vpack.c.b16 %v4788, %v4787
  %v4794 = vpack.c.b16 %v4790, %v4789
  %v4800 = vsel %vm4310, %v4713, 0
  %4802 = vmatpush.bf16.msra.mxu0 0
  %4803 = vmatpush.bf16.msra.mxu0 0
  %4804 = vmatpush.bf16.msra.mxu0 0
  %4805 = vmatpush.bf16.msra.mxu0 0
  %4806 = vmatpush.bf16.msra.mxu0 %v4794
  %4807 = vmatpush.bf16.msra.mxu0 %v4793
  %4808 = vmatpush.bf16.msra.mxu0 %v4792
  %4809 = vmatpush.bf16.msra.mxu0 %v4791
  %4810 = vmatmul.bf16.gmra.mxu0 %v4800
  %v4811 = vpop.f32.mrf.mxu0
  %v4812 = vadd.f32 %v4772, %v4811
  %v4813 = vpop.f32.mrf.mxu0
  %4814 = vdwg.mxu0
  %v4815 = vld [vmem:[%s17] sm:$0x1]
  %v4817 = vperm.slane %v4815, 0
  %v4819 = vadd.f32 %v4812, %v4817
  %vm4820 = vcmask 123904
  %4821 = vst.msk [vmem:[%s18] sm:$0x3] %vm4820, %v4819
  // Predicated region
  $region74: #{encoder_x_forward.1} parent=0 // pred_check
    _
  $region75: #{encoder_x_forward.1} parent=0 // pred_check_branch
    %4823 = sbr.rel (0) target = $region77
  $region76: #{encoder_x_forward.1} parent=0 // pred_region
    _
  $region77: #{encoder_x_forward.1} parent=0 // pred_fallthru
    _
  // Predicated region
  $region78: #{encoder_x_forward.1} parent=0 // pred_check
    _
  $region79: #{encoder_x_forward.1} parent=0 // pred_check_branch
    %4825 = sbr.rel (0) target = $region81
  $region80: #{encoder_x_forward.1} parent=0 // pred_region
    _
  $region81: #{encoder_x_forward.1} parent=0 // pred_fallthru
    _

</llo_original>
